<compile_context>
chip_gen: v7x
topology: tpu7x:2x2x1
jax: 0.10.0
libtpu: 0.0.40
codegen_flags: <defaults>
</compile_context>

<pallas_src>
import functools
import math

import jax
import jax.numpy as jnp
from jax.experimental import pallas as pl
from jax.experimental.pallas import tpu as pltpu

F32 = jnp.float32
BF16 = jnp.bfloat16

# Per-layer weights, stacked over depth, in the fixed order the kernel sees.
# Matmul weights are stored transposed (out, in) and staged bf16; biases are
# (out, 1) f32 columns (channels-on-sublanes layout).
W_KEYS = (
    'wy1T', 'ib1', 'ub1',                       # fused first layer over y (+ both biases)
    'iw2T', 'ib2', 'iw3T', 'ib3',               # rest of input_mlp (merged rgb|sigma head)
    'pw1T', 'pb1', 'pw2T', 'pb2',               # merge_p
    'qw1aT', 'qw1bT', 'qb1', 'qw2T', 'qb2',     # merge_q (split over [y_rgb | y_tgt])
    'epw1T', 'epb1', 'epw2T', 'epb2',           # latent_encoder_p (merged mu|sigma head)
    'eqw1T', 'eqb1', 'eqw2T', 'eqb2',           # latent_encoder_q
    'dw1T', 'db1', 'dw2T', 'db2',               # latent_decoder
    'uw1aT', 'uw2T', 'ub2',                     # unmod_mlp (its y-branch lives in wy1T)
    'm1w', 'm1b', 'cw1', 'ab1',                 # StyledConv (mod EqualLinear, 1x1 conv, FLReLU bias)
    'm2w', 'm2b', 'cw2',                        # ModulatedConv2d
)
BF16_KEYS = frozenset((
    'wy1T', 'iw2T', 'iw3T', 'pw1T', 'pw2T', 'qw1aT', 'qw1bT', 'qw2T',
    'epw1T', 'epw2T', 'eqw1T', 'eqw2T', 'dw1T', 'dw2T', 'uw1aT', 'uw2T',
    'm1w', 'cw1', 'm2w', 'cw2',
))


# ----------------------------------------------------------------------------
# Fused kernel: one (batch, layer) ModBlock step.  grid = (B, depth).
# ----------------------------------------------------------------------------
def hier_kernel(*refs, training):
    n_w = len(W_KEYS)
    y_ref, x_ref, yt_ref, dist_ref, eps_ref = refs[:5]
    wref = dict(zip(W_KEYS, refs[5:5 + n_w]))
    out_ref, kls_ref = refs[5 + n_w:5 + n_w + 2]
    y_carry, kl_carry = refs[5 + n_w + 2:]

    Cy, N = y_ref.shape
    H = wref['iw2T'].shape[0]
    L = wref['dw1T'].shape[1]
    S, R = dist_ref.shape
    depth = eps_ref.shape[1]
    d = pl.program_id(1)

    def W(k):
        return wref[k][...]

    def mm(wT, x):
        # MXU: bf16 operands, f32 accumulation.  wT is (out, in); x is (in, lanes).
        return jnp.dot(wT, x.astype(BF16), preferred_element_type=F32)

    @pl.when(d == 0)
    def _init():
        y_carry[...] = y_ref[...]
        kl_carry[...] = jnp.zeros_like(kl_carry)

    y = y_carry[...]                                           # (Cy, N)
    x_tgt = x_ref[...]                                         # (Cy, N)

    # ---- input_mlp (first layer fused with unmod_mlp's y-branch) ----
    h12 = mm(W('wy1T'), y)                                     # (2H, N)
    h1 = jax.nn.relu(h12[:H, :] + W('ib1'))
    h1 = jax.nn.relu(mm(W('iw2T'), h1) + W('ib2'))
    h3 = mm(W('iw3T'), h1) + W('ib3')                          # (4, N): merged rgb|sigma head
    rgb = jax.nn.sigmoid(h3[0:3, :])                           # (3, N)
    sigma = jax.nn.relu(h3[3:4, :])                            # (1, N)

    # ---- volume rendering (alpha compositing), sample-major flat layout ----
    # TODO(synk): `rendering` source not provided; standard NeRF compositing is
    # used (sigmoid rgb, relu sigma) and rays_o is unused.
    # Point n = s*R + r, so sample s of every ray is the lane slice [s*R:(s+1)*R].
    dists = dist_ref[...]                                      # (S, R)
    run_excl = jnp.zeros((1, R), F32)
    y_rgb = jnp.zeros((3, R), F32)
    for j in range(S):
        sl = slice(j * R, (j + 1) * R)
        tau_j = sigma[:, sl] * dists[j:j + 1, :]               # (1, R)
        w_j = jnp.exp(-run_excl) * (1.0 - jnp.exp(-tau_j))     # T_j * alpha_j
        y_rgb = y_rgb + rgb[:, sl] * w_j
        run_excl = run_excl + tau_j                            # exclusive cumsum carry

    # ---- forward_latent (ray mean folded before the 2nd linear: linearity) ----
    hp = jax.nn.relu(mm(W('pw1T'), y_rgb) + W('pb1'))          # (H, R)
    z_prior = mm(W('pw2T'), jnp.mean(hp, axis=1, keepdims=True)) + W('pb2')    # (H, 1)
    e_p = jax.nn.relu(mm(W('epw1T'), z_prior) + W('epb1'))
    mv_p = mm(W('epw2T'), e_p) + W('epb2')                     # (2L, 1): merged mu|sigma head
    mu_p = mv_p[:L, :]
    sd_p = 0.1 + 0.9 * jax.nn.sigmoid(mv_p[L:, :])

    one_hot = (jax.lax.broadcasted_iota(jnp.int32, (L, depth), 1) == d).astype(F32)
    eps_col = jnp.sum(eps_ref[...] * one_hot, axis=1, keepdims=True)           # (L, 1)

    if training:
        hq = jax.nn.relu(mm(W('qw1aT'), y_rgb) + mm(W('qw1bT'), yt_ref[...]) + W('qb1'))
        z_post = mm(W('qw2T'), jnp.mean(hq, axis=1, keepdims=True)) + W('qb2')
        e_q = jax.nn.relu(mm(W('eqw1T'), z_post) + W('eqb1'))
        mv_q = mm(W('eqw2T'), e_q) + W('eqb2')
        mu_q = mv_q[:L, :]
        sd_q = 0.1 + 0.9 * jax.nn.sigmoid(mv_q[L:, :])
        z = mu_q + sd_q * eps_col
        var_ratio = jnp.square(sd_q / sd_p)
        t1 = jnp.square((mu_q - mu_p) / sd_p)
        kl = 0.5 * jnp.sum(var_ratio + t1 - 1.0 - jnp.log(var_ratio),
                           axis=0, keepdims=True)              # (1, 1)
    else:
        z = mu_p + sd_p * eps_col
        kl = jnp.zeros((1, 1), F32)
    kl_carry[...] += kl

    lat = jax.nn.relu(mm(W('dw1T'), z) + W('db1'))
    lat = mm(W('dw2T'), lat) + W('db2')                        # (H, 1)

    # ---- forward_mlps ----
    hu = jax.nn.relu(mm(W('uw1aT'), x_tgt) + h12[H:, :] + W('ub1'))            # (H, N)
    y2 = y + mm(W('uw2T'), hu) + W('ub2')                      # (Cy, N)

    mod_scale = 1.0 / math.sqrt(H)        # EqualLinear scale (style_dim = H)
    c1_scale = 1.0 / math.sqrt(Cy)        # ModulatedConv2d scale, in=Cy, k=1
    c2_scale = 1.0 / math.sqrt(H)         # ModulatedConv2d scale, in=H,  k=1

    # mod_conv1 (StyledConv): modulate -> demodulate -> 1x1 conv
    cw1 = W('cw1')                                             # (H, Cy) bf16
    s1 = mm(W('m1w'), lat) * mod_scale + W('m1b')              # (Cy, 1) per-batch style
    cw1f = cw1.astype(F32)
    d1 = jax.lax.rsqrt(c1_scale * c1_scale *
                       jnp.dot(cw1f * cw1f, s1 * s1, preferred_element_type=F32) + 1e-8)
    hb = mm(cw1, s1 * y2) * (c1_scale * d1) + W('ab1')         # (H, N)
    # TODO(synk): NoiseInjection term omitted (its learnable weight is 0 at init).
    hb = jnp.where(hb >= 0.0, hb, 0.2 * hb) * math.sqrt(2.0)   # FusedLeakyReLU

    # mod_conv2 (ModulatedConv2d)
    cw2 = W('cw2')                                             # (Cy, H) bf16
    s2 = mm(W('m2w'), lat) * mod_scale + W('m2b')              # (H, 1)
    cw2f = cw2.astype(F32)
    d2 = jax.lax.rsqrt(c2_scale * c2_scale *
                       jnp.dot(cw2f * cw2f, s2 * s2, preferred_element_type=F32) + 1e-8)
    y_res = mm(cw2, s2 * hb) * (c2_scale * d2)                 # (Cy, N)
    y_new = y2 + y_res

    y_carry[...] = y_new                                       # layer recurrence carry

    @pl.when(d == pl.num_programs(1) - 1)
    def _finish():
        out_ref[...] = y_new
        kls_ref[...] = kl_carry[...]


# ----------------------------------------------------------------------------
# Wrapper: Hierarchical_Model.forward
# ----------------------------------------------------------------------------
def hierarchical_forward(params, y, x_tgt, y_tgt, rays_o, z_vals, eps, training=True):
    del rays_o  # TODO(synk): rendering impl not provided; ray origins unused.
    B, N, Cy = y.shape
    _, R, S = z_vals.shape
    assert N == R * S
    depth = params['iw2T'].shape[0]
    L = params['dw1T'].shape[2]

    # XLA-side layout plumbing: channels-first, sample-major (point n' = s*R + r),
    # so the kernel's lane axis is the big point axis and per-ray sample groups
    # are contiguous lane slices of width R.
    def to_cf(a):
        c = a.shape[-1]
        return a.reshape(B, R, S, c).transpose(0, 3, 2, 1).reshape(B, c, S * R)

    y_cf = to_cf(y.astype(F32))                                        # (B, Cy, N)
    x_cf = to_cf(x_tgt.astype(F32))                                    # (B, Cy, N)
    yt_cf = jnp.transpose(y_tgt.astype(F32), (0, 2, 1))                # (B, 3, R)
    deltas = z_vals[..., 1:] - z_vals[..., :-1]
    dists = jnp.concatenate([deltas, jnp.full((B, R, 1), 1e10, z_vals.dtype)], axis=-1)
    dists_cf = jnp.transpose(dists.astype(F32), (0, 2, 1))             # (B, S, R)
    eps_cf = jnp.transpose(eps.astype(F32), (1, 2, 0))                 # (B, L, depth)

    # Stage matmul weights in bf16 (MXU), biases in f32.
    wlist = [params[k].astype(BF16 if k in BF16_KEYS else F32) for k in W_KEYS]

    def batch_spec(a):   # per-batch block, constant across depth
        return pl.BlockSpec((None,) + a.shape[1:], lambda b, d: (b, 0, 0))

    def layer_spec(a):   # per-layer weight block, streamed along the depth axis
        return pl.BlockSpec((None,) + a.shape[1:], lambda b, d: (d, 0, 0))

    in_specs = ([batch_spec(a) for a in (y_cf, x_cf, yt_cf, dists_cf, eps_cf)]
                + [layer_spec(w) for w in wlist])
    out_specs = (pl.BlockSpec((None, Cy, N), lambda b, d: (b, 0, 0)),
                 pl.BlockSpec((None, 1, 1), lambda b, d: (b, 0, 0)))

    out_cf, kls3 = pl.pallas_call(
        functools.partial(hier_kernel, training=training),
        grid=(B, depth),
        in_specs=in_specs,
        out_specs=out_specs,
        out_shape=(jax.ShapeDtypeStruct((B, Cy, N), F32),
                   jax.ShapeDtypeStruct((B, 1, 1), F32)),
        scratch_shapes=[pltpu.VMEM((Cy, N), F32),   # carried y across layers
                        pltpu.VMEM((1, 1), F32)],   # accumulated KL
        compiler_params=pltpu.CompilerParams(
            dimension_semantics=("parallel", "arbitrary"),
            vmem_limit_bytes=32 * 1024 * 1024),
    )(y_cf, x_cf, yt_cf, dists_cf, eps_cf, *wlist)

    out = out_cf.reshape(B, Cy, S, R).transpose(0, 3, 2, 1).reshape(B, N, Cy)
    kls = kls3.reshape(B, 1)
    if not training:
        # Original eval path accumulates kld = zeros_like(z) -> (B, 1, L).
        kls = jnp.zeros((B, 1, L), F32)
    return out, kls


# ----------------------------------------------------------------------------
# Deterministic parameter init (PyTorch nn.Linear / StyleGAN2 conventions)
# ----------------------------------------------------------------------------
def make_modblock_params(key, dim_y, dim_hid, dim_lat):
    Cy, H, L = dim_y, dim_hid, dim_lat
    it = iter(jax.random.split(key, 64))

    def lin(din, dout):
        # torch nn.Linear default init; returned in torch (out, in) layout + (out, 1) bias
        s = 1.0 / math.sqrt(din)
        w = jax.random.uniform(next(it), (dout, din), F32, -s, s)
        b = jax.random.uniform(next(it), (dout, 1), F32, -s, s)
        return w, b

    p = {}
    iw1T, p['ib1'] = lin(Cy, H)                    # input_mlp layer 1
    p['iw2T'], p['ib2'] = lin(H, H)
    p['iw3T'], p['ib3'] = lin(H, 4)                # merged [rgb:3 | sigma:1] head
    p['pw1T'], p['pb1'] = lin(3, H)                # merge_p
    p['pw2T'], p['pb2'] = lin(H, H)
    qw1T, p['qb1'] = lin(6, H)                     # merge_q, split over [y_rgb | y_tgt]
    p['qw1aT'], p['qw1bT'] = qw1T[:, :3], qw1T[:, 3:]
    p['qw2T'], p['qb2'] = lin(H, H)
    p['epw1T'], p['epb1'] = lin(H, H)              # latent_encoder_p
    p['epw2T'], p['epb2'] = lin(H, 2 * L)          # merged [mu | logit-sigma]
    p['eqw1T'], p['eqb1'] = lin(H, H)              # latent_encoder_q
    p['eqw2T'], p['eqb2'] = lin(H, 2 * L)
    p['dw1T'], p['db1'] = lin(L, H)                # latent_decoder
    p['dw2T'], p['db2'] = lin(H, H)
    uw1T, p['ub1'] = lin(2 * Cy, H)                # unmod_mlp, split over [x_tgt | y]
    p['uw1aT'], uw1bT = uw1T[:, :Cy], uw1T[:, Cy:]
    p['uw2T'], p['ub2'] = lin(H, Cy)
    # fused first layer over y: [input_mlp layer 1 ; unmod_mlp y-branch]
    p['wy1T'] = jnp.concatenate([iw1T, uw1bT], axis=0)          # (2H, Cy)
    # StyleGAN2-style modulated 1x1 convs
    p['m1w'] = jax.random.normal(next(it), (Cy, H), F32)        # EqualLinear (out=Cy, in=H)
    p['m1b'] = jnp.ones((Cy, 1), F32)                           # bias_init = 1
    p['cw1'] = jax.random.normal(next(it), (H, Cy), F32)        # conv1 weight (Cout=H, Cin=Cy)
    p['ab1'] = jnp.zeros((H, 1), F32)                           # FusedLeakyReLU bias
    p['m2w'] = jax.random.normal(next(it), (H, H), F32)
    p['m2b'] = jnp.ones((H, 1), F32)
    p['cw2'] = jax.random.normal(next(it), (Cy, H), F32) * math.sqrt(1.0 / 6.0)
    return p


def make_params(key, depth, dim_y, dim_hid, dim_lat):
    keys = jax.random.split(key, depth)
    layers = [make_modblock_params(k, dim_y, dim_hid, dim_lat) for k in keys]
    return {k: jnp.stack([lp[k] for lp in layers], axis=0) for k in W_KEYS}


if __name__ == "__main__":
    dim_y, dim_hid, dim_lat, depth = 8, 32, 8, 2
    B, R, S = 2, 8, 4
    N = R * S                      # num_tgt points (ray-major, then sample)

    root = jax.random.PRNGKey(0)
    k_in, k_par = jax.random.split(root)
    params = make_params(k_par, depth, dim_y, dim_hid, dim_lat)

    ki = jax.random.split(k_in, 6)
    y = jax.random.normal(ki[0], (B, N, dim_y), F32)
    x_tgt = jax.random.normal(ki[1], (B, N, dim_y), F32)
    y_tgt = jax.random.normal(ki[2], (B, R, 3), F32)
    rays_o = jax.random.normal(ki[3], (B, R, 3), F32)
    z_vals = jnp.sort(jax.random.uniform(ki[4], (B, R, S), F32, 0.0, 1.0), axis=-1)
    eps = jax.random.normal(ki[5], (depth, B, dim_lat), F32)   # per-layer rsample noise

    fwd = jax.jit(functools.partial(hierarchical_forward, training=True))
    out, kls = fwd(params, y, x_tgt, y_tgt, rays_o, z_vals, eps)
    jax.block_until_ready((out, kls))
    assert out.shape == (B, N, dim_y), out.shape
    assert kls.shape == (B, 1), kls.shape
    assert bool(jnp.all(jnp.isfinite(out))) and bool(jnp.all(jnp.isfinite(kls)))

    # eval path (prior sampling, zero KL) -- mirrors the original's zeros_like(z)
    fwd_eval = jax.jit(functools.partial(hierarchical_forward, training=False))
    out_e, kls_e = fwd_eval(params, y, x_tgt, y_tgt, rays_o, z_vals, eps)
    jax.block_until_ready((out_e, kls_e))
    assert out_e.shape == (B, N, dim_y), out_e.shape
    assert kls_e.shape == (B, 1, dim_lat), kls_e.shape
    assert bool(jnp.all(jnp.isfinite(out_e)))

    print("KERNEL_OK")
</pallas_src>

<mosaic_0001>
module attributes {stable_mosaic.version = 11 : i64} {
  func.func @hier_kernel(%arg0: i32, %arg1: i32, %arg2: memref<1x8x32xf32, #tpu.memory_space<vmem>>, %arg3: memref<1x8x32xf32, #tpu.memory_space<vmem>>, %arg4: memref<1x3x8xf32, #tpu.memory_space<vmem>>, %arg5: memref<1x4x8xf32, #tpu.memory_space<vmem>>, %arg6: memref<1x8x2xf32, #tpu.memory_space<vmem>>, %arg7: memref<1x64x8xbf16, #tpu.memory_space<vmem>>, %arg8: memref<1x32x1xf32, #tpu.memory_space<vmem>>, %arg9: memref<1x32x1xf32, #tpu.memory_space<vmem>>, %arg10: memref<1x32x32xbf16, #tpu.memory_space<vmem>>, %arg11: memref<1x32x1xf32, #tpu.memory_space<vmem>>, %arg12: memref<1x4x32xbf16, #tpu.memory_space<vmem>>, %arg13: memref<1x4x1xf32, #tpu.memory_space<vmem>>, %arg14: memref<1x32x3xbf16, #tpu.memory_space<vmem>>, %arg15: memref<1x32x1xf32, #tpu.memory_space<vmem>>, %arg16: memref<1x32x32xbf16, #tpu.memory_space<vmem>>, %arg17: memref<1x32x1xf32, #tpu.memory_space<vmem>>, %arg18: memref<1x32x3xbf16, #tpu.memory_space<vmem>>, %arg19: memref<1x32x3xbf16, #tpu.memory_space<vmem>>, %arg20: memref<1x32x1xf32, #tpu.memory_space<vmem>>, %arg21: memref<1x32x32xbf16, #tpu.memory_space<vmem>>, %arg22: memref<1x32x1xf32, #tpu.memory_space<vmem>>, %arg23: memref<1x32x32xbf16, #tpu.memory_space<vmem>>, %arg24: memref<1x32x1xf32, #tpu.memory_space<vmem>>, %arg25: memref<1x16x32xbf16, #tpu.memory_space<vmem>>, %arg26: memref<1x16x1xf32, #tpu.memory_space<vmem>>, %arg27: memref<1x32x32xbf16, #tpu.memory_space<vmem>>, %arg28: memref<1x32x1xf32, #tpu.memory_space<vmem>>, %arg29: memref<1x16x32xbf16, #tpu.memory_space<vmem>>, %arg30: memref<1x16x1xf32, #tpu.memory_space<vmem>>, %arg31: memref<1x32x8xbf16, #tpu.memory_space<vmem>>, %arg32: memref<1x32x1xf32, #tpu.memory_space<vmem>>, %arg33: memref<1x32x32xbf16, #tpu.memory_space<vmem>>, %arg34: memref<1x32x1xf32, #tpu.memory_space<vmem>>, %arg35: memref<1x32x8xbf16, #tpu.memory_space<vmem>>, %arg36: memref<1x8x32xbf16, #tpu.memory_space<vmem>>, %arg37: memref<1x8x1xf32, #tpu.memory_space<vmem>>, %arg38: memref<1x8x32xbf16, #tpu.memory_space<vmem>>, %arg39: memref<1x8x1xf32, #tpu.memory_space<vmem>>, %arg40: memref<1x32x8xbf16, #tpu.memory_space<vmem>>, %arg41: memref<1x32x1xf32, #tpu.memory_space<vmem>>, %arg42: memref<1x32x32xbf16, #tpu.memory_space<vmem>>, %arg43: memref<1x32x1xf32, #tpu.memory_space<vmem>>, %arg44: memref<1x8x32xbf16, #tpu.memory_space<vmem>>, %arg45: memref<1x8x32xf32, #tpu.memory_space<vmem>>, %arg46: memref<1x1x1xf32, #tpu.memory_space<vmem>>, %arg47: memref<8x32xf32, #tpu.memory_space<vmem>>, %arg48: memref<1x1xf32, #tpu.memory_space<vmem>>) attributes {dimension_semantics = [#tpu.dimension_semantics<parallel>, #tpu.dimension_semantics<arbitrary>], iteration_bounds = array<i64: 2, 2>, scalar_prefetch = 0 : i64, scratch_operands = 2 : i64, tpu.core_type = #tpu.core_type<tc>, window_params = [{transform_indices = @transform_0, window_bounds = array<i64: 1, 8, 32>}, {transform_indices = @transform_1, window_bounds = array<i64: 1, 8, 32>}, {transform_indices = @transform_2, window_bounds = array<i64: 1, 3, 8>}, {transform_indices = @transform_3, window_bounds = array<i64: 1, 4, 8>}, {transform_indices = @transform_4, window_bounds = array<i64: 1, 8, 2>}, {transform_indices = @transform_5, window_bounds = array<i64: 1, 64, 8>}, {transform_indices = @transform_6, window_bounds = array<i64: 1, 32, 1>}, {transform_indices = @transform_7, window_bounds = array<i64: 1, 32, 1>}, {transform_indices = @transform_8, window_bounds = array<i64: 1, 32, 32>}, {transform_indices = @transform_9, window_bounds = array<i64: 1, 32, 1>}, {transform_indices = @transform_10, window_bounds = array<i64: 1, 4, 32>}, {transform_indices = @transform_11, window_bounds = array<i64: 1, 4, 1>}, {transform_indices = @transform_12, window_bounds = array<i64: 1, 32, 3>}, {transform_indices = @transform_13, window_bounds = array<i64: 1, 32, 1>}, {transform_indices = @transform_14, window_bounds = array<i64: 1, 32, 32>}, {transform_indices = @transform_15, window_bounds = array<i64: 1, 32, 1>}, {transform_indices = @transform_16, window_bounds = array<i64: 1, 32, 3>}, {transform_indices = @transform_17, window_bounds = array<i64: 1, 32, 3>}, {transform_indices = @transform_18, window_bounds = array<i64: 1, 32, 1>}, {transform_indices = @transform_19, window_bounds = array<i64: 1, 32, 32>}, {transform_indices = @transform_20, window_bounds = array<i64: 1, 32, 1>}, {transform_indices = @transform_21, window_bounds = array<i64: 1, 32, 32>}, {transform_indices = @transform_22, window_bounds = array<i64: 1, 32, 1>}, {transform_indices = @transform_23, window_bounds = array<i64: 1, 16, 32>}, {transform_indices = @transform_24, window_bounds = array<i64: 1, 16, 1>}, {transform_indices = @transform_25, window_bounds = array<i64: 1, 32, 32>}, {transform_indices = @transform_26, window_bounds = array<i64: 1, 32, 1>}, {transform_indices = @transform_27, window_bounds = array<i64: 1, 16, 32>}, {transform_indices = @transform_28, window_bounds = array<i64: 1, 16, 1>}, {transform_indices = @transform_29, window_bounds = array<i64: 1, 32, 8>}, {transform_indices = @transform_30, window_bounds = array<i64: 1, 32, 1>}, {transform_indices = @transform_31, window_bounds = array<i64: 1, 32, 32>}, {transform_indices = @transform_32, window_bounds = array<i64: 1, 32, 1>}, {transform_indices = @transform_33, window_bounds = array<i64: 1, 32, 8>}, {transform_indices = @transform_34, window_bounds = array<i64: 1, 8, 32>}, {transform_indices = @transform_35, window_bounds = array<i64: 1, 8, 1>}, {transform_indices = @transform_36, window_bounds = array<i64: 1, 8, 32>}, {transform_indices = @transform_37, window_bounds = array<i64: 1, 8, 1>}, {transform_indices = @transform_38, window_bounds = array<i64: 1, 32, 8>}, {transform_indices = @transform_39, window_bounds = array<i64: 1, 32, 1>}, {transform_indices = @transform_40, window_bounds = array<i64: 1, 32, 32>}, {transform_indices = @transform_41, window_bounds = array<i64: 1, 32, 1>}, {transform_indices = @transform_42, window_bounds = array<i64: 1, 8, 32>}, {transform_indices = @transform_43, window_bounds = array<i64: 1, 8, 32>}, {transform_indices = @transform_44, window_bounds = array<i64: 1, 1, 1>}]} {
    %c0_i32 = arith.constant 0 : i32
    %0 = arith.cmpi eq, %arg1, %c0_i32 : i32
    %1 = arith.extui %0 : i1 to i32
    %c0_i32_0 = arith.constant 0 : i32
    %2 = arith.cmpi ne, %1, %c0_i32_0 : i32
    scf.if %2 {
      %c0_205 = arith.constant 0 : index
      %c0_206 = arith.constant 0 : index
      %c0_207 = arith.constant 0 : index
      %356 = vector.load %arg2[%c0_205, %c0_206, %c0_207] : memref<1x8x32xf32, #tpu.memory_space<vmem>>, vector<1x8x32xf32>
      %357 = vector.shape_cast %356 : vector<1x8x32xf32> to vector<8x32xf32>
      %c0_208 = arith.constant 0 : index
      %c0_209 = arith.constant 0 : index
      %358 = vector.load %arg47[%c0_208, %c0_209] : memref<8x32xf32, #tpu.memory_space<vmem>>, vector<8x32xf32>
      tpu.vector_store %arg47[%c0_208, %c0_209], %357 {strides = array<i32>} : memref<8x32xf32, #tpu.memory_space<vmem>>, vector<8x32xf32>,
      %cst_210 = arith.constant 0.000000e+00 : f32
      %359 = vector.broadcast %cst_210 : f32 to vector<1x1xf32>
      %c0_211 = arith.constant 0 : index
      %c0_212 = arith.constant 0 : index
      %360 = vector.load %arg48[%c0_211, %c0_212] : memref<1x1xf32, #tpu.memory_space<vmem>>, vector<1x1xf32>
      tpu.vector_store %arg48[%c0_211, %c0_212], %359 {strides = array<i32>} : memref<1x1xf32, #tpu.memory_space<vmem>>, vector<1x1xf32>,
    } else {
    }
    %c0 = arith.constant 0 : index
    %c0_1 = arith.constant 0 : index
    %3 = vector.load %arg47[%c0, %c0_1] : memref<8x32xf32, #tpu.memory_space<vmem>>, vector<8x32xf32>
    %c0_2 = arith.constant 0 : index
    %c0_3 = arith.constant 0 : index
    %c0_4 = arith.constant 0 : index
    %4 = vector.load %arg3[%c0_2, %c0_3, %c0_4] : memref<1x8x32xf32, #tpu.memory_space<vmem>>, vector<1x8x32xf32>
    %5 = vector.shape_cast %4 : vector<1x8x32xf32> to vector<8x32xf32>
    %c0_5 = arith.constant 0 : index
    %c0_6 = arith.constant 0 : index
    %c0_7 = arith.constant 0 : index
    %6 = vector.load %arg7[%c0_5, %c0_6, %c0_7] : memref<1x64x8xbf16, #tpu.memory_space<vmem>>, vector<1x64x8xbf16>
    %7 = vector.shape_cast %6 : vector<1x64x8xbf16> to vector<64x8xbf16>
    %8 = arith.truncf %3 : vector<8x32xf32> to vector<8x32xbf16>
    %cst = arith.constant dense<0.000000e+00> : vector<64x32xf32>
    %9 = tpu.matmul %7, %8, %cst {dimension_numbers = #tpu.dot_dimension_numbers<[1], [0], [0], [1], [0, 0, 1, 1], [], []>} : vector<64x8xbf16>, vector<8x32xbf16>, vector<64x32xf32> -> vector<64x32xf32>
    %10 = vector.extract_strided_slice %9 {offsets = [0, 0], sizes = [32, 32], strides = [1, 1]} : vector<64x32xf32> to vector<32x32xf32>
    %c0_8 = arith.constant 0 : index
    %c0_9 = arith.constant 0 : index
    %c0_10 = arith.constant 0 : index
    %11 = vector.load %arg8[%c0_8, %c0_9, %c0_10] : memref<1x32x1xf32, #tpu.memory_space<vmem>>, vector<1x32x1xf32>
    %12 = vector.shape_cast %11 : vector<1x32x1xf32> to vector<32x1xf32>
    %13 = vector.broadcast %12 : vector<32x1xf32> to vector<32x32xf32>
    %14 = arith.addf %10, %13 : vector<32x32xf32>
    %cst_11 = arith.constant 0.000000e+00 : f32
    %15 = vector.broadcast %cst_11 : f32 to vector<32x32xf32>
    %16 = arith.maximumf %14, %15 : vector<32x32xf32>
    %c0_12 = arith.constant 0 : index
    %c0_13 = arith.constant 0 : index
    %c0_14 = arith.constant 0 : index
    %17 = vector.load %arg10[%c0_12, %c0_13, %c0_14] : memref<1x32x32xbf16, #tpu.memory_space<vmem>>, vector<1x32x32xbf16>
    %18 = vector.shape_cast %17 : vector<1x32x32xbf16> to vector<32x32xbf16>
    %19 = arith.truncf %16 : vector<32x32xf32> to vector<32x32xbf16>
    %cst_15 = arith.constant dense<0.000000e+00> : vector<32x32xf32>
    %20 = tpu.matmul %18, %19, %cst_15 {dimension_numbers = #tpu.dot_dimension_numbers<[1], [0], [0], [1], [0, 0, 1, 1], [], []>} : vector<32x32xbf16>, vector<32x32xbf16>, vector<32x32xf32> -> vector<32x32xf32>
    %c0_16 = arith.constant 0 : index
    %c0_17 = arith.constant 0 : index
    %c0_18 = arith.constant 0 : index
    %21 = vector.load %arg11[%c0_16, %c0_17, %c0_18] : memref<1x32x1xf32, #tpu.memory_space<vmem>>, vector<1x32x1xf32>
    %22 = vector.shape_cast %21 : vector<1x32x1xf32> to vector<32x1xf32>
    %23 = vector.broadcast %22 : vector<32x1xf32> to vector<32x32xf32>
    %24 = arith.addf %20, %23 : vector<32x32xf32>
    %cst_19 = arith.constant 0.000000e+00 : f32
    %25 = vector.broadcast %cst_19 : f32 to vector<32x32xf32>
    %26 = arith.maximumf %24, %25 : vector<32x32xf32>
    %c0_20 = arith.constant 0 : index
    %c0_21 = arith.constant 0 : index
    %c0_22 = arith.constant 0 : index
    %27 = vector.load %arg12[%c0_20, %c0_21, %c0_22] : memref<1x4x32xbf16, #tpu.memory_space<vmem>>, vector<1x4x32xbf16>
    %28 = vector.shape_cast %27 : vector<1x4x32xbf16> to vector<4x32xbf16>
    %29 = arith.truncf %26 : vector<32x32xf32> to vector<32x32xbf16>
    %cst_23 = arith.constant dense<0.000000e+00> : vector<4x32xf32>
    %30 = tpu.matmul %28, %29, %cst_23 {dimension_numbers = #tpu.dot_dimension_numbers<[1], [0], [0], [1], [0, 0, 1, 1], [], []>} : vector<4x32xbf16>, vector<32x32xbf16>, vector<4x32xf32> -> vector<4x32xf32>
    %c0_24 = arith.constant 0 : index
    %c0_25 = arith.constant 0 : index
    %c0_26 = arith.constant 0 : index
    %31 = vector.load %arg13[%c0_24, %c0_25, %c0_26] : memref<1x4x1xf32, #tpu.memory_space<vmem>>, vector<1x4x1xf32>
    %32 = vector.shape_cast %31 : vector<1x4x1xf32> to vector<4x1xf32>
    %33 = vector.broadcast %32 : vector<4x1xf32> to vector<4x32xf32>
    %34 = arith.addf %30, %33 : vector<4x32xf32>
    %35 = vector.extract_strided_slice %34 {offsets = [0, 0], sizes = [3, 32], strides = [1, 1]} : vector<4x32xf32> to vector<3x32xf32>
    %36 = arith.negf %35 : vector<3x32xf32>
    %37 = math.exp %36 : vector<3x32xf32>
    %cst_27 = arith.constant 1.000000e+00 : f32
    %38 = vector.broadcast %cst_27 : f32 to vector<3x32xf32>
    %39 = arith.addf %38, %37 : vector<3x32xf32>
    %40 = arith.divf %38, %39 : vector<3x32xf32>
    %41 = vector.extract_strided_slice %34 {offsets = [3, 0], sizes = [1, 32], strides = [1, 1]} : vector<4x32xf32> to vector<1x32xf32>
    %cst_28 = arith.constant 0.000000e+00 : f32
    %42 = vector.broadcast %cst_28 : f32 to vector<1x32xf32>
    %43 = arith.maximumf %41, %42 : vector<1x32xf32>
    %c0_29 = arith.constant 0 : index
    %c0_30 = arith.constant 0 : index
    %c0_31 = arith.constant 0 : index
    %44 = vector.load %arg5[%c0_29, %c0_30, %c0_31] : memref<1x4x8xf32, #tpu.memory_space<vmem>>, vector<1x4x8xf32>
    %45 = vector.shape_cast %44 : vector<1x4x8xf32> to vector<4x8xf32>
    %cst_32 = arith.constant 0.000000e+00 : f32
    %46 = vector.broadcast %cst_32 : f32 to vector<1x8xf32>
    %cst_33 = arith.constant 0.000000e+00 : f32
    %47 = vector.broadcast %cst_33 : f32 to vector<3x8xf32>
    %48 = vector.extract_strided_slice %43 {offsets = [0, 0], sizes = [1, 8], strides = [1, 1]} : vector<1x32xf32> to vector<1x8xf32>
    %49 = vector.extract_strided_slice %45 {offsets = [0, 0], sizes = [1, 8], strides = [1, 1]} : vector<4x8xf32> to vector<1x8xf32>
    %50 = arith.mulf %48, %49 : vector<1x8xf32>
    %cst_34 = arith.constant 0.000000e+00 : f32
    %51 = vector.broadcast %cst_34 : f32 to vector<1x8xf32>
    %52 = arith.subf %51, %46 : vector<1x8xf32>
    %53 = math.exp %52 : vector<1x8xf32>
    %cst_35 = arith.constant 0.000000e+00 : f32
    %54 = vector.broadcast %cst_35 : f32 to vector<1x8xf32>
    %55 = arith.subf %54, %50 : vector<1x8xf32>
    %56 = math.exp %55 : vector<1x8xf32>
    %cst_36 = arith.constant 1.000000e+00 : f32
    %57 = vector.broadcast %cst_36 : f32 to vector<1x8xf32>
    %58 = arith.subf %57, %56 : vector<1x8xf32>
    %59 = arith.mulf %53, %58 : vector<1x8xf32>
    %60 = vector.extract_strided_slice %40 {offsets = [0, 0], sizes = [3, 8], strides = [1, 1]} : vector<3x32xf32> to vector<3x8xf32>
    %61 = vector.broadcast %59 : vector<1x8xf32> to vector<3x8xf32>
    %62 = arith.mulf %60, %61 : vector<3x8xf32>
    %63 = arith.addf %47, %62 : vector<3x8xf32>
    %64 = arith.addf %46, %50 : vector<1x8xf32>
    %65 = vector.extract_strided_slice %43 {offsets = [0, 8], sizes = [1, 8], strides = [1, 1]} : vector<1x32xf32> to vector<1x8xf32>
    %66 = vector.extract_strided_slice %45 {offsets = [1, 0], sizes = [1, 8], strides = [1, 1]} : vector<4x8xf32> to vector<1x8xf32>
    %67 = arith.mulf %65, %66 : vector<1x8xf32>
    %cst_37 = arith.constant 0.000000e+00 : f32
    %68 = vector.broadcast %cst_37 : f32 to vector<1x8xf32>
    %69 = arith.subf %68, %64 : vector<1x8xf32>
    %70 = math.exp %69 : vector<1x8xf32>
    %cst_38 = arith.constant 0.000000e+00 : f32
    %71 = vector.broadcast %cst_38 : f32 to vector<1x8xf32>
    %72 = arith.subf %71, %67 : vector<1x8xf32>
    %73 = math.exp %72 : vector<1x8xf32>
    %cst_39 = arith.constant 1.000000e+00 : f32
    %74 = vector.broadcast %cst_39 : f32 to vector<1x8xf32>
    %75 = arith.subf %74, %73 : vector<1x8xf32>
    %76 = arith.mulf %70, %75 : vector<1x8xf32>
    %77 = vector.extract_strided_slice %40 {offsets = [0, 8], sizes = [3, 8], strides = [1, 1]} : vector<3x32xf32> to vector<3x8xf32>
    %78 = vector.broadcast %76 : vector<1x8xf32> to vector<3x8xf32>
    %79 = arith.mulf %77, %78 : vector<3x8xf32>
    %80 = arith.addf %63, %79 : vector<3x8xf32>
    %81 = arith.addf %64, %67 : vector<1x8xf32>
    %82 = vector.extract_strided_slice %43 {offsets = [0, 16], sizes = [1, 8], strides = [1, 1]} : vector<1x32xf32> to vector<1x8xf32>
    %83 = vector.extract_strided_slice %45 {offsets = [2, 0], sizes = [1, 8], strides = [1, 1]} : vector<4x8xf32> to vector<1x8xf32>
    %84 = arith.mulf %82, %83 : vector<1x8xf32>
    %cst_40 = arith.constant 0.000000e+00 : f32
    %85 = vector.broadcast %cst_40 : f32 to vector<1x8xf32>
    %86 = arith.subf %85, %81 : vector<1x8xf32>
    %87 = math.exp %86 : vector<1x8xf32>
    %cst_41 = arith.constant 0.000000e+00 : f32
    %88 = vector.broadcast %cst_41 : f32 to vector<1x8xf32>
    %89 = arith.subf %88, %84 : vector<1x8xf32>
    %90 = math.exp %89 : vector<1x8xf32>
    %cst_42 = arith.constant 1.000000e+00 : f32
    %91 = vector.broadcast %cst_42 : f32 to vector<1x8xf32>
    %92 = arith.subf %91, %90 : vector<1x8xf32>
    %93 = arith.mulf %87, %92 : vector<1x8xf32>
    %94 = vector.extract_strided_slice %40 {offsets = [0, 16], sizes = [3, 8], strides = [1, 1]} : vector<3x32xf32> to vector<3x8xf32>
    %95 = vector.broadcast %93 : vector<1x8xf32> to vector<3x8xf32>
    %96 = arith.mulf %94, %95 : vector<3x8xf32>
    %97 = arith.addf %80, %96 : vector<3x8xf32>
    %98 = arith.addf %81, %84 : vector<1x8xf32>
    %99 = vector.extract_strided_slice %43 {offsets = [0, 24], sizes = [1, 8], strides = [1, 1]} : vector<1x32xf32> to vector<1x8xf32>
    %100 = vector.extract_strided_slice %45 {offsets = [3, 0], sizes = [1, 8], strides = [1, 1]} : vector<4x8xf32> to vector<1x8xf32>
    %101 = arith.mulf %99, %100 : vector<1x8xf32>
    %cst_43 = arith.constant 0.000000e+00 : f32
    %102 = vector.broadcast %cst_43 : f32 to vector<1x8xf32>
    %103 = arith.subf %102, %98 : vector<1x8xf32>
    %104 = math.exp %103 : vector<1x8xf32>
    %cst_44 = arith.constant 0.000000e+00 : f32
    %105 = vector.broadcast %cst_44 : f32 to vector<1x8xf32>
    %106 = arith.subf %105, %101 : vector<1x8xf32>
    %107 = math.exp %106 : vector<1x8xf32>
    %cst_45 = arith.constant 1.000000e+00 : f32
    %108 = vector.broadcast %cst_45 : f32 to vector<1x8xf32>
    %109 = arith.subf %108, %107 : vector<1x8xf32>
    %110 = arith.mulf %104, %109 : vector<1x8xf32>
    %111 = vector.extract_strided_slice %40 {offsets = [0, 24], sizes = [3, 8], strides = [1, 1]} : vector<3x32xf32> to vector<3x8xf32>
    %112 = vector.broadcast %110 : vector<1x8xf32> to vector<3x8xf32>
    %113 = arith.mulf %111, %112 : vector<3x8xf32>
    %114 = arith.addf %97, %113 : vector<3x8xf32>
    %c0_46 = arith.constant 0 : index
    %c0_47 = arith.constant 0 : index
    %c0_48 = arith.constant 0 : index
    %115 = vector.load %arg14[%c0_46, %c0_47, %c0_48] : memref<1x32x3xbf16, #tpu.memory_space<vmem>>, vector<1x32x3xbf16>
    %116 = vector.shape_cast %115 : vector<1x32x3xbf16> to vector<32x3xbf16>
    %117 = arith.truncf %114 : vector<3x8xf32> to vector<3x8xbf16>
    %cst_49 = arith.constant dense<0.000000e+00> : vector<32x8xf32>
    %118 = tpu.matmul %116, %117, %cst_49 {dimension_numbers = #tpu.dot_dimension_numbers<[1], [0], [0], [1], [0, 0, 1, 1], [], []>} : vector<32x3xbf16>, vector<3x8xbf16>, vector<32x8xf32> -> vector<32x8xf32>
    %c0_50 = arith.constant 0 : index
    %c0_51 = arith.constant 0 : index
    %c0_52 = arith.constant 0 : index
    %119 = vector.load %arg15[%c0_50, %c0_51, %c0_52] : memref<1x32x1xf32, #tpu.memory_space<vmem>>, vector<1x32x1xf32>
    %120 = vector.shape_cast %119 : vector<1x32x1xf32> to vector<32x1xf32>
    %121 = vector.broadcast %120 : vector<32x1xf32> to vector<32x8xf32>
    %122 = arith.addf %118, %121 : vector<32x8xf32>
    %cst_53 = arith.constant 0.000000e+00 : f32
    %123 = vector.broadcast %cst_53 : f32 to vector<32x8xf32>
    %124 = arith.maximumf %122, %123 : vector<32x8xf32>
    %c0_54 = arith.constant 0 : index
    %c0_55 = arith.constant 0 : index
    %c0_56 = arith.constant 0 : index
    %125 = vector.load %arg16[%c0_54, %c0_55, %c0_56] : memref<1x32x32xbf16, #tpu.memory_space<vmem>>, vector<1x32x32xbf16>
    %126 = vector.shape_cast %125 : vector<1x32x32xbf16> to vector<32x32xbf16>
    %cst_57 = arith.constant dense<0.000000e+00> : vector<32xf32>
    %127 = vector.multi_reduction <add>, %124, %cst_57 [1] : vector<32x8xf32> to vector<32xf32>
    %128 = vector.shape_cast %127 : vector<32xf32> to vector<32x1xf32>
    %cst_58 = arith.constant 8.000000e+00 : f32
    %129 = vector.broadcast %cst_58 : f32 to vector<32x1xf32>
    %130 = arith.divf %128, %129 : vector<32x1xf32>
    %131 = arith.truncf %130 : vector<32x1xf32> to vector<32x1xbf16>
    %cst_59 = arith.constant dense<0.000000e+00> : vector<32x1xf32>
    %132 = tpu.matmul %126, %131, %cst_59 {dimension_numbers = #tpu.dot_dimension_numbers<[1], [0], [0], [1], [0, 0, 1, 1], [], []>} : vector<32x32xbf16>, vector<32x1xbf16>, vector<32x1xf32> -> vector<32x1xf32>
    %c0_60 = arith.constant 0 : index
    %c0_61 = arith.constant 0 : index
    %c0_62 = arith.constant 0 : index
    %133 = vector.load %arg17[%c0_60, %c0_61, %c0_62] : memref<1x32x1xf32, #tpu.memory_space<vmem>>, vector<1x32x1xf32>
    %134 = vector.shape_cast %133 : vector<1x32x1xf32> to vector<32x1xf32>
    %135 = arith.addf %132, %134 : vector<32x1xf32>
    %c0_63 = arith.constant 0 : index
    %c0_64 = arith.constant 0 : index
    %c0_65 = arith.constant 0 : index
    %136 = vector.load %arg23[%c0_63, %c0_64, %c0_65] : memref<1x32x32xbf16, #tpu.memory_space<vmem>>, vector<1x32x32xbf16>
    %137 = vector.shape_cast %136 : vector<1x32x32xbf16> to vector<32x32xbf16>
    %138 = arith.truncf %135 : vector<32x1xf32> to vector<32x1xbf16>
    %cst_66 = arith.constant dense<0.000000e+00> : vector<32x1xf32>
    %139 = tpu.matmul %137, %138, %cst_66 {dimension_numbers = #tpu.dot_dimension_numbers<[1], [0], [0], [1], [0, 0, 1, 1], [], []>} : vector<32x32xbf16>, vector<32x1xbf16>, vector<32x1xf32> -> vector<32x1xf32>
    %c0_67 = arith.constant 0 : index
    %c0_68 = arith.constant 0 : index
    %c0_69 = arith.constant 0 : index
    %140 = vector.load %arg24[%c0_67, %c0_68, %c0_69] : memref<1x32x1xf32, #tpu.memory_space<vmem>>, vector<1x32x1xf32>
    %141 = vector.shape_cast %140 : vector<1x32x1xf32> to vector<32x1xf32>
    %142 = arith.addf %139, %141 : vector<32x1xf32>
    %cst_70 = arith.constant 0.000000e+00 : f32
    %143 = vector.broadcast %cst_70 : f32 to vector<32x1xf32>
    %144 = arith.maximumf %142, %143 : vector<32x1xf32>
    %c0_71 = arith.constant 0 : index
    %c0_72 = arith.constant 0 : index
    %c0_73 = arith.constant 0 : index
    %145 = vector.load %arg25[%c0_71, %c0_72, %c0_73] : memref<1x16x32xbf16, #tpu.memory_space<vmem>>, vector<1x16x32xbf16>
    %146 = vector.shape_cast %145 : vector<1x16x32xbf16> to vector<16x32xbf16>
    %147 = arith.truncf %144 : vector<32x1xf32> to vector<32x1xbf16>
    %cst_74 = arith.constant dense<0.000000e+00> : vector<16x1xf32>
    %148 = tpu.matmul %146, %147, %cst_74 {dimension_numbers = #tpu.dot_dimension_numbers<[1], [0], [0], [1], [0, 0, 1, 1], [], []>} : vector<16x32xbf16>, vector<32x1xbf16>, vector<16x1xf32> -> vector<16x1xf32>
    %c0_75 = arith.constant 0 : index
    %c0_76 = arith.constant 0 : index
    %c0_77 = arith.constant 0 : index
    %149 = vector.load %arg26[%c0_75, %c0_76, %c0_77] : memref<1x16x1xf32, #tpu.memory_space<vmem>>, vector<1x16x1xf32>
    %150 = vector.shape_cast %149 : vector<1x16x1xf32> to vector<16x1xf32>
    %151 = arith.addf %148, %150 : vector<16x1xf32>
    %152 = vector.extract_strided_slice %151 {offsets = [0, 0], sizes = [8, 1], strides = [1, 1]} : vector<16x1xf32> to vector<8x1xf32>
    %153 = vector.extract_strided_slice %151 {offsets = [8, 0], sizes = [8, 1], strides = [1, 1]} : vector<16x1xf32> to vector<8x1xf32>
    %154 = arith.negf %153 : vector<8x1xf32>
    %155 = math.exp %154 : vector<8x1xf32>
    %cst_78 = arith.constant 1.000000e+00 : f32
    %156 = vector.broadcast %cst_78 : f32 to vector<8x1xf32>
    %157 = arith.addf %156, %155 : vector<8x1xf32>
    %158 = arith.divf %156, %157 : vector<8x1xf32>
    %cst_79 = arith.constant 0.899999976 : f32
    %159 = vector.broadcast %cst_79 : f32 to vector<8x1xf32>
    %160 = arith.mulf %159, %158 : vector<8x1xf32>
    %cst_80 = arith.constant 1.000000e-01 : f32
    %161 = vector.broadcast %cst_80 : f32 to vector<8x1xf32>
    %162 = arith.addf %161, %160 : vector<8x1xf32>
    %163 = tpu.iota {dimensions = array<i32: 1>} : vector<8x2xi32>
    %164 = vector.broadcast %arg1 : i32 to vector<8x2xi32>
    %165 = arith.cmpi eq, %163, %164 : vector<8x2xi32>
    %166 = arith.extui %165 : vector<8x2xi1> to vector<8x2xi32>
    %167 = arith.sitofp %166 : vector<8x2xi32> to vector<8x2xf32>
    %c0_81 = arith.constant 0 : index
    %c0_82 = arith.constant 0 : index
    %c0_83 = arith.constant 0 : index
    %168 = vector.load %arg6[%c0_81, %c0_82, %c0_83] : memref<1x8x2xf32, #tpu.memory_space<vmem>>, vector<1x8x2xf32>
    %169 = vector.shape_cast %168 : vector<1x8x2xf32> to vector<8x2xf32>
    %170 = arith.mulf %169, %167 : vector<8x2xf32>
    %cst_84 = arith.constant dense<0.000000e+00> : vector<8xf32>
    %171 = vector.multi_reduction <add>, %170, %cst_84 [1] : vector<8x2xf32> to vector<8xf32>
    %172 = vector.shape_cast %171 : vector<8xf32> to vector<8x1xf32>
    %c0_85 = arith.constant 0 : index
    %c0_86 = arith.constant 0 : index
    %c0_87 = arith.constant 0 : index
    %173 = vector.load %arg18[%c0_85, %c0_86, %c0_87] : memref<1x32x3xbf16, #tpu.memory_space<vmem>>, vector<1x32x3xbf16>
    %174 = vector.shape_cast %173 : vector<1x32x3xbf16> to vector<32x3xbf16>
    %175 = arith.truncf %114 : vector<3x8xf32> to vector<3x8xbf16>
    %cst_88 = arith.constant dense<0.000000e+00> : vector<32x8xf32>
    %176 = tpu.matmul %174, %175, %cst_88 {dimension_numbers = #tpu.dot_dimension_numbers<[1], [0], [0], [1], [0, 0, 1, 1], [], []>} : vector<32x3xbf16>, vector<3x8xbf16>, vector<32x8xf32> -> vector<32x8xf32>
    %c0_89 = arith.constant 0 : index
    %c0_90 = arith.constant 0 : index
    %c0_91 = arith.constant 0 : index
    %177 = vector.load %arg19[%c0_89, %c0_90, %c0_91] : memref<1x32x3xbf16, #tpu.memory_space<vmem>>, vector<1x32x3xbf16>
    %178 = vector.shape_cast %177 : vector<1x32x3xbf16> to vector<32x3xbf16>
    %c0_92 = arith.constant 0 : index
    %c0_93 = arith.constant 0 : index
    %c0_94 = arith.constant 0 : index
    %179 = vector.load %arg4[%c0_92, %c0_93, %c0_94] : memref<1x3x8xf32, #tpu.memory_space<vmem>>, vector<1x3x8xf32>
    %180 = vector.shape_cast %179 : vector<1x3x8xf32> to vector<3x8xf32>
    %181 = arith.truncf %180 : vector<3x8xf32> to vector<3x8xbf16>
    %cst_95 = arith.constant dense<0.000000e+00> : vector<32x8xf32>
    %182 = tpu.matmul %178, %181, %cst_95 {dimension_numbers = #tpu.dot_dimension_numbers<[1], [0], [0], [1], [0, 0, 1, 1], [], []>} : vector<32x3xbf16>, vector<3x8xbf16>, vector<32x8xf32> -> vector<32x8xf32>
    %183 = arith.addf %176, %182 : vector<32x8xf32>
    %c0_96 = arith.constant 0 : index
    %c0_97 = arith.constant 0 : index
    %c0_98 = arith.constant 0 : index
    %184 = vector.load %arg20[%c0_96, %c0_97, %c0_98] : memref<1x32x1xf32, #tpu.memory_space<vmem>>, vector<1x32x1xf32>
    %185 = vector.shape_cast %184 : vector<1x32x1xf32> to vector<32x1xf32>
    %186 = vector.broadcast %185 : vector<32x1xf32> to vector<32x8xf32>
    %187 = arith.addf %183, %186 : vector<32x8xf32>
    %cst_99 = arith.constant 0.000000e+00 : f32
    %188 = vector.broadcast %cst_99 : f32 to vector<32x8xf32>
    %189 = arith.maximumf %187, %188 : vector<32x8xf32>
    %c0_100 = arith.constant 0 : index
    %c0_101 = arith.constant 0 : index
    %c0_102 = arith.constant 0 : index
    %190 = vector.load %arg21[%c0_100, %c0_101, %c0_102] : memref<1x32x32xbf16, #tpu.memory_space<vmem>>, vector<1x32x32xbf16>
    %191 = vector.shape_cast %190 : vector<1x32x32xbf16> to vector<32x32xbf16>
    %cst_103 = arith.constant dense<0.000000e+00> : vector<32xf32>
    %192 = vector.multi_reduction <add>, %189, %cst_103 [1] : vector<32x8xf32> to vector<32xf32>
    %193 = vector.shape_cast %192 : vector<32xf32> to vector<32x1xf32>
    %cst_104 = arith.constant 8.000000e+00 : f32
    %194 = vector.broadcast %cst_104 : f32 to vector<32x1xf32>
    %195 = arith.divf %193, %194 : vector<32x1xf32>
    %196 = arith.truncf %195 : vector<32x1xf32> to vector<32x1xbf16>
    %cst_105 = arith.constant dense<0.000000e+00> : vector<32x1xf32>
    %197 = tpu.matmul %191, %196, %cst_105 {dimension_numbers = #tpu.dot_dimension_numbers<[1], [0], [0], [1], [0, 0, 1, 1], [], []>} : vector<32x32xbf16>, vector<32x1xbf16>, vector<32x1xf32> -> vector<32x1xf32>
    %c0_106 = arith.constant 0 : index
    %c0_107 = arith.constant 0 : index
    %c0_108 = arith.constant 0 : index
    %198 = vector.load %arg22[%c0_106, %c0_107, %c0_108] : memref<1x32x1xf32, #tpu.memory_space<vmem>>, vector<1x32x1xf32>
    %199 = vector.shape_cast %198 : vector<1x32x1xf32> to vector<32x1xf32>
    %200 = arith.addf %197, %199 : vector<32x1xf32>
    %c0_109 = arith.constant 0 : index
    %c0_110 = arith.constant 0 : index
    %c0_111 = arith.constant 0 : index
    %201 = vector.load %arg27[%c0_109, %c0_110, %c0_111] : memref<1x32x32xbf16, #tpu.memory_space<vmem>>, vector<1x32x32xbf16>
    %202 = vector.shape_cast %201 : vector<1x32x32xbf16> to vector<32x32xbf16>
    %203 = arith.truncf %200 : vector<32x1xf32> to vector<32x1xbf16>
    %cst_112 = arith.constant dense<0.000000e+00> : vector<32x1xf32>
    %204 = tpu.matmul %202, %203, %cst_112 {dimension_numbers = #tpu.dot_dimension_numbers<[1], [0], [0], [1], [0, 0, 1, 1], [], []>} : vector<32x32xbf16>, vector<32x1xbf16>, vector<32x1xf32> -> vector<32x1xf32>
    %c0_113 = arith.constant 0 : index
    %c0_114 = arith.constant 0 : index
    %c0_115 = arith.constant 0 : index
    %205 = vector.load %arg28[%c0_113, %c0_114, %c0_115] : memref<1x32x1xf32, #tpu.memory_space<vmem>>, vector<1x32x1xf32>
    %206 = vector.shape_cast %205 : vector<1x32x1xf32> to vector<32x1xf32>
    %207 = arith.addf %204, %206 : vector<32x1xf32>
    %cst_116 = arith.constant 0.000000e+00 : f32
    %208 = vector.broadcast %cst_116 : f32 to vector<32x1xf32>
    %209 = arith.maximumf %207, %208 : vector<32x1xf32>
    %c0_117 = arith.constant 0 : index
    %c0_118 = arith.constant 0 : index
    %c0_119 = arith.constant 0 : index
    %210 = vector.load %arg29[%c0_117, %c0_118, %c0_119] : memref<1x16x32xbf16, #tpu.memory_space<vmem>>, vector<1x16x32xbf16>
    %211 = vector.shape_cast %210 : vector<1x16x32xbf16> to vector<16x32xbf16>
    %212 = arith.truncf %209 : vector<32x1xf32> to vector<32x1xbf16>
    %cst_120 = arith.constant dense<0.000000e+00> : vector<16x1xf32>
    %213 = tpu.matmul %211, %212, %cst_120 {dimension_numbers = #tpu.dot_dimension_numbers<[1], [0], [0], [1], [0, 0, 1, 1], [], []>} : vector<16x32xbf16>, vector<32x1xbf16>, vector<16x1xf32> -> vector<16x1xf32>
    %c0_121 = arith.constant 0 : index
    %c0_122 = arith.constant 0 : index
    %c0_123 = arith.constant 0 : index
    %214 = vector.load %arg30[%c0_121, %c0_122, %c0_123] : memref<1x16x1xf32, #tpu.memory_space<vmem>>, vector<1x16x1xf32>
    %215 = vector.shape_cast %214 : vector<1x16x1xf32> to vector<16x1xf32>
    %216 = arith.addf %213, %215 : vector<16x1xf32>
    %217 = vector.extract_strided_slice %216 {offsets = [0, 0], sizes = [8, 1], strides = [1, 1]} : vector<16x1xf32> to vector<8x1xf32>
    %218 = vector.extract_strided_slice %216 {offsets = [8, 0], sizes = [8, 1], strides = [1, 1]} : vector<16x1xf32> to vector<8x1xf32>
    %219 = arith.negf %218 : vector<8x1xf32>
    %220 = math.exp %219 : vector<8x1xf32>
    %cst_124 = arith.constant 1.000000e+00 : f32
    %221 = vector.broadcast %cst_124 : f32 to vector<8x1xf32>
    %222 = arith.addf %221, %220 : vector<8x1xf32>
    %223 = arith.divf %221, %222 : vector<8x1xf32>
    %cst_125 = arith.constant 0.899999976 : f32
    %224 = vector.broadcast %cst_125 : f32 to vector<8x1xf32>
    %225 = arith.mulf %224, %223 : vector<8x1xf32>
    %cst_126 = arith.constant 1.000000e-01 : f32
    %226 = vector.broadcast %cst_126 : f32 to vector<8x1xf32>
    %227 = arith.addf %226, %225 : vector<8x1xf32>
    %228 = arith.mulf %227, %172 : vector<8x1xf32>
    %229 = arith.addf %217, %228 : vector<8x1xf32>
    %230 = arith.divf %227, %162 : vector<8x1xf32>
    %231 = arith.mulf %230, %230 : vector<8x1xf32>
    %232 = arith.subf %217, %152 : vector<8x1xf32>
    %233 = arith.divf %232, %162 : vector<8x1xf32>
    %234 = arith.mulf %233, %233 : vector<8x1xf32>
    %235 = arith.addf %231, %234 : vector<8x1xf32>
    %cst_127 = arith.constant 1.000000e+00 : f32
    %236 = vector.broadcast %cst_127 : f32 to vector<8x1xf32>
    %237 = arith.subf %235, %236 : vector<8x1xf32>
    %238 = math.log %231 : vector<8x1xf32>
    %239 = arith.subf %237, %238 : vector<8x1xf32>
    %cst_128 = arith.constant dense<0.000000e+00> : vector<1xf32>
    %240 = vector.multi_reduction <add>, %239, %cst_128 [0] : vector<8x1xf32> to vector<1xf32>
    %241 = vector.shape_cast %240 : vector<1xf32> to vector<1x1xf32>
    %cst_129 = arith.constant 5.000000e-01 : f32
    %242 = vector.broadcast %cst_129 : f32 to vector<1x1xf32>
    %243 = arith.mulf %242, %241 : vector<1x1xf32>
    %c0_130 = arith.constant 0 : index
    %c0_131 = arith.constant 0 : index
    %244 = vector.load %arg48[%c0_130, %c0_131] : memref<1x1xf32, #tpu.memory_space<vmem>>, vector<1x1xf32>
    %245 = arith.addf %244, %243 : vector<1x1xf32>
    %c0_132 = arith.constant 0 : index
    %c0_133 = arith.constant 0 : index
    %246 = vector.load %arg48[%c0_132, %c0_133] : memref<1x1xf32, #tpu.memory_space<vmem>>, vector<1x1xf32>
    tpu.vector_store %arg48[%c0_132, %c0_133], %245 {strides = array<i32>} : memref<1x1xf32, #tpu.memory_space<vmem>>, vector<1x1xf32>,
    %c0_134 = arith.constant 0 : index
    %c0_135 = arith.constant 0 : index
    %c0_136 = arith.constant 0 : index
    %247 = vector.load %arg31[%c0_134, %c0_135, %c0_136] : memref<1x32x8xbf16, #tpu.memory_space<vmem>>, vector<1x32x8xbf16>
    %248 = vector.shape_cast %247 : vector<1x32x8xbf16> to vector<32x8xbf16>
    %249 = arith.truncf %229 : vector<8x1xf32> to vector<8x1xbf16>
    %cst_137 = arith.constant dense<0.000000e+00> : vector<32x1xf32>
    %250 = tpu.matmul %248, %249, %cst_137 {dimension_numbers = #tpu.dot_dimension_numbers<[1], [0], [0], [1], [0, 0, 1, 1], [], []>} : vector<32x8xbf16>, vector<8x1xbf16>, vector<32x1xf32> -> vector<32x1xf32>
    %c0_138 = arith.constant 0 : index
    %c0_139 = arith.constant 0 : index
    %c0_140 = arith.constant 0 : index
    %251 = vector.load %arg32[%c0_138, %c0_139, %c0_140] : memref<1x32x1xf32, #tpu.memory_space<vmem>>, vector<1x32x1xf32>
    %252 = vector.shape_cast %251 : vector<1x32x1xf32> to vector<32x1xf32>
    %253 = arith.addf %250, %252 : vector<32x1xf32>
    %cst_141 = arith.constant 0.000000e+00 : f32
    %254 = vector.broadcast %cst_141 : f32 to vector<32x1xf32>
    %255 = arith.maximumf %253, %254 : vector<32x1xf32>
    %c0_142 = arith.constant 0 : index
    %c0_143 = arith.constant 0 : index
    %c0_144 = arith.constant 0 : index
    %256 = vector.load %arg33[%c0_142, %c0_143, %c0_144] : memref<1x32x32xbf16, #tpu.memory_space<vmem>>, vector<1x32x32xbf16>
    %257 = vector.shape_cast %256 : vector<1x32x32xbf16> to vector<32x32xbf16>
    %258 = arith.truncf %255 : vector<32x1xf32> to vector<32x1xbf16>
    %cst_145 = arith.constant dense<0.000000e+00> : vector<32x1xf32>
    %259 = tpu.matmul %257, %258, %cst_145 {dimension_numbers = #tpu.dot_dimension_numbers<[1], [0], [0], [1], [0, 0, 1, 1], [], []>} : vector<32x32xbf16>, vector<32x1xbf16>, vector<32x1xf32> -> vector<32x1xf32>
    %c0_146 = arith.constant 0 : index
    %c0_147 = arith.constant 0 : index
    %c0_148 = arith.constant 0 : index
    %260 = vector.load %arg34[%c0_146, %c0_147, %c0_148] : memref<1x32x1xf32, #tpu.memory_space<vmem>>, vector<1x32x1xf32>
    %261 = vector.shape_cast %260 : vector<1x32x1xf32> to vector<32x1xf32>
    %262 = arith.addf %259, %261 : vector<32x1xf32>
    %c0_149 = arith.constant 0 : index
    %c0_150 = arith.constant 0 : index
    %c0_151 = arith.constant 0 : index
    %263 = vector.load %arg35[%c0_149, %c0_150, %c0_151] : memref<1x32x8xbf16, #tpu.memory_space<vmem>>, vector<1x32x8xbf16>
    %264 = vector.shape_cast %263 : vector<1x32x8xbf16> to vector<32x8xbf16>
    %265 = arith.truncf %5 : vector<8x32xf32> to vector<8x32xbf16>
    %cst_152 = arith.constant dense<0.000000e+00> : vector<32x32xf32>
    %266 = tpu.matmul %264, %265, %cst_152 {dimension_numbers = #tpu.dot_dimension_numbers<[1], [0], [0], [1], [0, 0, 1, 1], [], []>} : vector<32x8xbf16>, vector<8x32xbf16>, vector<32x32xf32> -> vector<32x32xf32>
    %267 = vector.extract_strided_slice %9 {offsets = [32, 0], sizes = [32, 32], strides = [1, 1]} : vector<64x32xf32> to vector<32x32xf32>
    %268 = arith.addf %266, %267 : vector<32x32xf32>
    %c0_153 = arith.constant 0 : index
    %c0_154 = arith.constant 0 : index
    %c0_155 = arith.constant 0 : index
    %269 = vector.load %arg9[%c0_153, %c0_154, %c0_155] : memref<1x32x1xf32, #tpu.memory_space<vmem>>, vector<1x32x1xf32>
    %270 = vector.shape_cast %269 : vector<1x32x1xf32> to vector<32x1xf32>
    %271 = vector.broadcast %270 : vector<32x1xf32> to vector<32x32xf32>
    %272 = arith.addf %268, %271 : vector<32x32xf32>
    %cst_156 = arith.constant 0.000000e+00 : f32
    %273 = vector.broadcast %cst_156 : f32 to vector<32x32xf32>
    %274 = arith.maximumf %272, %273 : vector<32x32xf32>
    %c0_157 = arith.constant 0 : index
    %c0_158 = arith.constant 0 : index
    %c0_159 = arith.constant 0 : index
    %275 = vector.load %arg36[%c0_157, %c0_158, %c0_159] : memref<1x8x32xbf16, #tpu.memory_space<vmem>>, vector<1x8x32xbf16>
    %276 = vector.shape_cast %275 : vector<1x8x32xbf16> to vector<8x32xbf16>
    %277 = arith.truncf %274 : vector<32x32xf32> to vector<32x32xbf16>
    %cst_160 = arith.constant dense<0.000000e+00> : vector<8x32xf32>
    %278 = tpu.matmul %276, %277, %cst_160 {dimension_numbers = #tpu.dot_dimension_numbers<[1], [0], [0], [1], [0, 0, 1, 1], [], []>} : vector<8x32xbf16>, vector<32x32xbf16>, vector<8x32xf32> -> vector<8x32xf32>
    %279 = arith.addf %3, %278 : vector<8x32xf32>
    %c0_161 = arith.constant 0 : index
    %c0_162 = arith.constant 0 : index
    %c0_163 = arith.constant 0 : index
    %280 = vector.load %arg37[%c0_161, %c0_162, %c0_163] : memref<1x8x1xf32, #tpu.memory_space<vmem>>, vector<1x8x1xf32>
    %281 = vector.shape_cast %280 : vector<1x8x1xf32> to vector<8x1xf32>
    %282 = vector.broadcast %281 : vector<8x1xf32> to vector<8x32xf32>
    %283 = arith.addf %279, %282 : vector<8x32xf32>
    %c0_164 = arith.constant 0 : index
    %c0_165 = arith.constant 0 : index
    %c0_166 = arith.constant 0 : index
    %284 = vector.load %arg40[%c0_164, %c0_165, %c0_166] : memref<1x32x8xbf16, #tpu.memory_space<vmem>>, vector<1x32x8xbf16>
    %285 = vector.shape_cast %284 : vector<1x32x8xbf16> to vector<32x8xbf16>
    %c0_167 = arith.constant 0 : index
    %c0_168 = arith.constant 0 : index
    %c0_169 = arith.constant 0 : index
    %286 = vector.load %arg38[%c0_167, %c0_168, %c0_169] : memref<1x8x32xbf16, #tpu.memory_space<vmem>>, vector<1x8x32xbf16>
    %287 = vector.shape_cast %286 : vector<1x8x32xbf16> to vector<8x32xbf16>
    %288 = arith.truncf %262 : vector<32x1xf32> to vector<32x1xbf16>
    %cst_170 = arith.constant dense<0.000000e+00> : vector<8x1xf32>
    %289 = tpu.matmul %287, %288, %cst_170 {dimension_numbers = #tpu.dot_dimension_numbers<[1], [0], [0], [1], [0, 0, 1, 1], [], []>} : vector<8x32xbf16>, vector<32x1xbf16>, vector<8x1xf32> -> vector<8x1xf32>
    %cst_171 = arith.constant 0.176776692 : f32
    %290 = vector.broadcast %cst_171 : f32 to vector<8x1xf32>
    %291 = arith.mulf %289, %290 : vector<8x1xf32>
    %c0_172 = arith.constant 0 : index
    %c0_173 = arith.constant 0 : index
    %c0_174 = arith.constant 0 : index
    %292 = vector.load %arg39[%c0_172, %c0_173, %c0_174] : memref<1x8x1xf32, #tpu.memory_space<vmem>>, vector<1x8x1xf32>
    %293 = vector.shape_cast %292 : vector<1x8x1xf32> to vector<8x1xf32>
    %294 = arith.addf %291, %293 : vector<8x1xf32>
    %295 = arith.extf %285 : vector<32x8xbf16> to vector<32x8xf32>
    %296 = arith.mulf %295, %295 : vector<32x8xf32>
    %297 = arith.mulf %294, %294 : vector<8x1xf32>
    %cst_175 = arith.constant dense<0.000000e+00> : vector<32x1xf32>
    %298 = tpu.matmul %296, %297, %cst_175 {dimension_numbers = #tpu.dot_dimension_numbers<[1], [0], [0], [1], [0, 0, 1, 1], [], []>} : vector<32x8xf32>, vector<8x1xf32>, vector<32x1xf32> -> vector<32x1xf32>
    %cst_176 = arith.constant 1.250000e-01 : f32
    %299 = vector.broadcast %cst_176 : f32 to vector<32x1xf32>
    %300 = arith.mulf %299, %298 : vector<32x1xf32>
    %cst_177 = arith.constant 9.99999993E-9 : f32
    %301 = vector.broadcast %cst_177 : f32 to vector<32x1xf32>
    %302 = arith.addf %300, %301 : vector<32x1xf32>
    %303 = math.rsqrt %302 : vector<32x1xf32>
    %304 = vector.broadcast %294 : vector<8x1xf32> to vector<8x32xf32>
    %305 = arith.mulf %304, %283 : vector<8x32xf32>
    %306 = arith.truncf %305 : vector<8x32xf32> to vector<8x32xbf16>
    %cst_178 = arith.constant dense<0.000000e+00> : vector<32x32xf32>
    %307 = tpu.matmul %285, %306, %cst_178 {dimension_numbers = #tpu.dot_dimension_numbers<[1], [0], [0], [1], [0, 0, 1, 1], [], []>} : vector<32x8xbf16>, vector<8x32xbf16>, vector<32x32xf32> -> vector<32x32xf32>
    %cst_179 = arith.constant 0.353553385 : f32
    %308 = vector.broadcast %cst_179 : f32 to vector<32x1xf32>
    %309 = arith.mulf %308, %303 : vector<32x1xf32>
    %310 = vector.broadcast %309 : vector<32x1xf32> to vector<32x32xf32>
    %311 = arith.mulf %307, %310 : vector<32x32xf32>
    %c0_180 = arith.constant 0 : index
    %c0_181 = arith.constant 0 : index
    %c0_182 = arith.constant 0 : index
    %312 = vector.load %arg41[%c0_180, %c0_181, %c0_182] : memref<1x32x1xf32, #tpu.memory_space<vmem>>, vector<1x32x1xf32>
    %313 = vector.shape_cast %312 : vector<1x32x1xf32> to vector<32x1xf32>
    %314 = vector.broadcast %313 : vector<32x1xf32> to vector<32x32xf32>
    %315 = arith.addf %311, %314 : vector<32x32xf32>
    %cst_183 = arith.constant 0.000000e+00 : f32
    %316 = vector.broadcast %cst_183 : f32 to vector<32x32xf32>
    %317 = arith.cmpf oge, %315, %316 : vector<32x32xf32>
    %cst_184 = arith.constant 2.000000e-01 : f32
    %318 = vector.broadcast %cst_184 : f32 to vector<32x32xf32>
    %319 = arith.mulf %318, %315 : vector<32x32xf32>
    %320 = arith.select %317, %315, %319 : vector<32x32xi1>, vector<32x32xf32>
    %cst_185 = arith.constant 1.41421354 : f32
    %321 = vector.broadcast %cst_185 : f32 to vector<32x32xf32>
    %322 = arith.mulf %320, %321 : vector<32x32xf32>
    %c0_186 = arith.constant 0 : index
    %c0_187 = arith.constant 0 : index
    %c0_188 = arith.constant 0 : index
    %323 = vector.load %arg44[%c0_186, %c0_187, %c0_188] : memref<1x8x32xbf16, #tpu.memory_space<vmem>>, vector<1x8x32xbf16>
    %324 = vector.shape_cast %323 : vector<1x8x32xbf16> to vector<8x32xbf16>
    %c0_189 = arith.constant 0 : index
    %c0_190 = arith.constant 0 : index
    %c0_191 = arith.constant 0 : index
    %325 = vector.load %arg42[%c0_189, %c0_190, %c0_191] : memref<1x32x32xbf16, #tpu.memory_space<vmem>>, vector<1x32x32xbf16>
    %326 = vector.shape_cast %325 : vector<1x32x32xbf16> to vector<32x32xbf16>
    %327 = arith.truncf %262 : vector<32x1xf32> to vector<32x1xbf16>
    %cst_192 = arith.constant dense<0.000000e+00> : vector<32x1xf32>
    %328 = tpu.matmul %326, %327, %cst_192 {dimension_numbers = #tpu.dot_dimension_numbers<[1], [0], [0], [1], [0, 0, 1, 1], [], []>} : vector<32x32xbf16>, vector<32x1xbf16>, vector<32x1xf32> -> vector<32x1xf32>
    %cst_193 = arith.constant 0.176776692 : f32
    %329 = vector.broadcast %cst_193 : f32 to vector<32x1xf32>
    %330 = arith.mulf %328, %329 : vector<32x1xf32>
    %c0_194 = arith.constant 0 : index
    %c0_195 = arith.constant 0 : index
    %c0_196 = arith.constant 0 : index
    %331 = vector.load %arg43[%c0_194, %c0_195, %c0_196] : memref<1x32x1xf32, #tpu.memory_space<vmem>>, vector<1x32x1xf32>
    %332 = vector.shape_cast %331 : vector<1x32x1xf32> to vector<32x1xf32>
    %333 = arith.addf %330, %332 : vector<32x1xf32>
    %334 = arith.extf %324 : vector<8x32xbf16> to vector<8x32xf32>
    %335 = arith.mulf %334, %334 : vector<8x32xf32>
    %336 = arith.mulf %333, %333 : vector<32x1xf32>
    %cst_197 = arith.constant dense<0.000000e+00> : vector<8x1xf32>
    %337 = tpu.matmul %335, %336, %cst_197 {dimension_numbers = #tpu.dot_dimension_numbers<[1], [0], [0], [1], [0, 0, 1, 1], [], []>} : vector<8x32xf32>, vector<32x1xf32>, vector<8x1xf32> -> vector<8x1xf32>
    %cst_198 = arith.constant 3.125000e-02 : f32
    %338 = vector.broadcast %cst_198 : f32 to vector<8x1xf32>
    %339 = arith.mulf %338, %337 : vector<8x1xf32>
    %cst_199 = arith.constant 9.99999993E-9 : f32
    %340 = vector.broadcast %cst_199 : f32 to vector<8x1xf32>
    %341 = arith.addf %339, %340 : vector<8x1xf32>
    %342 = math.rsqrt %341 : vector<8x1xf32>
    %343 = vector.broadcast %333 : vector<32x1xf32> to vector<32x32xf32>
    %344 = arith.mulf %343, %322 : vector<32x32xf32>
    %345 = arith.truncf %344 : vector<32x32xf32> to vector<32x32xbf16>
    %cst_200 = arith.constant dense<0.000000e+00> : vector<8x32xf32>
    %346 = tpu.matmul %324, %345, %cst_200 {dimension_numbers = #tpu.dot_dimension_numbers<[1], [0], [0], [1], [0, 0, 1, 1], [], []>} : vector<8x32xbf16>, vector<32x32xbf16>, vector<8x32xf32> -> vector<8x32xf32>
    %cst_201 = arith.constant 0.176776692 : f32
    %347 = vector.broadcast %cst_201 : f32 to vector<8x1xf32>
    %348 = arith.mulf %347, %342 : vector<8x1xf32>
    %349 = vector.broadcast %348 : vector<8x1xf32> to vector<8x32xf32>
    %350 = arith.mulf %346, %349 : vector<8x32xf32>
    %351 = arith.addf %283, %350 : vector<8x32xf32>
    %c0_202 = arith.constant 0 : index
    %c0_203 = arith.constant 0 : index
    %352 = vector.load %arg47[%c0_202, %c0_203] : memref<8x32xf32, #tpu.memory_space<vmem>>, vector<8x32xf32>
    tpu.vector_store %arg47[%c0_202, %c0_203], %351 {strides = array<i32>} : memref<8x32xf32, #tpu.memory_space<vmem>>, vector<8x32xf32>,
    %c1_i32 = arith.constant 1 : i32
    %353 = arith.cmpi eq, %arg1, %c1_i32 : i32
    %354 = arith.extui %353 : i1 to i32
    %c0_i32_204 = arith.constant 0 : i32
    %355 = arith.cmpi ne, %354, %c0_i32_204 : i32
    scf.if %355 {
      %c0_205 = arith.constant 0 : index
      %c0_206 = arith.constant 0 : index
      %c0_207 = arith.constant 0 : index
      %356 = vector.load %arg45[%c0_205, %c0_206, %c0_207] : memref<1x8x32xf32, #tpu.memory_space<vmem>>, vector<1x8x32xf32>
      %357 = vector.shape_cast %356 : vector<1x8x32xf32> to vector<8x32xf32>
      %358 = vector.shape_cast %351 : vector<8x32xf32> to vector<1x8x32xf32>
      tpu.vector_store %arg45[%c0_205, %c0_206, %c0_207], %358 {strides = array<i32>} : memref<1x8x32xf32, #tpu.memory_space<vmem>>, vector<1x8x32xf32>,
      %c0_208 = arith.constant 0 : index
      %c0_209 = arith.constant 0 : index
      %359 = vector.load %arg48[%c0_208, %c0_209] : memref<1x1xf32, #tpu.memory_space<vmem>>, vector<1x1xf32>
      %c0_210 = arith.constant 0 : index
      %c0_211 = arith.constant 0 : index
      %c0_212 = arith.constant 0 : index
      %360 = vector.load %arg46[%c0_210, %c0_211, %c0_212] : memref<1x1x1xf32, #tpu.memory_space<vmem>>, vector<1x1x1xf32>
      %361 = vector.shape_cast %360 : vector<1x1x1xf32> to vector<1x1xf32>
      %362 = vector.shape_cast %359 : vector<1x1xf32> to vector<1x1x1xf32>
      tpu.vector_store %arg46[%c0_210, %c0_211, %c0_212], %362 {strides = array<i32>} : memref<1x1x1xf32, #tpu.memory_space<vmem>>, vector<1x1x1xf32>,
    } else {
    }
    return
  }
  func.func @transform_0(%arg0: i32, %arg1: i32) -> (i32, i32, i32) {
    %c0_i32 = arith.constant 0 : i32
    %c0_i32_0 = arith.constant 0 : i32
    %c0_i32_1 = arith.constant 0 : i32
    return %arg0, %c0_i32, %c0_i32_0 : i32, i32, i32
  }
  func.func @transform_1(%arg0: i32, %arg1: i32) -> (i32, i32, i32) {
    %c0_i32 = arith.constant 0 : i32
    %c0_i32_0 = arith.constant 0 : i32
    %c0_i32_1 = arith.constant 0 : i32
    return %arg0, %c0_i32, %c0_i32_0 : i32, i32, i32
  }
  func.func @transform_2(%arg0: i32, %arg1: i32) -> (i32, i32, i32) {
    %c0_i32 = arith.constant 0 : i32
    %c0_i32_0 = arith.constant 0 : i32
    %c0_i32_1 = arith.constant 0 : i32
    return %arg0, %c0_i32, %c0_i32_0 : i32, i32, i32
  }
  func.func @transform_3(%arg0: i32, %arg1: i32) -> (i32, i32, i32) {
    %c0_i32 = arith.constant 0 : i32
    %c0_i32_0 = arith.constant 0 : i32
    %c0_i32_1 = arith.constant 0 : i32
    return %arg0, %c0_i32, %c0_i32_0 : i32, i32, i32
  }
  func.func @transform_4(%arg0: i32, %arg1: i32) -> (i32, i32, i32) {
    %c0_i32 = arith.constant 0 : i32
    %c0_i32_0 = arith.constant 0 : i32
    %c0_i32_1 = arith.constant 0 : i32
    return %arg0, %c0_i32, %c0_i32_0 : i32, i32, i32
  }
  func.func @transform_5(%arg0: i32, %arg1: i32) -> (i32, i32, i32) {
    %c0_i32 = arith.constant 0 : i32
    %c0_i32_0 = arith.constant 0 : i32
    %c0_i32_1 = arith.constant 0 : i32
    return %arg1, %c0_i32, %c0_i32_0 : i32, i32, i32
  }
  func.func @transform_6(%arg0: i32, %arg1: i32) -> (i32, i32, i32) {
    %c0_i32 = arith.constant 0 : i32
    %c0_i32_0 = arith.constant 0 : i32
    %c0_i32_1 = arith.constant 0 : i32
    return %arg1, %c0_i32, %c0_i32_0 : i32, i32, i32
  }
  func.func @transform_7(%arg0: i32, %arg1: i32) -> (i32, i32, i32) {
    %c0_i32 = arith.constant 0 : i32
    %c0_i32_0 = arith.constant 0 : i32
    %c0_i32_1 = arith.constant 0 : i32
    return %arg1, %c0_i32, %c0_i32_0 : i32, i32, i32
  }
  func.func @transform_8(%arg0: i32, %arg1: i32) -> (i32, i32, i32) {
    %c0_i32 = arith.constant 0 : i32
    %c0_i32_0 = arith.constant 0 : i32
    %c0_i32_1 = arith.constant 0 : i32
    return %arg1, %c0_i32, %c0_i32_0 : i32, i32, i32
  }
  func.func @transform_9(%arg0: i32, %arg1: i32) -> (i32, i32, i32) {
    %c0_i32 = arith.constant 0 : i32
    %c0_i32_0 = arith.constant 0 : i32
    %c0_i32_1 = arith.constant 0 : i32
    return %arg1, %c0_i32, %c0_i32_0 : i32, i32, i32
  }
  func.func @transform_10(%arg0: i32, %arg1: i32) -> (i32, i32, i32) {
    %c0_i32 = arith.constant 0 : i32
    %c0_i32_0 = arith.constant 0 : i32
    %c0_i32_1 = arith.constant 0 : i32
    return %arg1, %c0_i32, %c0_i32_0 : i32, i32, i32
  }
  func.func @transform_11(%arg0: i32, %arg1: i32) -> (i32, i32, i32) {
    %c0_i32 = arith.constant 0 : i32
    %c0_i32_0 = arith.constant 0 : i32
    %c0_i32_1 = arith.constant 0 : i32
    return %arg1, %c0_i32, %c0_i32_0 : i32, i32, i32
  }
  func.func @transform_12(%arg0: i32, %arg1: i32) -> (i32, i32, i32) {
    %c0_i32 = arith.constant 0 : i32
    %c0_i32_0 = arith.constant 0 : i32
    %c0_i32_1 = arith.constant 0 : i32
    return %arg1, %c0_i32, %c0_i32_0 : i32, i32, i32
  }
  func.func @transform_13(%arg0: i32, %arg1: i32) -> (i32, i32, i32) {
    %c0_i32 = arith.constant 0 : i32
    %c0_i32_0 = arith.constant 0 : i32
    %c0_i32_1 = arith.constant 0 : i32
    return %arg1, %c0_i32, %c0_i32_0 : i32, i32, i32
  }
  func.func @transform_14(%arg0: i32, %arg1: i32) -> (i32, i32, i32) {
    %c0_i32 = arith.constant 0 : i32
    %c0_i32_0 = arith.constant 0 : i32
    %c0_i32_1 = arith.constant 0 : i32
    return %arg1, %c0_i32, %c0_i32_0 : i32, i32, i32
  }
  func.func @transform_15(%arg0: i32, %arg1: i32) -> (i32, i32, i32) {
    %c0_i32 = arith.constant 0 : i32
    %c0_i32_0 = arith.constant 0 : i32
    %c0_i32_1 = arith.constant 0 : i32
    return %arg1, %c0_i32, %c0_i32_0 : i32, i32, i32
  }
  func.func @transform_16(%arg0: i32, %arg1: i32) -> (i32, i32, i32) {
    %c0_i32 = arith.constant 0 : i32
    %c0_i32_0 = arith.constant 0 : i32
    %c0_i32_1 = arith.constant 0 : i32
    return %arg1, %c0_i32, %c0_i32_0 : i32, i32, i32
  }
  func.func @transform_17(%arg0: i32, %arg1: i32) -> (i32, i32, i32) {
    %c0_i32 = arith.constant 0 : i32
    %c0_i32_0 = arith.constant 0 : i32
    %c0_i32_1 = arith.constant 0 : i32
    return %arg1, %c0_i32, %c0_i32_0 : i32, i32, i32
  }
  func.func @transform_18(%arg0: i32, %arg1: i32) -> (i32, i32, i32) {
    %c0_i32 = arith.constant 0 : i32
    %c0_i32_0 = arith.constant 0 : i32
    %c0_i32_1 = arith.constant 0 : i32
    return %arg1, %c0_i32, %c0_i32_0 : i32, i32, i32
  }
  func.func @transform_19(%arg0: i32, %arg1: i32) -> (i32, i32, i32) {
    %c0_i32 = arith.constant 0 : i32
    %c0_i32_0 = arith.constant 0 : i32
    %c0_i32_1 = arith.constant 0 : i32
    return %arg1, %c0_i32, %c0_i32_0 : i32, i32, i32
  }
  func.func @transform_20(%arg0: i32, %arg1: i32) -> (i32, i32, i32) {
    %c0_i32 = arith.constant 0 : i32
    %c0_i32_0 = arith.constant 0 : i32
    %c0_i32_1 = arith.constant 0 : i32
    return %arg1, %c0_i32, %c0_i32_0 : i32, i32, i32
  }
  func.func @transform_21(%arg0: i32, %arg1: i32) -> (i32, i32, i32) {
    %c0_i32 = arith.constant 0 : i32
    %c0_i32_0 = arith.constant 0 : i32
    %c0_i32_1 = arith.constant 0 : i32
    return %arg1, %c0_i32, %c0_i32_0 : i32, i32, i32
  }
  func.func @transform_22(%arg0: i32, %arg1: i32) -> (i32, i32, i32) {
    %c0_i32 = arith.constant 0 : i32
    %c0_i32_0 = arith.constant 0 : i32
    %c0_i32_1 = arith.constant 0 : i32
    return %arg1, %c0_i32, %c0_i32_0 : i32, i32, i32
  }
  func.func @transform_23(%arg0: i32, %arg1: i32) -> (i32, i32, i32) {
    %c0_i32 = arith.constant 0 : i32
    %c0_i32_0 = arith.constant 0 : i32
    %c0_i32_1 = arith.constant 0 : i32
    return %arg1, %c0_i32, %c0_i32_0 : i32, i32, i32
  }
  func.func @transform_24(%arg0: i32, %arg1: i32) -> (i32, i32, i32) {
    %c0_i32 = arith.constant 0 : i32
    %c0_i32_0 = arith.constant 0 : i32
    %c0_i32_1 = arith.constant 0 : i32
    return %arg1, %c0_i32, %c0_i32_0 : i32, i32, i32
  }
  func.func @transform_25(%arg0: i32, %arg1: i32) -> (i32, i32, i32) {
    %c0_i32 = arith.constant 0 : i32
    %c0_i32_0 = arith.constant 0 : i32
    %c0_i32_1 = arith.constant 0 : i32
    return %arg1, %c0_i32, %c0_i32_0 : i32, i32, i32
  }
  func.func @transform_26(%arg0: i32, %arg1: i32) -> (i32, i32, i32) {
    %c0_i32 = arith.constant 0 : i32
    %c0_i32_0 = arith.constant 0 : i32
    %c0_i32_1 = arith.constant 0 : i32
    return %arg1, %c0_i32, %c0_i32_0 : i32, i32, i32
  }
  func.func @transform_27(%arg0: i32, %arg1: i32) -> (i32, i32, i32) {
    %c0_i32 = arith.constant 0 : i32
    %c0_i32_0 = arith.constant 0 : i32
    %c0_i32_1 = arith.constant 0 : i32
    return %arg1, %c0_i32, %c0_i32_0 : i32, i32, i32
  }
  func.func @transform_28(%arg0: i32, %arg1: i32) -> (i32, i32, i32) {
    %c0_i32 = arith.constant 0 : i32
    %c0_i32_0 = arith.constant 0 : i32
    %c0_i32_1 = arith.constant 0 : i32
    return %arg1, %c0_i32, %c0_i32_0 : i32, i32, i32
  }
  func.func @transform_29(%arg0: i32, %arg1: i32) -> (i32, i32, i32) {
    %c0_i32 = arith.constant 0 : i32
    %c0_i32_0 = arith.constant 0 : i32
    %c0_i32_1 = arith.constant 0 : i32
    return %arg1, %c0_i32, %c0_i32_0 : i32, i32, i32
  }
  func.func @transform_30(%arg0: i32, %arg1: i32) -> (i32, i32, i32) {
    %c0_i32 = arith.constant 0 : i32
    %c0_i32_0 = arith.constant 0 : i32
    %c0_i32_1 = arith.constant 0 : i32
    return %arg1, %c0_i32, %c0_i32_0 : i32, i32, i32
  }
  func.func @transform_31(%arg0: i32, %arg1: i32) -> (i32, i32, i32) {
    %c0_i32 = arith.constant 0 : i32
    %c0_i32_0 = arith.constant 0 : i32
    %c0_i32_1 = arith.constant 0 : i32
    return %arg1, %c0_i32, %c0_i32_0 : i32, i32, i32
  }
  func.func @transform_32(%arg0: i32, %arg1: i32) -> (i32, i32, i32) {
    %c0_i32 = arith.constant 0 : i32
    %c0_i32_0 = arith.constant 0 : i32
    %c0_i32_1 = arith.constant 0 : i32
    return %arg1, %c0_i32, %c0_i32_0 : i32, i32, i32
  }
  func.func @transform_33(%arg0: i32, %arg1: i32) -> (i32, i32, i32) {
    %c0_i32 = arith.constant 0 : i32
    %c0_i32_0 = arith.constant 0 : i32
    %c0_i32_1 = arith.constant 0 : i32
    return %arg1, %c0_i32, %c0_i32_0 : i32, i32, i32
  }
  func.func @transform_34(%arg0: i32, %arg1: i32) -> (i32, i32, i32) {
    %c0_i32 = arith.constant 0 : i32
    %c0_i32_0 = arith.constant 0 : i32
    %c0_i32_1 = arith.constant 0 : i32
    return %arg1, %c0_i32, %c0_i32_0 : i32, i32, i32
  }
  func.func @transform_35(%arg0: i32, %arg1: i32) -> (i32, i32, i32) {
    %c0_i32 = arith.constant 0 : i32
    %c0_i32_0 = arith.constant 0 : i32
    %c0_i32_1 = arith.constant 0 : i32
    return %arg1, %c0_i32, %c0_i32_0 : i32, i32, i32
  }
  func.func @transform_36(%arg0: i32, %arg1: i32) -> (i32, i32, i32) {
    %c0_i32 = arith.constant 0 : i32
    %c0_i32_0 = arith.constant 0 : i32
    %c0_i32_1 = arith.constant 0 : i32
    return %arg1, %c0_i32, %c0_i32_0 : i32, i32, i32
  }
  func.func @transform_37(%arg0: i32, %arg1: i32) -> (i32, i32, i32) {
    %c0_i32 = arith.constant 0 : i32
    %c0_i32_0 = arith.constant 0 : i32
    %c0_i32_1 = arith.constant 0 : i32
    return %arg1, %c0_i32, %c0_i32_0 : i32, i32, i32
  }
  func.func @transform_38(%arg0: i32, %arg1: i32) -> (i32, i32, i32) {
    %c0_i32 = arith.constant 0 : i32
    %c0_i32_0 = arith.constant 0 : i32
    %c0_i32_1 = arith.constant 0 : i32
    return %arg1, %c0_i32, %c0_i32_0 : i32, i32, i32
  }
  func.func @transform_39(%arg0: i32, %arg1: i32) -> (i32, i32, i32) {
    %c0_i32 = arith.constant 0 : i32
    %c0_i32_0 = arith.constant 0 : i32
    %c0_i32_1 = arith.constant 0 : i32
    return %arg1, %c0_i32, %c0_i32_0 : i32, i32, i32
  }
  func.func @transform_40(%arg0: i32, %arg1: i32) -> (i32, i32, i32) {
    %c0_i32 = arith.constant 0 : i32
    %c0_i32_0 = arith.constant 0 : i32
    %c0_i32_1 = arith.constant 0 : i32
    return %arg1, %c0_i32, %c0_i32_0 : i32, i32, i32
  }
  func.func @transform_41(%arg0: i32, %arg1: i32) -> (i32, i32, i32) {
    %c0_i32 = arith.constant 0 : i32
    %c0_i32_0 = arith.constant 0 : i32
    %c0_i32_1 = arith.constant 0 : i32
    return %arg1, %c0_i32, %c0_i32_0 : i32, i32, i32
  }
  func.func @transform_42(%arg0: i32, %arg1: i32) -> (i32, i32, i32) {
    %c0_i32 = arith.constant 0 : i32
    %c0_i32_0 = arith.constant 0 : i32
    %c0_i32_1 = arith.constant 0 : i32
    return %arg1, %c0_i32, %c0_i32_0 : i32, i32, i32
  }
  func.func @transform_43(%arg0: i32, %arg1: i32) -> (i32, i32, i32) {
    %c0_i32 = arith.constant 0 : i32
    %c0_i32_0 = arith.constant 0 : i32
    %c0_i32_1 = arith.constant 0 : i32
    return %arg0, %c0_i32, %c0_i32_0 : i32, i32, i32
  }
  func.func @transform_44(%arg0: i32, %arg1: i32) -> (i32, i32, i32) {
    %c0_i32 = arith.constant 0 : i32
    %c0_i32_0 = arith.constant 0 : i32
    %c0_i32_1 = arith.constant 0 : i32
    return %arg0, %c0_i32, %c0_i32_0 : i32, i32, i32
  }
}

</mosaic_0001>

<llo_original>
// kernel: hierarchical_forward.1
$region0: #{hierarchical_forward.1}
  #allocation0 [shape = 'u32[]', space=smem, size = 0x4, offset = 0x4, fixed_abs, tag = 'smem constant byte address 0x4 - core index']
  #allocation1 [shape = 'u32[144,128]{1,0:T(1,128)}', space=vmem, size = 0x12000, scoped, tag = 'internal scratch']
  #allocation2 [shape = 'f32[8,32]{1,0:T(8,128)}', space=vmem, size = 0x1000, scoped, tag = 'scratch operand']
  #allocation3 [shape = 'f32[1,1]{1,0:T(1,128)}', space=vmem, size = 0x200, scoped, tag = 'scratch operand']
  %s0 = inlined_call_operand.smem [shape: u32[45], index: -1, kind: input, shape index: {}]
  %s1 = sld [smem:[%s0]]
  %s2 = scalar_lea.smem %s0, 1
  %s3 = sld [smem:[%s2]]
  %s4 = scalar_lea.smem %s0, 2
  %s5 = sld [smem:[%s4]]
  %s6 = scalar_lea.smem %s0, 3
  %s7 = sld [smem:[%s6]]
  %s8 = scalar_lea.smem %s0, 4
  %s9 = sld [smem:[%s8]]
  %s10 = scalar_lea.smem %s0, 5
  %s11 = sld [smem:[%s10]]
  %s12 = scalar_lea.smem %s0, 6
  %s13 = sld [smem:[%s12]]
  %s14 = scalar_lea.smem %s0, 7
  %s15 = sld [smem:[%s14]]
  %s16 = scalar_lea.smem %s0, 8
  %s17 = sld [smem:[%s16]]
  %s18 = scalar_lea.smem %s0, 9
  %s19 = sld [smem:[%s18]]
  %s20 = scalar_lea.smem %s0, 10
  %s21 = sld [smem:[%s20]]
  %s22 = scalar_lea.smem %s0, 11
  %s23 = sld [smem:[%s22]]
  %s24 = scalar_lea.smem %s0, 12
  %s25 = sld [smem:[%s24]]
  %s26 = scalar_lea.smem %s0, 13
  %s27 = sld [smem:[%s26]]
  %s28 = scalar_lea.smem %s0, 14
  %s29 = sld [smem:[%s28]]
  %s30 = scalar_lea.smem %s0, 15
  %s31 = sld [smem:[%s30]]
  %s32 = scalar_lea.smem %s0, 16
  %s33 = sld [smem:[%s32]]
  %s34 = scalar_lea.smem %s0, 17
  %s35 = sld [smem:[%s34]]
  %s36 = scalar_lea.smem %s0, 18
  %s37 = sld [smem:[%s36]]
  %s38 = scalar_lea.smem %s0, 19
  %s39 = sld [smem:[%s38]]
  %s40 = scalar_lea.smem %s0, 20
  %s41 = sld [smem:[%s40]]
  %s42 = scalar_lea.smem %s0, 21
  %s43 = sld [smem:[%s42]]
  %s44 = scalar_lea.smem %s0, 22
  %s45 = sld [smem:[%s44]]
  %s46 = scalar_lea.smem %s0, 23
  %s47 = sld [smem:[%s46]]
  %s48 = scalar_lea.smem %s0, 24
  %s49 = sld [smem:[%s48]]
  %s50 = scalar_lea.smem %s0, 25
  %s51 = sld [smem:[%s50]]
  %s52 = scalar_lea.smem %s0, 26
  %s53 = sld [smem:[%s52]]
  %s54 = scalar_lea.smem %s0, 27
  %s55 = sld [smem:[%s54]]
  %s56 = scalar_lea.smem %s0, 28
  %s57 = sld [smem:[%s56]]
  %s58 = scalar_lea.smem %s0, 29
  %s59 = sld [smem:[%s58]]
  %s60 = scalar_lea.smem %s0, 30
  %s61 = sld [smem:[%s60]]
  %s62 = scalar_lea.smem %s0, 31
  %s63 = sld [smem:[%s62]]
  %s64 = scalar_lea.smem %s0, 32
  %s65 = sld [smem:[%s64]]
  %s66 = scalar_lea.smem %s0, 33
  %s67 = sld [smem:[%s66]]
  %s68 = scalar_lea.smem %s0, 34
  %s69 = sld [smem:[%s68]]
  %s70 = scalar_lea.smem %s0, 35
  %s71 = sld [smem:[%s70]]
  %s72 = scalar_lea.smem %s0, 36
  %s73 = sld [smem:[%s72]]
  %s74 = scalar_lea.smem %s0, 37
  %s75 = sld [smem:[%s74]]
  %s76 = scalar_lea.smem %s0, 38
  %s77 = sld [smem:[%s76]]
  %s78 = scalar_lea.smem %s0, 39
  %s79 = sld [smem:[%s78]]
  %s80 = scalar_lea.smem %s0, 40
  %s81 = sld [smem:[%s80]]
  %s82 = scalar_lea.smem %s0, 41
  %s83 = sld [smem:[%s82]]
  %s84 = scalar_lea.smem %s0, 42
  %s85 = sld [smem:[%s84]]
  %s86 = scalar_lea.smem %s0, 43
  %s87 = sld [smem:[%s86]]
  %s88 = scalar_lea.smem %s0, 44
  %s89 = sld [smem:[%s88]]
  %90 = xla_tuple %s87, %s89
  %s91 = sld [smem:[#allocation0]]
  $region221: #{hierarchical_forward.1} parent=0
    _
  %s93 = ssub.s32 1, %s91
  %s94 = scalar_select 0, %s93, %s91
  loop: start=0, step=1, limit=6
  $region2: #{hierarchical_forward.1} parent=0 // loop_pre_header
    _
  $region3: #{hierarchical_forward.1} parent=0 // loop_header
    %s96 = sphi 0, %s100
    %p97 = scmp.ge.s32.totalorder %s96, 6
    %s103 = sphi 0, %s115
    %s104 = sphi 0, %s111
    %s105 = sphi 0, %s103
    %s106 = sphi 0, %s104
    %s107 = sphi 0, %s105
    %s108 = sphi 0, %s106
    %s118 = sphi 0, %s120
    %s121 = sphi 0, %s118
    %s122 = sphi 0, %s121
    %s138 = sphi 0, %s122
    %s144 = sphi 0, %s146
    %s147 = sphi 0, %s144
    %s148 = sphi 0, %s147
    %s164 = sphi 0, %s148
    %s170 = sphi 0, %s172
    %s173 = sphi 0, %s170
    %s174 = sphi 0, %s173
    %s190 = sphi 0, %s174
    %s196 = sphi 0, %s198
    %s199 = sphi 0, %s196
    %s200 = sphi 0, %s199
    %s216 = sphi 0, %s200
    %s222 = sphi 0, %s224
    %s225 = sphi 0, %s222
    %s226 = sphi 0, %s225
    %s242 = sphi 0, %s226
    %s248 = sphi 0, %s250
    %s251 = sphi 0, %s248
    %s252 = sphi 0, %s251
    %s268 = sphi 0, %s252
    %s274 = sphi 0, %s276
    %s277 = sphi 0, %s274
    %s278 = sphi 0, %s277
    %s294 = sphi 0, %s278
    %s300 = sphi 0, %s302
    %s303 = sphi 0, %s300
    %s304 = sphi 0, %s303
    %s320 = sphi 0, %s304
    %s326 = sphi 0, %s328
    %s329 = sphi 0, %s326
    %s330 = sphi 0, %s329
    %s346 = sphi 0, %s330
    %s352 = sphi 0, %s354
    %s355 = sphi 0, %s352
    %s356 = sphi 0, %s355
    %s372 = sphi 0, %s356
    %s378 = sphi 0, %s380
    %s381 = sphi 0, %s378
    %s382 = sphi 0, %s381
    %s398 = sphi 0, %s382
    %s404 = sphi 0, %s406
    %s407 = sphi 0, %s404
    %s408 = sphi 0, %s407
    %s424 = sphi 0, %s408
    %s430 = sphi 0, %s432
    %s433 = sphi 0, %s430
    %s434 = sphi 0, %s433
    %s450 = sphi 0, %s434
    %s456 = sphi 0, %s458
    %s459 = sphi 0, %s456
    %s460 = sphi 0, %s459
    %s476 = sphi 0, %s460
    %s482 = sphi 0, %s484
    %s485 = sphi 0, %s482
    %s486 = sphi 0, %s485
    %s502 = sphi 0, %s486
    %s508 = sphi 0, %s510
    %s511 = sphi 0, %s508
    %s512 = sphi 0, %s511
    %s528 = sphi 0, %s512
    %s534 = sphi 0, %s536
    %s537 = sphi 0, %s534
    %s538 = sphi 0, %s537
    %s554 = sphi 0, %s538
    %s560 = sphi 0, %s562
    %s563 = sphi 0, %s560
    %s564 = sphi 0, %s563
    %s580 = sphi 0, %s564
    %s586 = sphi 0, %s588
    %s589 = sphi 0, %s586
    %s590 = sphi 0, %s589
    %s606 = sphi 0, %s590
    %s612 = sphi 0, %s614
    %s615 = sphi 0, %s612
    %s616 = sphi 0, %s615
    %s632 = sphi 0, %s616
    %s638 = sphi 0, %s640
    %s641 = sphi 0, %s638
    %s642 = sphi 0, %s641
    %s658 = sphi 0, %s642
    %s664 = sphi 0, %s666
    %s667 = sphi 0, %s664
    %s668 = sphi 0, %s667
    %s684 = sphi 0, %s668
    %s690 = sphi 0, %s692
    %s693 = sphi 0, %s690
    %s694 = sphi 0, %s693
    %s710 = sphi 0, %s694
    %s716 = sphi 0, %s718
    %s719 = sphi 0, %s716
    %s720 = sphi 0, %s719
    %s736 = sphi 0, %s720
    %s742 = sphi 0, %s744
    %s745 = sphi 0, %s742
    %s746 = sphi 0, %s745
    %s762 = sphi 0, %s746
    %s768 = sphi 0, %s770
    %s771 = sphi 0, %s768
    %s772 = sphi 0, %s771
    %s788 = sphi 0, %s772
    %s794 = sphi 0, %s796
    %s797 = sphi 0, %s794
    %s798 = sphi 0, %s797
    %s814 = sphi 0, %s798
    %s820 = sphi 0, %s822
    %s823 = sphi 0, %s820
    %s824 = sphi 0, %s823
    %s840 = sphi 0, %s824
    %s846 = sphi 0, %s848
    %s849 = sphi 0, %s846
    %s850 = sphi 0, %s849
    %s866 = sphi 0, %s850
    %s872 = sphi 0, %s874
    %s875 = sphi 0, %s872
    %s876 = sphi 0, %s875
    %s892 = sphi 0, %s876
    %s898 = sphi 0, %s900
    %s901 = sphi 0, %s898
    %s902 = sphi 0, %s901
    %s918 = sphi 0, %s902
    %s924 = sphi 0, %s926
    %s927 = sphi 0, %s924
    %s928 = sphi 0, %s927
    %s944 = sphi 0, %s928
    %s950 = sphi 0, %s952
    %s953 = sphi 0, %s950
    %s954 = sphi 0, %s953
    %s970 = sphi 0, %s954
    %s976 = sphi 0, %s978
    %s979 = sphi 0, %s976
    %s980 = sphi 0, %s979
    %s996 = sphi 0, %s980
    %s1002 = sphi 0, %s1004
    %s1005 = sphi 0, %s1002
    %s1006 = sphi 0, %s1005
    %s1022 = sphi 0, %s1006
    %s1028 = sphi 0, %s1030
    %s1031 = sphi 0, %s1028
    %s1032 = sphi 0, %s1031
    %s1048 = sphi 0, %s1032
    %s1054 = sphi 0, %s1056
    %s1057 = sphi 0, %s1054
    %s1058 = sphi 0, %s1057
    %s1074 = sphi 0, %s1058
    %s1080 = sphi 0, %s1082
    %s1083 = sphi 0, %s1080
    %s1084 = sphi 0, %s1083
    %s1100 = sphi 0, %s1084
    %s1106 = sphi 0, %s1108
    %s1109 = sphi 0, %s1106
    %s1110 = sphi 0, %s1109
    %s1126 = sphi 0, %s1110
    %s1132 = sphi 0, %s1134
    %s1135 = sphi 0, %s1132
    %s1136 = sphi 0, %s1135
    %s1152 = sphi 0, %s1136
    %s1158 = sphi 0, %s1160
    %s1161 = sphi 0, %s1158
    %s1162 = sphi 0, %s1161
    %s1178 = sphi 0, %s1162
    %s1184 = sphi 0, %s1186
    %s1187 = sphi 0, %s1184
    %s1188 = sphi 0, %s1187
    %s1204 = sphi 0, %s1188
    %s1210 = sphi 0, %s1212
    %s1213 = sphi 0, %s1210
    %s1214 = sphi 0, %s1213
    %s1230 = sphi 0, %s1214
    %s1236 = sphi 0, %s1238
    %s1239 = sphi 0, %s1236
    %s1240 = sphi 0, %s1239
    %s1256 = sphi 0, %s1240
    %s1262 = sphi 0, %s1264
    %s1265 = sphi 0, %s1262
    %s1266 = sphi 0, %s1265
    %s1282 = sphi 0, %s1266
  $region4: #{hierarchical_forward.1} parent=0 // loop_header_branch
    %99 = sbr.rel (%p97) target = $region8
  $region5: #{hierarchical_forward.1} parent=0 // loop_body
    %s101 = ssub.s32 %s96, 1
    %s102 = ssub.s32 %s96, 2
    %s109 = sadd.s32 1, %s104
    %p110 = scmp.ge.s32.totalorder %s109, 2
    %s111 = scalar_select %p110, 0, %s109
    %s112 = sadd.s32 1, %s103
    %s113 = scalar_select %p110, %s112, %s103
    %p114 = scmp.ge.s32.totalorder %s113, 2
    %s115 = scalar_select %p114, 0, %s113
    %s116 = ssub.s32 %s103, %s115
    %p117 = scmp.eq.s32.totalorder %s116, 0
    %s119 = sadd.s32 %s118, 1
    %s120 = scalar_select %p117, %s118, %s119
    %p123 = pneg %p117
    %p124 = scmp.eq.s32.totalorder %s96, 3
    %p125 = por %p123, %p124
    %p126 = scmp.ne.s32.totalorder %s118, %s121
    %p127 = scmp.eq.s32.totalorder %s96, 0
    %p128 = por %p126, %p127
    %p129 = scmp.ne.s32.totalorder %s118, %s121
    %p130 = scmp.eq.s32.totalorder %s101, 3
    %p131 = por %p129, %p130
    %p132 = scmp.ne.s32.totalorder %s121, %s122
    %p133 = scmp.eq.s32.totalorder %s101, 0
    %p134 = por %p132, %p133
    %p135 = scmp.ne.s32.totalorder %s121, %s122
    %p136 = scmp.eq.s32.totalorder %s102, 3
    %p137 = por %p135, %p136
    %p139 = scmp.ne.s32.totalorder %s122, %s138
    %p140 = scmp.eq.s32.totalorder %s102, 0
    %p141 = por %p139, %p140
    %s142 = ssub.s32 %s103, %s115
    %p143 = scmp.eq.s32.totalorder %s142, 0
    %s145 = sadd.s32 %s144, 1
    %s146 = scalar_select %p143, %s144, %s145
    %p149 = pneg %p143
    %p150 = scmp.eq.s32.totalorder %s96, 3
    %p151 = por %p149, %p150
    %p152 = scmp.ne.s32.totalorder %s144, %s147
    %p153 = scmp.eq.s32.totalorder %s96, 0
    %p154 = por %p152, %p153
    %p155 = scmp.ne.s32.totalorder %s144, %s147
    %p156 = scmp.eq.s32.totalorder %s101, 3
    %p157 = por %p155, %p156
    %p158 = scmp.ne.s32.totalorder %s147, %s148
    %p159 = scmp.eq.s32.totalorder %s101, 0
    %p160 = por %p158, %p159
    %p161 = scmp.ne.s32.totalorder %s147, %s148
    %p162 = scmp.eq.s32.totalorder %s102, 3
    %p163 = por %p161, %p162
    %p165 = scmp.ne.s32.totalorder %s148, %s164
    %p166 = scmp.eq.s32.totalorder %s102, 0
    %p167 = por %p165, %p166
    %s168 = ssub.s32 %s103, %s115
    %p169 = scmp.eq.s32.totalorder %s168, 0
    %s171 = sadd.s32 %s170, 1
    %s172 = scalar_select %p169, %s170, %s171
    %p175 = pneg %p169
    %p176 = scmp.eq.s32.totalorder %s96, 3
    %p177 = por %p175, %p176
    %p178 = scmp.ne.s32.totalorder %s170, %s173
    %p179 = scmp.eq.s32.totalorder %s96, 0
    %p180 = por %p178, %p179
    %p181 = scmp.ne.s32.totalorder %s170, %s173
    %p182 = scmp.eq.s32.totalorder %s101, 3
    %p183 = por %p181, %p182
    %p184 = scmp.ne.s32.totalorder %s173, %s174
    %p185 = scmp.eq.s32.totalorder %s101, 0
    %p186 = por %p184, %p185
    %p187 = scmp.ne.s32.totalorder %s173, %s174
    %p188 = scmp.eq.s32.totalorder %s102, 3
    %p189 = por %p187, %p188
    %p191 = scmp.ne.s32.totalorder %s174, %s190
    %p192 = scmp.eq.s32.totalorder %s102, 0
    %p193 = por %p191, %p192
    %s194 = ssub.s32 %s103, %s115
    %p195 = scmp.eq.s32.totalorder %s194, 0
    %s197 = sadd.s32 %s196, 1
    %s198 = scalar_select %p195, %s196, %s197
    %p201 = pneg %p195
    %p202 = scmp.eq.s32.totalorder %s96, 3
    %p203 = por %p201, %p202
    %p204 = scmp.ne.s32.totalorder %s196, %s199
    %p205 = scmp.eq.s32.totalorder %s96, 0
    %p206 = por %p204, %p205
    %p207 = scmp.ne.s32.totalorder %s196, %s199
    %p208 = scmp.eq.s32.totalorder %s101, 3
    %p209 = por %p207, %p208
    %p210 = scmp.ne.s32.totalorder %s199, %s200
    %p211 = scmp.eq.s32.totalorder %s101, 0
    %p212 = por %p210, %p211
    %p213 = scmp.ne.s32.totalorder %s199, %s200
    %p214 = scmp.eq.s32.totalorder %s102, 3
    %p215 = por %p213, %p214
    %p217 = scmp.ne.s32.totalorder %s200, %s216
    %p218 = scmp.eq.s32.totalorder %s102, 0
    %p219 = por %p217, %p218
    %s220 = ssub.s32 %s103, %s115
    %p221 = scmp.eq.s32.totalorder %s220, 0
    %s223 = sadd.s32 %s222, 1
    %s224 = scalar_select %p221, %s222, %s223
    %p227 = pneg %p221
    %p228 = scmp.eq.s32.totalorder %s96, 3
    %p229 = por %p227, %p228
    %p230 = scmp.ne.s32.totalorder %s222, %s225
    %p231 = scmp.eq.s32.totalorder %s96, 0
    %p232 = por %p230, %p231
    %p233 = scmp.ne.s32.totalorder %s222, %s225
    %p234 = scmp.eq.s32.totalorder %s101, 3
    %p235 = por %p233, %p234
    %p236 = scmp.ne.s32.totalorder %s225, %s226
    %p237 = scmp.eq.s32.totalorder %s101, 0
    %p238 = por %p236, %p237
    %p239 = scmp.ne.s32.totalorder %s225, %s226
    %p240 = scmp.eq.s32.totalorder %s102, 3
    %p241 = por %p239, %p240
    %p243 = scmp.ne.s32.totalorder %s226, %s242
    %p244 = scmp.eq.s32.totalorder %s102, 0
    %p245 = por %p243, %p244
    %s246 = ssub.s32 %s104, %s111
    %p247 = scmp.eq.s32.totalorder %s246, 0
    %s249 = sadd.s32 %s248, 1
    %s250 = scalar_select %p247, %s248, %s249
    %p253 = pneg %p247
    %p254 = scmp.eq.s32.totalorder %s96, 3
    %p255 = por %p253, %p254
    %p256 = scmp.ne.s32.totalorder %s248, %s251
    %p257 = scmp.eq.s32.totalorder %s96, 0
    %p258 = por %p256, %p257
    %p259 = scmp.ne.s32.totalorder %s248, %s251
    %p260 = scmp.eq.s32.totalorder %s101, 3
    %p261 = por %p259, %p260
    %p262 = scmp.ne.s32.totalorder %s251, %s252
    %p263 = scmp.eq.s32.totalorder %s101, 0
    %p264 = por %p262, %p263
    %p265 = scmp.ne.s32.totalorder %s251, %s252
    %p266 = scmp.eq.s32.totalorder %s102, 3
    %p267 = por %p265, %p266
    %p269 = scmp.ne.s32.totalorder %s252, %s268
    %p270 = scmp.eq.s32.totalorder %s102, 0
    %p271 = por %p269, %p270
    %s272 = ssub.s32 %s104, %s111
    %p273 = scmp.eq.s32.totalorder %s272, 0
    %s275 = sadd.s32 %s274, 1
    %s276 = scalar_select %p273, %s274, %s275
    %p279 = pneg %p273
    %p280 = scmp.eq.s32.totalorder %s96, 3
    %p281 = por %p279, %p280
    %p282 = scmp.ne.s32.totalorder %s274, %s277
    %p283 = scmp.eq.s32.totalorder %s96, 0
    %p284 = por %p282, %p283
    %p285 = scmp.ne.s32.totalorder %s274, %s277
    %p286 = scmp.eq.s32.totalorder %s101, 3
    %p287 = por %p285, %p286
    %p288 = scmp.ne.s32.totalorder %s277, %s278
    %p289 = scmp.eq.s32.totalorder %s101, 0
    %p290 = por %p288, %p289
    %p291 = scmp.ne.s32.totalorder %s277, %s278
    %p292 = scmp.eq.s32.totalorder %s102, 3
    %p293 = por %p291, %p292
    %p295 = scmp.ne.s32.totalorder %s278, %s294
    %p296 = scmp.eq.s32.totalorder %s102, 0
    %p297 = por %p295, %p296
    %s298 = ssub.s32 %s104, %s111
    %p299 = scmp.eq.s32.totalorder %s298, 0
    %s301 = sadd.s32 %s300, 1
    %s302 = scalar_select %p299, %s300, %s301
    %p305 = pneg %p299
    %p306 = scmp.eq.s32.totalorder %s96, 3
    %p307 = por %p305, %p306
    %p308 = scmp.ne.s32.totalorder %s300, %s303
    %p309 = scmp.eq.s32.totalorder %s96, 0
    %p310 = por %p308, %p309
    %p311 = scmp.ne.s32.totalorder %s300, %s303
    %p312 = scmp.eq.s32.totalorder %s101, 3
    %p313 = por %p311, %p312
    %p314 = scmp.ne.s32.totalorder %s303, %s304
    %p315 = scmp.eq.s32.totalorder %s101, 0
    %p316 = por %p314, %p315
    %p317 = scmp.ne.s32.totalorder %s303, %s304
    %p318 = scmp.eq.s32.totalorder %s102, 3
    %p319 = por %p317, %p318
    %p321 = scmp.ne.s32.totalorder %s304, %s320
    %p322 = scmp.eq.s32.totalorder %s102, 0
    %p323 = por %p321, %p322
    %s324 = ssub.s32 %s104, %s111
    %p325 = scmp.eq.s32.totalorder %s324, 0
    %s327 = sadd.s32 %s326, 1
    %s328 = scalar_select %p325, %s326, %s327
    %p331 = pneg %p325
    %p332 = scmp.eq.s32.totalorder %s96, 3
    %p333 = por %p331, %p332
    %p334 = scmp.ne.s32.totalorder %s326, %s329
    %p335 = scmp.eq.s32.totalorder %s96, 0
    %p336 = por %p334, %p335
    %p337 = scmp.ne.s32.totalorder %s326, %s329
    %p338 = scmp.eq.s32.totalorder %s101, 3
    %p339 = por %p337, %p338
    %p340 = scmp.ne.s32.totalorder %s329, %s330
    %p341 = scmp.eq.s32.totalorder %s101, 0
    %p342 = por %p340, %p341
    %p343 = scmp.ne.s32.totalorder %s329, %s330
    %p344 = scmp.eq.s32.totalorder %s102, 3
    %p345 = por %p343, %p344
    %p347 = scmp.ne.s32.totalorder %s330, %s346
    %p348 = scmp.eq.s32.totalorder %s102, 0
    %p349 = por %p347, %p348
    %s350 = ssub.s32 %s104, %s111
    %p351 = scmp.eq.s32.totalorder %s350, 0
    %s353 = sadd.s32 %s352, 1
    %s354 = scalar_select %p351, %s352, %s353
    %p357 = pneg %p351
    %p358 = scmp.eq.s32.totalorder %s96, 3
    %p359 = por %p357, %p358
    %p360 = scmp.ne.s32.totalorder %s352, %s355
    %p361 = scmp.eq.s32.totalorder %s96, 0
    %p362 = por %p360, %p361
    %p363 = scmp.ne.s32.totalorder %s352, %s355
    %p364 = scmp.eq.s32.totalorder %s101, 3
    %p365 = por %p363, %p364
    %p366 = scmp.ne.s32.totalorder %s355, %s356
    %p367 = scmp.eq.s32.totalorder %s101, 0
    %p368 = por %p366, %p367
    %p369 = scmp.ne.s32.totalorder %s355, %s356
    %p370 = scmp.eq.s32.totalorder %s102, 3
    %p371 = por %p369, %p370
    %p373 = scmp.ne.s32.totalorder %s356, %s372
    %p374 = scmp.eq.s32.totalorder %s102, 0
    %p375 = por %p373, %p374
    %s376 = ssub.s32 %s104, %s111
    %p377 = scmp.eq.s32.totalorder %s376, 0
    %s379 = sadd.s32 %s378, 1
    %s380 = scalar_select %p377, %s378, %s379
    %p383 = pneg %p377
    %p384 = scmp.eq.s32.totalorder %s96, 3
    %p385 = por %p383, %p384
    %p386 = scmp.ne.s32.totalorder %s378, %s381
    %p387 = scmp.eq.s32.totalorder %s96, 0
    %p388 = por %p386, %p387
    %p389 = scmp.ne.s32.totalorder %s378, %s381
    %p390 = scmp.eq.s32.totalorder %s101, 3
    %p391 = por %p389, %p390
    %p392 = scmp.ne.s32.totalorder %s381, %s382
    %p393 = scmp.eq.s32.totalorder %s101, 0
    %p394 = por %p392, %p393
    %p395 = scmp.ne.s32.totalorder %s381, %s382
    %p396 = scmp.eq.s32.totalorder %s102, 3
    %p397 = por %p395, %p396
    %p399 = scmp.ne.s32.totalorder %s382, %s398
    %p400 = scmp.eq.s32.totalorder %s102, 0
    %p401 = por %p399, %p400
    %s402 = ssub.s32 %s104, %s111
    %p403 = scmp.eq.s32.totalorder %s402, 0
    %s405 = sadd.s32 %s404, 1
    %s406 = scalar_select %p403, %s404, %s405
    %p409 = pneg %p403
    %p410 = scmp.eq.s32.totalorder %s96, 3
    %p411 = por %p409, %p410
    %p412 = scmp.ne.s32.totalorder %s404, %s407
    %p413 = scmp.eq.s32.totalorder %s96, 0
    %p414 = por %p412, %p413
    %p415 = scmp.ne.s32.totalorder %s404, %s407
    %p416 = scmp.eq.s32.totalorder %s101, 3
    %p417 = por %p415, %p416
    %p418 = scmp.ne.s32.totalorder %s407, %s408
    %p419 = scmp.eq.s32.totalorder %s101, 0
    %p420 = por %p418, %p419
    %p421 = scmp.ne.s32.totalorder %s407, %s408
    %p422 = scmp.eq.s32.totalorder %s102, 3
    %p423 = por %p421, %p422
    %p425 = scmp.ne.s32.totalorder %s408, %s424
    %p426 = scmp.eq.s32.totalorder %s102, 0
    %p427 = por %p425, %p426
    %s428 = ssub.s32 %s104, %s111
    %p429 = scmp.eq.s32.totalorder %s428, 0
    %s431 = sadd.s32 %s430, 1
    %s432 = scalar_select %p429, %s430, %s431
    %p435 = pneg %p429
    %p436 = scmp.eq.s32.totalorder %s96, 3
    %p437 = por %p435, %p436
    %p438 = scmp.ne.s32.totalorder %s430, %s433
    %p439 = scmp.eq.s32.totalorder %s96, 0
    %p440 = por %p438, %p439
    %p441 = scmp.ne.s32.totalorder %s430, %s433
    %p442 = scmp.eq.s32.totalorder %s101, 3
    %p443 = por %p441, %p442
    %p444 = scmp.ne.s32.totalorder %s433, %s434
    %p445 = scmp.eq.s32.totalorder %s101, 0
    %p446 = por %p444, %p445
    %p447 = scmp.ne.s32.totalorder %s433, %s434
    %p448 = scmp.eq.s32.totalorder %s102, 3
    %p449 = por %p447, %p448
    %p451 = scmp.ne.s32.totalorder %s434, %s450
    %p452 = scmp.eq.s32.totalorder %s102, 0
    %p453 = por %p451, %p452
    %s454 = ssub.s32 %s104, %s111
    %p455 = scmp.eq.s32.totalorder %s454, 0
    %s457 = sadd.s32 %s456, 1
    %s458 = scalar_select %p455, %s456, %s457
    %p461 = pneg %p455
    %p462 = scmp.eq.s32.totalorder %s96, 3
    %p463 = por %p461, %p462
    %p464 = scmp.ne.s32.totalorder %s456, %s459
    %p465 = scmp.eq.s32.totalorder %s96, 0
    %p466 = por %p464, %p465
    %p467 = scmp.ne.s32.totalorder %s456, %s459
    %p468 = scmp.eq.s32.totalorder %s101, 3
    %p469 = por %p467, %p468
    %p470 = scmp.ne.s32.totalorder %s459, %s460
    %p471 = scmp.eq.s32.totalorder %s101, 0
    %p472 = por %p470, %p471
    %p473 = scmp.ne.s32.totalorder %s459, %s460
    %p474 = scmp.eq.s32.totalorder %s102, 3
    %p475 = por %p473, %p474
    %p477 = scmp.ne.s32.totalorder %s460, %s476
    %p478 = scmp.eq.s32.totalorder %s102, 0
    %p479 = por %p477, %p478
    %s480 = ssub.s32 %s104, %s111
    %p481 = scmp.eq.s32.totalorder %s480, 0
    %s483 = sadd.s32 %s482, 1
    %s484 = scalar_select %p481, %s482, %s483
    %p487 = pneg %p481
    %p488 = scmp.eq.s32.totalorder %s96, 3
    %p489 = por %p487, %p488
    %p490 = scmp.ne.s32.totalorder %s482, %s485
    %p491 = scmp.eq.s32.totalorder %s96, 0
    %p492 = por %p490, %p491
    %p493 = scmp.ne.s32.totalorder %s482, %s485
    %p494 = scmp.eq.s32.totalorder %s101, 3
    %p495 = por %p493, %p494
    %p496 = scmp.ne.s32.totalorder %s485, %s486
    %p497 = scmp.eq.s32.totalorder %s101, 0
    %p498 = por %p496, %p497
    %p499 = scmp.ne.s32.totalorder %s485, %s486
    %p500 = scmp.eq.s32.totalorder %s102, 3
    %p501 = por %p499, %p500
    %p503 = scmp.ne.s32.totalorder %s486, %s502
    %p504 = scmp.eq.s32.totalorder %s102, 0
    %p505 = por %p503, %p504
    %s506 = ssub.s32 %s104, %s111
    %p507 = scmp.eq.s32.totalorder %s506, 0
    %s509 = sadd.s32 %s508, 1
    %s510 = scalar_select %p507, %s508, %s509
    %p513 = pneg %p507
    %p514 = scmp.eq.s32.totalorder %s96, 3
    %p515 = por %p513, %p514
    %p516 = scmp.ne.s32.totalorder %s508, %s511
    %p517 = scmp.eq.s32.totalorder %s96, 0
    %p518 = por %p516, %p517
    %p519 = scmp.ne.s32.totalorder %s508, %s511
    %p520 = scmp.eq.s32.totalorder %s101, 3
    %p521 = por %p519, %p520
    %p522 = scmp.ne.s32.totalorder %s511, %s512
    %p523 = scmp.eq.s32.totalorder %s101, 0
    %p524 = por %p522, %p523
    %p525 = scmp.ne.s32.totalorder %s511, %s512
    %p526 = scmp.eq.s32.totalorder %s102, 3
    %p527 = por %p525, %p526
    %p529 = scmp.ne.s32.totalorder %s512, %s528
    %p530 = scmp.eq.s32.totalorder %s102, 0
    %p531 = por %p529, %p530
    %s532 = ssub.s32 %s104, %s111
    %p533 = scmp.eq.s32.totalorder %s532, 0
    %s535 = sadd.s32 %s534, 1
    %s536 = scalar_select %p533, %s534, %s535
    %p539 = pneg %p533
    %p540 = scmp.eq.s32.totalorder %s96, 3
    %p541 = por %p539, %p540
    %p542 = scmp.ne.s32.totalorder %s534, %s537
    %p543 = scmp.eq.s32.totalorder %s96, 0
    %p544 = por %p542, %p543
    %p545 = scmp.ne.s32.totalorder %s534, %s537
    %p546 = scmp.eq.s32.totalorder %s101, 3
    %p547 = por %p545, %p546
    %p548 = scmp.ne.s32.totalorder %s537, %s538
    %p549 = scmp.eq.s32.totalorder %s101, 0
    %p550 = por %p548, %p549
    %p551 = scmp.ne.s32.totalorder %s537, %s538
    %p552 = scmp.eq.s32.totalorder %s102, 3
    %p553 = por %p551, %p552
    %p555 = scmp.ne.s32.totalorder %s538, %s554
    %p556 = scmp.eq.s32.totalorder %s102, 0
    %p557 = por %p555, %p556
    %s558 = ssub.s32 %s104, %s111
    %p559 = scmp.eq.s32.totalorder %s558, 0
    %s561 = sadd.s32 %s560, 1
    %s562 = scalar_select %p559, %s560, %s561
    %p565 = pneg %p559
    %p566 = scmp.eq.s32.totalorder %s96, 3
    %p567 = por %p565, %p566
    %p568 = scmp.ne.s32.totalorder %s560, %s563
    %p569 = scmp.eq.s32.totalorder %s96, 0
    %p570 = por %p568, %p569
    %p571 = scmp.ne.s32.totalorder %s560, %s563
    %p572 = scmp.eq.s32.totalorder %s101, 3
    %p573 = por %p571, %p572
    %p574 = scmp.ne.s32.totalorder %s563, %s564
    %p575 = scmp.eq.s32.totalorder %s101, 0
    %p576 = por %p574, %p575
    %p577 = scmp.ne.s32.totalorder %s563, %s564
    %p578 = scmp.eq.s32.totalorder %s102, 3
    %p579 = por %p577, %p578
    %p581 = scmp.ne.s32.totalorder %s564, %s580
    %p582 = scmp.eq.s32.totalorder %s102, 0
    %p583 = por %p581, %p582
    %s584 = ssub.s32 %s104, %s111
    %p585 = scmp.eq.s32.totalorder %s584, 0
    %s587 = sadd.s32 %s586, 1
    %s588 = scalar_select %p585, %s586, %s587
    %p591 = pneg %p585
    %p592 = scmp.eq.s32.totalorder %s96, 3
    %p593 = por %p591, %p592
    %p594 = scmp.ne.s32.totalorder %s586, %s589
    %p595 = scmp.eq.s32.totalorder %s96, 0
    %p596 = por %p594, %p595
    %p597 = scmp.ne.s32.totalorder %s586, %s589
    %p598 = scmp.eq.s32.totalorder %s101, 3
    %p599 = por %p597, %p598
    %p600 = scmp.ne.s32.totalorder %s589, %s590
    %p601 = scmp.eq.s32.totalorder %s101, 0
    %p602 = por %p600, %p601
    %p603 = scmp.ne.s32.totalorder %s589, %s590
    %p604 = scmp.eq.s32.totalorder %s102, 3
    %p605 = por %p603, %p604
    %p607 = scmp.ne.s32.totalorder %s590, %s606
    %p608 = scmp.eq.s32.totalorder %s102, 0
    %p609 = por %p607, %p608
    %s610 = ssub.s32 %s104, %s111
    %p611 = scmp.eq.s32.totalorder %s610, 0
    %s613 = sadd.s32 %s612, 1
    %s614 = scalar_select %p611, %s612, %s613
    %p617 = pneg %p611
    %p618 = scmp.eq.s32.totalorder %s96, 3
    %p619 = por %p617, %p618
    %p620 = scmp.ne.s32.totalorder %s612, %s615
    %p621 = scmp.eq.s32.totalorder %s96, 0
    %p622 = por %p620, %p621
    %p623 = scmp.ne.s32.totalorder %s612, %s615
    %p624 = scmp.eq.s32.totalorder %s101, 3
    %p625 = por %p623, %p624
    %p626 = scmp.ne.s32.totalorder %s615, %s616
    %p627 = scmp.eq.s32.totalorder %s101, 0
    %p628 = por %p626, %p627
    %p629 = scmp.ne.s32.totalorder %s615, %s616
    %p630 = scmp.eq.s32.totalorder %s102, 3
    %p631 = por %p629, %p630
    %p633 = scmp.ne.s32.totalorder %s616, %s632
    %p634 = scmp.eq.s32.totalorder %s102, 0
    %p635 = por %p633, %p634
    %s636 = ssub.s32 %s104, %s111
    %p637 = scmp.eq.s32.totalorder %s636, 0
    %s639 = sadd.s32 %s638, 1
    %s640 = scalar_select %p637, %s638, %s639
    %p643 = pneg %p637
    %p644 = scmp.eq.s32.totalorder %s96, 3
    %p645 = por %p643, %p644
    %p646 = scmp.ne.s32.totalorder %s638, %s641
    %p647 = scmp.eq.s32.totalorder %s96, 0
    %p648 = por %p646, %p647
    %p649 = scmp.ne.s32.totalorder %s638, %s641
    %p650 = scmp.eq.s32.totalorder %s101, 3
    %p651 = por %p649, %p650
    %p652 = scmp.ne.s32.totalorder %s641, %s642
    %p653 = scmp.eq.s32.totalorder %s101, 0
    %p654 = por %p652, %p653
    %p655 = scmp.ne.s32.totalorder %s641, %s642
    %p656 = scmp.eq.s32.totalorder %s102, 3
    %p657 = por %p655, %p656
    %p659 = scmp.ne.s32.totalorder %s642, %s658
    %p660 = scmp.eq.s32.totalorder %s102, 0
    %p661 = por %p659, %p660
    %s662 = ssub.s32 %s104, %s111
    %p663 = scmp.eq.s32.totalorder %s662, 0
    %s665 = sadd.s32 %s664, 1
    %s666 = scalar_select %p663, %s664, %s665
    %p669 = pneg %p663
    %p670 = scmp.eq.s32.totalorder %s96, 3
    %p671 = por %p669, %p670
    %p672 = scmp.ne.s32.totalorder %s664, %s667
    %p673 = scmp.eq.s32.totalorder %s96, 0
    %p674 = por %p672, %p673
    %p675 = scmp.ne.s32.totalorder %s664, %s667
    %p676 = scmp.eq.s32.totalorder %s101, 3
    %p677 = por %p675, %p676
    %p678 = scmp.ne.s32.totalorder %s667, %s668
    %p679 = scmp.eq.s32.totalorder %s101, 0
    %p680 = por %p678, %p679
    %p681 = scmp.ne.s32.totalorder %s667, %s668
    %p682 = scmp.eq.s32.totalorder %s102, 3
    %p683 = por %p681, %p682
    %p685 = scmp.ne.s32.totalorder %s668, %s684
    %p686 = scmp.eq.s32.totalorder %s102, 0
    %p687 = por %p685, %p686
    %s688 = ssub.s32 %s104, %s111
    %p689 = scmp.eq.s32.totalorder %s688, 0
    %s691 = sadd.s32 %s690, 1
    %s692 = scalar_select %p689, %s690, %s691
    %p695 = pneg %p689
    %p696 = scmp.eq.s32.totalorder %s96, 3
    %p697 = por %p695, %p696
    %p698 = scmp.ne.s32.totalorder %s690, %s693
    %p699 = scmp.eq.s32.totalorder %s96, 0
    %p700 = por %p698, %p699
    %p701 = scmp.ne.s32.totalorder %s690, %s693
    %p702 = scmp.eq.s32.totalorder %s101, 3
    %p703 = por %p701, %p702
    %p704 = scmp.ne.s32.totalorder %s693, %s694
    %p705 = scmp.eq.s32.totalorder %s101, 0
    %p706 = por %p704, %p705
    %p707 = scmp.ne.s32.totalorder %s693, %s694
    %p708 = scmp.eq.s32.totalorder %s102, 3
    %p709 = por %p707, %p708
    %p711 = scmp.ne.s32.totalorder %s694, %s710
    %p712 = scmp.eq.s32.totalorder %s102, 0
    %p713 = por %p711, %p712
    %s714 = ssub.s32 %s104, %s111
    %p715 = scmp.eq.s32.totalorder %s714, 0
    %s717 = sadd.s32 %s716, 1
    %s718 = scalar_select %p715, %s716, %s717
    %p721 = pneg %p715
    %p722 = scmp.eq.s32.totalorder %s96, 3
    %p723 = por %p721, %p722
    %p724 = scmp.ne.s32.totalorder %s716, %s719
    %p725 = scmp.eq.s32.totalorder %s96, 0
    %p726 = por %p724, %p725
    %p727 = scmp.ne.s32.totalorder %s716, %s719
    %p728 = scmp.eq.s32.totalorder %s101, 3
    %p729 = por %p727, %p728
    %p730 = scmp.ne.s32.totalorder %s719, %s720
    %p731 = scmp.eq.s32.totalorder %s101, 0
    %p732 = por %p730, %p731
    %p733 = scmp.ne.s32.totalorder %s719, %s720
    %p734 = scmp.eq.s32.totalorder %s102, 3
    %p735 = por %p733, %p734
    %p737 = scmp.ne.s32.totalorder %s720, %s736
    %p738 = scmp.eq.s32.totalorder %s102, 0
    %p739 = por %p737, %p738
    %s740 = ssub.s32 %s104, %s111
    %p741 = scmp.eq.s32.totalorder %s740, 0
    %s743 = sadd.s32 %s742, 1
    %s744 = scalar_select %p741, %s742, %s743
    %p747 = pneg %p741
    %p748 = scmp.eq.s32.totalorder %s96, 3
    %p749 = por %p747, %p748
    %p750 = scmp.ne.s32.totalorder %s742, %s745
    %p751 = scmp.eq.s32.totalorder %s96, 0
    %p752 = por %p750, %p751
    %p753 = scmp.ne.s32.totalorder %s742, %s745
    %p754 = scmp.eq.s32.totalorder %s101, 3
    %p755 = por %p753, %p754
    %p756 = scmp.ne.s32.totalorder %s745, %s746
    %p757 = scmp.eq.s32.totalorder %s101, 0
    %p758 = por %p756, %p757
    %p759 = scmp.ne.s32.totalorder %s745, %s746
    %p760 = scmp.eq.s32.totalorder %s102, 3
    %p761 = por %p759, %p760
    %p763 = scmp.ne.s32.totalorder %s746, %s762
    %p764 = scmp.eq.s32.totalorder %s102, 0
    %p765 = por %p763, %p764
    %s766 = ssub.s32 %s104, %s111
    %p767 = scmp.eq.s32.totalorder %s766, 0
    %s769 = sadd.s32 %s768, 1
    %s770 = scalar_select %p767, %s768, %s769
    %p773 = pneg %p767
    %p774 = scmp.eq.s32.totalorder %s96, 3
    %p775 = por %p773, %p774
    %p776 = scmp.ne.s32.totalorder %s768, %s771
    %p777 = scmp.eq.s32.totalorder %s96, 0
    %p778 = por %p776, %p777
    %p779 = scmp.ne.s32.totalorder %s768, %s771
    %p780 = scmp.eq.s32.totalorder %s101, 3
    %p781 = por %p779, %p780
    %p782 = scmp.ne.s32.totalorder %s771, %s772
    %p783 = scmp.eq.s32.totalorder %s101, 0
    %p784 = por %p782, %p783
    %p785 = scmp.ne.s32.totalorder %s771, %s772
    %p786 = scmp.eq.s32.totalorder %s102, 3
    %p787 = por %p785, %p786
    %p789 = scmp.ne.s32.totalorder %s772, %s788
    %p790 = scmp.eq.s32.totalorder %s102, 0
    %p791 = por %p789, %p790
    %s792 = ssub.s32 %s104, %s111
    %p793 = scmp.eq.s32.totalorder %s792, 0
    %s795 = sadd.s32 %s794, 1
    %s796 = scalar_select %p793, %s794, %s795
    %p799 = pneg %p793
    %p800 = scmp.eq.s32.totalorder %s96, 3
    %p801 = por %p799, %p800
    %p802 = scmp.ne.s32.totalorder %s794, %s797
    %p803 = scmp.eq.s32.totalorder %s96, 0
    %p804 = por %p802, %p803
    %p805 = scmp.ne.s32.totalorder %s794, %s797
    %p806 = scmp.eq.s32.totalorder %s101, 3
    %p807 = por %p805, %p806
    %p808 = scmp.ne.s32.totalorder %s797, %s798
    %p809 = scmp.eq.s32.totalorder %s101, 0
    %p810 = por %p808, %p809
    %p811 = scmp.ne.s32.totalorder %s797, %s798
    %p812 = scmp.eq.s32.totalorder %s102, 3
    %p813 = por %p811, %p812
    %p815 = scmp.ne.s32.totalorder %s798, %s814
    %p816 = scmp.eq.s32.totalorder %s102, 0
    %p817 = por %p815, %p816
    %s818 = ssub.s32 %s104, %s111
    %p819 = scmp.eq.s32.totalorder %s818, 0
    %s821 = sadd.s32 %s820, 1
    %s822 = scalar_select %p819, %s820, %s821
    %p825 = pneg %p819
    %p826 = scmp.eq.s32.totalorder %s96, 3
    %p827 = por %p825, %p826
    %p828 = scmp.ne.s32.totalorder %s820, %s823
    %p829 = scmp.eq.s32.totalorder %s96, 0
    %p830 = por %p828, %p829
    %p831 = scmp.ne.s32.totalorder %s820, %s823
    %p832 = scmp.eq.s32.totalorder %s101, 3
    %p833 = por %p831, %p832
    %p834 = scmp.ne.s32.totalorder %s823, %s824
    %p835 = scmp.eq.s32.totalorder %s101, 0
    %p836 = por %p834, %p835
    %p837 = scmp.ne.s32.totalorder %s823, %s824
    %p838 = scmp.eq.s32.totalorder %s102, 3
    %p839 = por %p837, %p838
    %p841 = scmp.ne.s32.totalorder %s824, %s840
    %p842 = scmp.eq.s32.totalorder %s102, 0
    %p843 = por %p841, %p842
    %s844 = ssub.s32 %s104, %s111
    %p845 = scmp.eq.s32.totalorder %s844, 0
    %s847 = sadd.s32 %s846, 1
    %s848 = scalar_select %p845, %s846, %s847
    %p851 = pneg %p845
    %p852 = scmp.eq.s32.totalorder %s96, 3
    %p853 = por %p851, %p852
    %p854 = scmp.ne.s32.totalorder %s846, %s849
    %p855 = scmp.eq.s32.totalorder %s96, 0
    %p856 = por %p854, %p855
    %p857 = scmp.ne.s32.totalorder %s846, %s849
    %p858 = scmp.eq.s32.totalorder %s101, 3
    %p859 = por %p857, %p858
    %p860 = scmp.ne.s32.totalorder %s849, %s850
    %p861 = scmp.eq.s32.totalorder %s101, 0
    %p862 = por %p860, %p861
    %p863 = scmp.ne.s32.totalorder %s849, %s850
    %p864 = scmp.eq.s32.totalorder %s102, 3
    %p865 = por %p863, %p864
    %p867 = scmp.ne.s32.totalorder %s850, %s866
    %p868 = scmp.eq.s32.totalorder %s102, 0
    %p869 = por %p867, %p868
    %s870 = ssub.s32 %s104, %s111
    %p871 = scmp.eq.s32.totalorder %s870, 0
    %s873 = sadd.s32 %s872, 1
    %s874 = scalar_select %p871, %s872, %s873
    %p877 = pneg %p871
    %p878 = scmp.eq.s32.totalorder %s96, 3
    %p879 = por %p877, %p878
    %p880 = scmp.ne.s32.totalorder %s872, %s875
    %p881 = scmp.eq.s32.totalorder %s96, 0
    %p882 = por %p880, %p881
    %p883 = scmp.ne.s32.totalorder %s872, %s875
    %p884 = scmp.eq.s32.totalorder %s101, 3
    %p885 = por %p883, %p884
    %p886 = scmp.ne.s32.totalorder %s875, %s876
    %p887 = scmp.eq.s32.totalorder %s101, 0
    %p888 = por %p886, %p887
    %p889 = scmp.ne.s32.totalorder %s875, %s876
    %p890 = scmp.eq.s32.totalorder %s102, 3
    %p891 = por %p889, %p890
    %p893 = scmp.ne.s32.totalorder %s876, %s892
    %p894 = scmp.eq.s32.totalorder %s102, 0
    %p895 = por %p893, %p894
    %s896 = ssub.s32 %s104, %s111
    %p897 = scmp.eq.s32.totalorder %s896, 0
    %s899 = sadd.s32 %s898, 1
    %s900 = scalar_select %p897, %s898, %s899
    %p903 = pneg %p897
    %p904 = scmp.eq.s32.totalorder %s96, 3
    %p905 = por %p903, %p904
    %p906 = scmp.ne.s32.totalorder %s898, %s901
    %p907 = scmp.eq.s32.totalorder %s96, 0
    %p908 = por %p906, %p907
    %p909 = scmp.ne.s32.totalorder %s898, %s901
    %p910 = scmp.eq.s32.totalorder %s101, 3
    %p911 = por %p909, %p910
    %p912 = scmp.ne.s32.totalorder %s901, %s902
    %p913 = scmp.eq.s32.totalorder %s101, 0
    %p914 = por %p912, %p913
    %p915 = scmp.ne.s32.totalorder %s901, %s902
    %p916 = scmp.eq.s32.totalorder %s102, 3
    %p917 = por %p915, %p916
    %p919 = scmp.ne.s32.totalorder %s902, %s918
    %p920 = scmp.eq.s32.totalorder %s102, 0
    %p921 = por %p919, %p920
    %s922 = ssub.s32 %s104, %s111
    %p923 = scmp.eq.s32.totalorder %s922, 0
    %s925 = sadd.s32 %s924, 1
    %s926 = scalar_select %p923, %s924, %s925
    %p929 = pneg %p923
    %p930 = scmp.eq.s32.totalorder %s96, 3
    %p931 = por %p929, %p930
    %p932 = scmp.ne.s32.totalorder %s924, %s927
    %p933 = scmp.eq.s32.totalorder %s96, 0
    %p934 = por %p932, %p933
    %p935 = scmp.ne.s32.totalorder %s924, %s927
    %p936 = scmp.eq.s32.totalorder %s101, 3
    %p937 = por %p935, %p936
    %p938 = scmp.ne.s32.totalorder %s927, %s928
    %p939 = scmp.eq.s32.totalorder %s101, 0
    %p940 = por %p938, %p939
    %p941 = scmp.ne.s32.totalorder %s927, %s928
    %p942 = scmp.eq.s32.totalorder %s102, 3
    %p943 = por %p941, %p942
    %p945 = scmp.ne.s32.totalorder %s928, %s944
    %p946 = scmp.eq.s32.totalorder %s102, 0
    %p947 = por %p945, %p946
    %s948 = ssub.s32 %s104, %s111
    %p949 = scmp.eq.s32.totalorder %s948, 0
    %s951 = sadd.s32 %s950, 1
    %s952 = scalar_select %p949, %s950, %s951
    %p955 = pneg %p949
    %p956 = scmp.eq.s32.totalorder %s96, 3
    %p957 = por %p955, %p956
    %p958 = scmp.ne.s32.totalorder %s950, %s953
    %p959 = scmp.eq.s32.totalorder %s96, 0
    %p960 = por %p958, %p959
    %p961 = scmp.ne.s32.totalorder %s950, %s953
    %p962 = scmp.eq.s32.totalorder %s101, 3
    %p963 = por %p961, %p962
    %p964 = scmp.ne.s32.totalorder %s953, %s954
    %p965 = scmp.eq.s32.totalorder %s101, 0
    %p966 = por %p964, %p965
    %p967 = scmp.ne.s32.totalorder %s953, %s954
    %p968 = scmp.eq.s32.totalorder %s102, 3
    %p969 = por %p967, %p968
    %p971 = scmp.ne.s32.totalorder %s954, %s970
    %p972 = scmp.eq.s32.totalorder %s102, 0
    %p973 = por %p971, %p972
    %s974 = ssub.s32 %s104, %s111
    %p975 = scmp.eq.s32.totalorder %s974, 0
    %s977 = sadd.s32 %s976, 1
    %s978 = scalar_select %p975, %s976, %s977
    %p981 = pneg %p975
    %p982 = scmp.eq.s32.totalorder %s96, 3
    %p983 = por %p981, %p982
    %p984 = scmp.ne.s32.totalorder %s976, %s979
    %p985 = scmp.eq.s32.totalorder %s96, 0
    %p986 = por %p984, %p985
    %p987 = scmp.ne.s32.totalorder %s976, %s979
    %p988 = scmp.eq.s32.totalorder %s101, 3
    %p989 = por %p987, %p988
    %p990 = scmp.ne.s32.totalorder %s979, %s980
    %p991 = scmp.eq.s32.totalorder %s101, 0
    %p992 = por %p990, %p991
    %p993 = scmp.ne.s32.totalorder %s979, %s980
    %p994 = scmp.eq.s32.totalorder %s102, 3
    %p995 = por %p993, %p994
    %p997 = scmp.ne.s32.totalorder %s980, %s996
    %p998 = scmp.eq.s32.totalorder %s102, 0
    %p999 = por %p997, %p998
    %s1000 = ssub.s32 %s104, %s111
    %p1001 = scmp.eq.s32.totalorder %s1000, 0
    %s1003 = sadd.s32 %s1002, 1
    %s1004 = scalar_select %p1001, %s1002, %s1003
    %p1007 = pneg %p1001
    %p1008 = scmp.eq.s32.totalorder %s96, 3
    %p1009 = por %p1007, %p1008
    %p1010 = scmp.ne.s32.totalorder %s1002, %s1005
    %p1011 = scmp.eq.s32.totalorder %s96, 0
    %p1012 = por %p1010, %p1011
    %p1013 = scmp.ne.s32.totalorder %s1002, %s1005
    %p1014 = scmp.eq.s32.totalorder %s101, 3
    %p1015 = por %p1013, %p1014
    %p1016 = scmp.ne.s32.totalorder %s1005, %s1006
    %p1017 = scmp.eq.s32.totalorder %s101, 0
    %p1018 = por %p1016, %p1017
    %p1019 = scmp.ne.s32.totalorder %s1005, %s1006
    %p1020 = scmp.eq.s32.totalorder %s102, 3
    %p1021 = por %p1019, %p1020
    %p1023 = scmp.ne.s32.totalorder %s1006, %s1022
    %p1024 = scmp.eq.s32.totalorder %s102, 0
    %p1025 = por %p1023, %p1024
    %s1026 = ssub.s32 %s104, %s111
    %p1027 = scmp.eq.s32.totalorder %s1026, 0
    %s1029 = sadd.s32 %s1028, 1
    %s1030 = scalar_select %p1027, %s1028, %s1029
    %p1033 = pneg %p1027
    %p1034 = scmp.eq.s32.totalorder %s96, 3
    %p1035 = por %p1033, %p1034
    %p1036 = scmp.ne.s32.totalorder %s1028, %s1031
    %p1037 = scmp.eq.s32.totalorder %s96, 0
    %p1038 = por %p1036, %p1037
    %p1039 = scmp.ne.s32.totalorder %s1028, %s1031
    %p1040 = scmp.eq.s32.totalorder %s101, 3
    %p1041 = por %p1039, %p1040
    %p1042 = scmp.ne.s32.totalorder %s1031, %s1032
    %p1043 = scmp.eq.s32.totalorder %s101, 0
    %p1044 = por %p1042, %p1043
    %p1045 = scmp.ne.s32.totalorder %s1031, %s1032
    %p1046 = scmp.eq.s32.totalorder %s102, 3
    %p1047 = por %p1045, %p1046
    %p1049 = scmp.ne.s32.totalorder %s1032, %s1048
    %p1050 = scmp.eq.s32.totalorder %s102, 0
    %p1051 = por %p1049, %p1050
    %s1052 = ssub.s32 %s104, %s111
    %p1053 = scmp.eq.s32.totalorder %s1052, 0
    %s1055 = sadd.s32 %s1054, 1
    %s1056 = scalar_select %p1053, %s1054, %s1055
    %p1059 = pneg %p1053
    %p1060 = scmp.eq.s32.totalorder %s96, 3
    %p1061 = por %p1059, %p1060
    %p1062 = scmp.ne.s32.totalorder %s1054, %s1057
    %p1063 = scmp.eq.s32.totalorder %s96, 0
    %p1064 = por %p1062, %p1063
    %p1065 = scmp.ne.s32.totalorder %s1054, %s1057
    %p1066 = scmp.eq.s32.totalorder %s101, 3
    %p1067 = por %p1065, %p1066
    %p1068 = scmp.ne.s32.totalorder %s1057, %s1058
    %p1069 = scmp.eq.s32.totalorder %s101, 0
    %p1070 = por %p1068, %p1069
    %p1071 = scmp.ne.s32.totalorder %s1057, %s1058
    %p1072 = scmp.eq.s32.totalorder %s102, 3
    %p1073 = por %p1071, %p1072
    %p1075 = scmp.ne.s32.totalorder %s1058, %s1074
    %p1076 = scmp.eq.s32.totalorder %s102, 0
    %p1077 = por %p1075, %p1076
    %s1078 = ssub.s32 %s104, %s111
    %p1079 = scmp.eq.s32.totalorder %s1078, 0
    %s1081 = sadd.s32 %s1080, 1
    %s1082 = scalar_select %p1079, %s1080, %s1081
    %p1085 = pneg %p1079
    %p1086 = scmp.eq.s32.totalorder %s96, 3
    %p1087 = por %p1085, %p1086
    %p1088 = scmp.ne.s32.totalorder %s1080, %s1083
    %p1089 = scmp.eq.s32.totalorder %s96, 0
    %p1090 = por %p1088, %p1089
    %p1091 = scmp.ne.s32.totalorder %s1080, %s1083
    %p1092 = scmp.eq.s32.totalorder %s101, 3
    %p1093 = por %p1091, %p1092
    %p1094 = scmp.ne.s32.totalorder %s1083, %s1084
    %p1095 = scmp.eq.s32.totalorder %s101, 0
    %p1096 = por %p1094, %p1095
    %p1097 = scmp.ne.s32.totalorder %s1083, %s1084
    %p1098 = scmp.eq.s32.totalorder %s102, 3
    %p1099 = por %p1097, %p1098
    %p1101 = scmp.ne.s32.totalorder %s1084, %s1100
    %p1102 = scmp.eq.s32.totalorder %s102, 0
    %p1103 = por %p1101, %p1102
    %s1104 = ssub.s32 %s104, %s111
    %p1105 = scmp.eq.s32.totalorder %s1104, 0
    %s1107 = sadd.s32 %s1106, 1
    %s1108 = scalar_select %p1105, %s1106, %s1107
    %p1111 = pneg %p1105
    %p1112 = scmp.eq.s32.totalorder %s96, 3
    %p1113 = por %p1111, %p1112
    %p1114 = scmp.ne.s32.totalorder %s1106, %s1109
    %p1115 = scmp.eq.s32.totalorder %s96, 0
    %p1116 = por %p1114, %p1115
    %p1117 = scmp.ne.s32.totalorder %s1106, %s1109
    %p1118 = scmp.eq.s32.totalorder %s101, 3
    %p1119 = por %p1117, %p1118
    %p1120 = scmp.ne.s32.totalorder %s1109, %s1110
    %p1121 = scmp.eq.s32.totalorder %s101, 0
    %p1122 = por %p1120, %p1121
    %p1123 = scmp.ne.s32.totalorder %s1109, %s1110
    %p1124 = scmp.eq.s32.totalorder %s102, 3
    %p1125 = por %p1123, %p1124
    %p1127 = scmp.ne.s32.totalorder %s1110, %s1126
    %p1128 = scmp.eq.s32.totalorder %s102, 0
    %p1129 = por %p1127, %p1128
    %s1130 = ssub.s32 %s104, %s111
    %p1131 = scmp.eq.s32.totalorder %s1130, 0
    %s1133 = sadd.s32 %s1132, 1
    %s1134 = scalar_select %p1131, %s1132, %s1133
    %p1137 = pneg %p1131
    %p1138 = scmp.eq.s32.totalorder %s96, 3
    %p1139 = por %p1137, %p1138
    %p1140 = scmp.ne.s32.totalorder %s1132, %s1135
    %p1141 = scmp.eq.s32.totalorder %s96, 0
    %p1142 = por %p1140, %p1141
    %p1143 = scmp.ne.s32.totalorder %s1132, %s1135
    %p1144 = scmp.eq.s32.totalorder %s101, 3
    %p1145 = por %p1143, %p1144
    %p1146 = scmp.ne.s32.totalorder %s1135, %s1136
    %p1147 = scmp.eq.s32.totalorder %s101, 0
    %p1148 = por %p1146, %p1147
    %p1149 = scmp.ne.s32.totalorder %s1135, %s1136
    %p1150 = scmp.eq.s32.totalorder %s102, 3
    %p1151 = por %p1149, %p1150
    %p1153 = scmp.ne.s32.totalorder %s1136, %s1152
    %p1154 = scmp.eq.s32.totalorder %s102, 0
    %p1155 = por %p1153, %p1154
    %s1156 = ssub.s32 %s104, %s111
    %p1157 = scmp.eq.s32.totalorder %s1156, 0
    %s1159 = sadd.s32 %s1158, 1
    %s1160 = scalar_select %p1157, %s1158, %s1159
    %p1163 = pneg %p1157
    %p1164 = scmp.eq.s32.totalorder %s96, 3
    %p1165 = por %p1163, %p1164
    %p1166 = scmp.ne.s32.totalorder %s1158, %s1161
    %p1167 = scmp.eq.s32.totalorder %s96, 0
    %p1168 = por %p1166, %p1167
    %p1169 = scmp.ne.s32.totalorder %s1158, %s1161
    %p1170 = scmp.eq.s32.totalorder %s101, 3
    %p1171 = por %p1169, %p1170
    %p1172 = scmp.ne.s32.totalorder %s1161, %s1162
    %p1173 = scmp.eq.s32.totalorder %s101, 0
    %p1174 = por %p1172, %p1173
    %p1175 = scmp.ne.s32.totalorder %s1161, %s1162
    %p1176 = scmp.eq.s32.totalorder %s102, 3
    %p1177 = por %p1175, %p1176
    %p1179 = scmp.ne.s32.totalorder %s1162, %s1178
    %p1180 = scmp.eq.s32.totalorder %s102, 0
    %p1181 = por %p1179, %p1180
    %s1182 = ssub.s32 %s104, %s111
    %p1183 = scmp.eq.s32.totalorder %s1182, 0
    %s1185 = sadd.s32 %s1184, 1
    %s1186 = scalar_select %p1183, %s1184, %s1185
    %p1189 = pneg %p1183
    %p1190 = scmp.eq.s32.totalorder %s96, 3
    %p1191 = por %p1189, %p1190
    %p1192 = scmp.ne.s32.totalorder %s1184, %s1187
    %p1193 = scmp.eq.s32.totalorder %s96, 0
    %p1194 = por %p1192, %p1193
    %p1195 = scmp.ne.s32.totalorder %s1184, %s1187
    %p1196 = scmp.eq.s32.totalorder %s101, 3
    %p1197 = por %p1195, %p1196
    %p1198 = scmp.ne.s32.totalorder %s1187, %s1188
    %p1199 = scmp.eq.s32.totalorder %s101, 0
    %p1200 = por %p1198, %p1199
    %p1201 = scmp.ne.s32.totalorder %s1187, %s1188
    %p1202 = scmp.eq.s32.totalorder %s102, 3
    %p1203 = por %p1201, %p1202
    %p1205 = scmp.ne.s32.totalorder %s1188, %s1204
    %p1206 = scmp.eq.s32.totalorder %s102, 0
    %p1207 = por %p1205, %p1206
    %s1208 = ssub.s32 %s104, %s111
    %p1209 = scmp.eq.s32.totalorder %s1208, 0
    %s1211 = sadd.s32 %s1210, 1
    %s1212 = scalar_select %p1209, %s1210, %s1211
    %p1215 = pneg %p1209
    %p1216 = scmp.eq.s32.totalorder %s96, 3
    %p1217 = por %p1215, %p1216
    %p1218 = scmp.ne.s32.totalorder %s1210, %s1213
    %p1219 = scmp.eq.s32.totalorder %s96, 0
    %p1220 = por %p1218, %p1219
    %p1221 = scmp.ne.s32.totalorder %s1210, %s1213
    %p1222 = scmp.eq.s32.totalorder %s101, 3
    %p1223 = por %p1221, %p1222
    %p1224 = scmp.ne.s32.totalorder %s1213, %s1214
    %p1225 = scmp.eq.s32.totalorder %s101, 0
    %p1226 = por %p1224, %p1225
    %p1227 = scmp.ne.s32.totalorder %s1213, %s1214
    %p1228 = scmp.eq.s32.totalorder %s102, 3
    %p1229 = por %p1227, %p1228
    %p1231 = scmp.ne.s32.totalorder %s1214, %s1230
    %p1232 = scmp.eq.s32.totalorder %s102, 0
    %p1233 = por %p1231, %p1232
    %s1234 = ssub.s32 %s103, %s115
    %p1235 = scmp.eq.s32.totalorder %s1234, 0
    %s1237 = sadd.s32 %s1236, 1
    %s1238 = scalar_select %p1235, %s1236, %s1237
    %p1241 = pneg %p1235
    %p1242 = scmp.eq.s32.totalorder %s96, 3
    %p1243 = por %p1241, %p1242
    %p1244 = scmp.ne.s32.totalorder %s1236, %s1239
    %p1245 = scmp.eq.s32.totalorder %s96, 0
    %p1246 = por %p1244, %p1245
    %p1247 = scmp.ne.s32.totalorder %s1236, %s1239
    %p1248 = scmp.eq.s32.totalorder %s101, 3
    %p1249 = por %p1247, %p1248
    %p1250 = scmp.ne.s32.totalorder %s1239, %s1240
    %p1251 = scmp.eq.s32.totalorder %s101, 0
    %p1252 = por %p1250, %p1251
    %p1253 = scmp.ne.s32.totalorder %s1239, %s1240
    %p1254 = scmp.eq.s32.totalorder %s102, 3
    %p1255 = por %p1253, %p1254
    %p1257 = scmp.ne.s32.totalorder %s1240, %s1256
    %p1258 = scmp.eq.s32.totalorder %s102, 0
    %p1259 = por %p1257, %p1258
    %s1260 = ssub.s32 %s103, %s115
    %p1261 = scmp.eq.s32.totalorder %s1260, 0
    %s1263 = sadd.s32 %s1262, 1
    %s1264 = scalar_select %p1261, %s1262, %s1263
    %p1267 = pneg %p1261
    %p1268 = scmp.eq.s32.totalorder %s96, 3
    %p1269 = por %p1267, %p1268
    %p1270 = scmp.ne.s32.totalorder %s1262, %s1265
    %p1271 = scmp.eq.s32.totalorder %s96, 0
    %p1272 = por %p1270, %p1271
    %p1273 = scmp.ne.s32.totalorder %s1262, %s1265
    %p1274 = scmp.eq.s32.totalorder %s101, 3
    %p1275 = por %p1273, %p1274
    %p1276 = scmp.ne.s32.totalorder %s1265, %s1266
    %p1277 = scmp.eq.s32.totalorder %s101, 0
    %p1278 = por %p1276, %p1277
    %p1279 = scmp.ne.s32.totalorder %s1265, %s1266
    %p1280 = scmp.eq.s32.totalorder %s102, 3
    %p1281 = por %p1279, %p1280
    %p1283 = scmp.ne.s32.totalorder %s1266, %s1282
    %p1284 = scmp.eq.s32.totalorder %s102, 0
    %p1285 = por %p1283, %p1284
    %p1286 = scmp.le.s32.totalorder 1, %s96
    %p1287 = scmp.lt.s32.totalorder %s96, 5
    %p1288 = pnand %p1286, %p1287
    %p1289 = pneg %p1288
    // Predicated region
    $region9: #{hierarchical_forward.1} parent=5 // pred_check
      _
    $region10: #{hierarchical_forward.1} parent=5 // pred_check_branch
      %1291 = sbr.rel (%p1288) target = $region12
    $region11: #{hierarchical_forward.1} parent=5 // pred_region
      %s1292 = ssub.s32 %s96, 1
    $region12: #{hierarchical_forward.1} parent=5 // pred_fallthru
      _
    %p1293 = scmp.lt.s32.totalorder %s96, 4
    // Predicated region
    $region13: #{hierarchical_forward.1} parent=5 // pred_check
      %p1294 = pneg %p1293
    $region14: #{hierarchical_forward.1} parent=5 // pred_check_branch
      %1296 = sbr.rel (%p1294) target = $region16
    $region15: #{hierarchical_forward.1} parent=5 // pred_region
      // Predicated region
      $region17: #{hierarchical_forward.1} parent=15 // pred_check
        %p1297 = pneg %p128
      $region18: #{hierarchical_forward.1} parent=15 // pred_check_branch
        %1299 = sbr.rel (%p1297) target = $region20
      $region19: #{hierarchical_forward.1} parent=15 // pred_region
        %p1300 = scmp.lt.s32.totalorder %s103, 1
        %s1301 = scalar_select %p1300, %s103, 1
        %s1302 = smul.addr %s1301, 8
        %s1303 = scalar_lea.vmem %s1, %s1302
      $region20: #{hierarchical_forward.1} parent=15 // pred_fallthru
        _
      // Predicated region
      $region21: #{hierarchical_forward.1} parent=15 // pred_check
        %p1304 = pneg %p154
      $region22: #{hierarchical_forward.1} parent=15 // pred_check_branch
        %1306 = sbr.rel (%p1304) target = $region24
      $region23: #{hierarchical_forward.1} parent=15 // pred_region
        %p1307 = scmp.lt.s32.totalorder %s103, 1
        %s1308 = scalar_select %p1307, %s103, 1
        %s1309 = smul.addr %s1308, 8
        %s1310 = scalar_lea.vmem %s3, %s1309
      $region24: #{hierarchical_forward.1} parent=15 // pred_fallthru
        _
      // Predicated region
      $region25: #{hierarchical_forward.1} parent=15 // pred_check
        %p1311 = pneg %p180
      $region26: #{hierarchical_forward.1} parent=15 // pred_check_branch
        %1313 = sbr.rel (%p1311) target = $region28
      $region27: #{hierarchical_forward.1} parent=15 // pred_region
        %p1314 = scmp.lt.s32.totalorder %s103, 1
        %s1315 = scalar_select %p1314, %s103, 1
        %s1316 = smul.addr %s1315, 4
        %s1317 = scalar_lea.vmem %s5, %s1316
      $region28: #{hierarchical_forward.1} parent=15 // pred_fallthru
        _
      // Predicated region
      $region29: #{hierarchical_forward.1} parent=15 // pred_check
        %p1318 = pneg %p206
      $region30: #{hierarchical_forward.1} parent=15 // pred_check_branch
        %1320 = sbr.rel (%p1318) target = $region32
      $region31: #{hierarchical_forward.1} parent=15 // pred_region
        %p1321 = scmp.lt.s32.totalorder %s103, 1
        %s1322 = scalar_select %p1321, %s103, 1
        %s1323 = smul.addr %s1322, 4
        %s1324 = scalar_lea.vmem %s7, %s1323
      $region32: #{hierarchical_forward.1} parent=15 // pred_fallthru
        _
      // Predicated region
      $region33: #{hierarchical_forward.1} parent=15 // pred_check
        %p1325 = pneg %p232
      $region34: #{hierarchical_forward.1} parent=15 // pred_check_branch
        %1327 = sbr.rel (%p1325) target = $region36
      $region35: #{hierarchical_forward.1} parent=15 // pred_region
        %p1328 = scmp.lt.s32.totalorder %s103, 1
        %s1329 = scalar_select %p1328, %s103, 1
        %s1330 = smul.addr %s1329, 8
        %s1331 = scalar_lea.vmem %s9, %s1330
      $region36: #{hierarchical_forward.1} parent=15 // pred_fallthru
        _
      // Predicated region
      $region37: #{hierarchical_forward.1} parent=15 // pred_check
        %p1332 = pneg %p258
      $region38: #{hierarchical_forward.1} parent=15 // pred_check_branch
        %1334 = sbr.rel (%p1332) target = $region40
      $region39: #{hierarchical_forward.1} parent=15 // pred_region
        %p1335 = scmp.lt.s32.totalorder %s104, 1
        %s1336 = scalar_select %p1335, %s104, 1
        %s1337 = smul.addr %s1336, 8
        %s1338 = smul.addr %s1337, 4
        %s1339 = scalar_lea.vmem %s11, %s1338
      $region40: #{hierarchical_forward.1} parent=15 // pred_fallthru
        _
      // Predicated region
      $region41: #{hierarchical_forward.1} parent=15 // pred_check
        %p1340 = pneg %p284
      $region42: #{hierarchical_forward.1} parent=15 // pred_check_branch
        %1342 = sbr.rel (%p1340) target = $region44
      $region43: #{hierarchical_forward.1} parent=15 // pred_region
        %p1343 = scmp.lt.s32.totalorder %s104, 1
        %s1344 = scalar_select %p1343, %s104, 1
        %s1345 = smul.addr %s1344, 4
        %s1346 = smul.addr %s1345, 8
        %s1347 = scalar_lea.vmem %s13, %s1346
      $region44: #{hierarchical_forward.1} parent=15 // pred_fallthru
        _
      // Predicated region
      $region45: #{hierarchical_forward.1} parent=15 // pred_check
        %p1348 = pneg %p310
      $region46: #{hierarchical_forward.1} parent=15 // pred_check_branch
        %1350 = sbr.rel (%p1348) target = $region48
      $region47: #{hierarchical_forward.1} parent=15 // pred_region
        %p1351 = scmp.lt.s32.totalorder %s104, 1
        %s1352 = scalar_select %p1351, %s104, 1
        %s1353 = smul.addr %s1352, 4
        %s1354 = smul.addr %s1353, 8
        %s1355 = scalar_lea.vmem %s15, %s1354
      $region48: #{hierarchical_forward.1} parent=15 // pred_fallthru
        _
      // Predicated region
      $region49: #{hierarchical_forward.1} parent=15 // pred_check
        %p1356 = pneg %p336
      $region50: #{hierarchical_forward.1} parent=15 // pred_check_branch
        %1358 = sbr.rel (%p1356) target = $region52
      $region51: #{hierarchical_forward.1} parent=15 // pred_region
        %p1359 = scmp.lt.s32.totalorder %s104, 1
        %s1360 = scalar_select %p1359, %s104, 1
        %s1361 = smul.addr %s1360, 4
        %s1362 = smul.addr %s1361, 4
        %s1363 = scalar_lea.vmem %s17, %s1362
      $region52: #{hierarchical_forward.1} parent=15 // pred_fallthru
        _
      // Predicated region
      $region53: #{hierarchical_forward.1} parent=15 // pred_check
        %p1364 = pneg %p362
      $region54: #{hierarchical_forward.1} parent=15 // pred_check_branch
        %1366 = sbr.rel (%p1364) target = $region56
      $region55: #{hierarchical_forward.1} parent=15 // pred_region
        %p1367 = scmp.lt.s32.totalorder %s104, 1
        %s1368 = scalar_select %p1367, %s104, 1
        %s1369 = smul.addr %s1368, 4
        %s1370 = smul.addr %s1369, 8
        %s1371 = scalar_lea.vmem %s19, %s1370
      $region56: #{hierarchical_forward.1} parent=15 // pred_fallthru
        _
      // Predicated region
      $region57: #{hierarchical_forward.1} parent=15 // pred_check
        %p1372 = pneg %p388
      $region58: #{hierarchical_forward.1} parent=15 // pred_check_branch
        %1374 = sbr.rel (%p1372) target = $region60
      $region59: #{hierarchical_forward.1} parent=15 // pred_region
        %p1375 = scmp.lt.s32.totalorder %s104, 1
        %s1376 = scalar_select %p1375, %s104, 1
        %s1377 = smul.addr %s1376, 2
        %s1378 = scalar_lea.vmem %s21, %s1377
      $region60: #{hierarchical_forward.1} parent=15 // pred_fallthru
        _
      // Predicated region
      $region61: #{hierarchical_forward.1} parent=15 // pred_check
        %p1379 = pneg %p414
      $region62: #{hierarchical_forward.1} parent=15 // pred_check_branch
        %1381 = sbr.rel (%p1379) target = $region64
      $region63: #{hierarchical_forward.1} parent=15 // pred_region
        %p1382 = scmp.lt.s32.totalorder %s104, 1
        %s1383 = scalar_select %p1382, %s104, 1
        %s1384 = smul.addr %s1383, 4
        %s1385 = scalar_lea.vmem %s23, %s1384
      $region64: #{hierarchical_forward.1} parent=15 // pred_fallthru
        _
      // Predicated region
      $region65: #{hierarchical_forward.1} parent=15 // pred_check
        %p1386 = pneg %p440
      $region66: #{hierarchical_forward.1} parent=15 // pred_check_branch
        %1388 = sbr.rel (%p1386) target = $region68
      $region67: #{hierarchical_forward.1} parent=15 // pred_region
        %p1389 = scmp.lt.s32.totalorder %s104, 1
        %s1390 = scalar_select %p1389, %s104, 1
        %s1391 = smul.addr %s1390, 4
        %s1392 = smul.addr %s1391, 4
        %s1393 = scalar_lea.vmem %s25, %s1392
      $region68: #{hierarchical_forward.1} parent=15 // pred_fallthru
        _
      // Predicated region
      $region69: #{hierarchical_forward.1} parent=15 // pred_check
        %p1394 = pneg %p466
      $region70: #{hierarchical_forward.1} parent=15 // pred_check_branch
        %1396 = sbr.rel (%p1394) target = $region72
      $region71: #{hierarchical_forward.1} parent=15 // pred_region
        %p1397 = scmp.lt.s32.totalorder %s104, 1
        %s1398 = scalar_select %p1397, %s104, 1
        %s1399 = smul.addr %s1398, 4
        %s1400 = smul.addr %s1399, 8
        %s1401 = scalar_lea.vmem %s27, %s1400
      $region72: #{hierarchical_forward.1} parent=15 // pred_fallthru
        _
      // Predicated region
      $region73: #{hierarchical_forward.1} parent=15 // pred_check
        %p1402 = pneg %p492
      $region74: #{hierarchical_forward.1} parent=15 // pred_check_branch
        %1404 = sbr.rel (%p1402) target = $region76
      $region75: #{hierarchical_forward.1} parent=15 // pred_region
        %p1405 = scmp.lt.s32.totalorder %s104, 1
        %s1406 = scalar_select %p1405, %s104, 1
        %s1407 = smul.addr %s1406, 4
        %s1408 = smul.addr %s1407, 4
        %s1409 = scalar_lea.vmem %s29, %s1408
      $region76: #{hierarchical_forward.1} parent=15 // pred_fallthru
        _
      // Predicated region
      $region77: #{hierarchical_forward.1} parent=15 // pred_check
        %p1410 = pneg %p518
      $region78: #{hierarchical_forward.1} parent=15 // pred_check_branch
        %1412 = sbr.rel (%p1410) target = $region80
      $region79: #{hierarchical_forward.1} parent=15 // pred_region
        %p1413 = scmp.lt.s32.totalorder %s104, 1
        %s1414 = scalar_select %p1413, %s104, 1
        %s1415 = smul.addr %s1414, 4
        %s1416 = smul.addr %s1415, 8
        %s1417 = scalar_lea.vmem %s31, %s1416
      $region80: #{hierarchical_forward.1} parent=15 // pred_fallthru
        _
      // Predicated region
      $region81: #{hierarchical_forward.1} parent=15 // pred_check
        %p1418 = pneg %p544
      $region82: #{hierarchical_forward.1} parent=15 // pred_check_branch
        %1420 = sbr.rel (%p1418) target = $region84
      $region83: #{hierarchical_forward.1} parent=15 // pred_region
        %p1421 = scmp.lt.s32.totalorder %s104, 1
        %s1422 = scalar_select %p1421, %s104, 1
        %s1423 = smul.addr %s1422, 4
        %s1424 = smul.addr %s1423, 4
        %s1425 = scalar_lea.vmem %s33, %s1424
      $region84: #{hierarchical_forward.1} parent=15 // pred_fallthru
        _
      // Predicated region
      $region85: #{hierarchical_forward.1} parent=15 // pred_check
        %p1426 = pneg %p570
      $region86: #{hierarchical_forward.1} parent=15 // pred_check_branch
        %1428 = sbr.rel (%p1426) target = $region88
      $region87: #{hierarchical_forward.1} parent=15 // pred_region
        %p1429 = scmp.lt.s32.totalorder %s104, 1
        %s1430 = scalar_select %p1429, %s104, 1
        %s1431 = smul.addr %s1430, 4
        %s1432 = smul.addr %s1431, 4
        %s1433 = scalar_lea.vmem %s35, %s1432
      $region88: #{hierarchical_forward.1} parent=15 // pred_fallthru
        _
      // Predicated region
      $region89: #{hierarchical_forward.1} parent=15 // pred_check
        %p1434 = pneg %p596
      $region90: #{hierarchical_forward.1} parent=15 // pred_check_branch
        %1436 = sbr.rel (%p1434) target = $region92
      $region91: #{hierarchical_forward.1} parent=15 // pred_region
        %p1437 = scmp.lt.s32.totalorder %s104, 1
        %s1438 = scalar_select %p1437, %s104, 1
        %s1439 = smul.addr %s1438, 4
        %s1440 = smul.addr %s1439, 8
        %s1441 = scalar_lea.vmem %s37, %s1440
      $region92: #{hierarchical_forward.1} parent=15 // pred_fallthru
        _
      // Predicated region
      $region93: #{hierarchical_forward.1} parent=15 // pred_check
        %p1442 = pneg %p622
      $region94: #{hierarchical_forward.1} parent=15 // pred_check_branch
        %1444 = sbr.rel (%p1442) target = $region96
      $region95: #{hierarchical_forward.1} parent=15 // pred_region
        %p1445 = scmp.lt.s32.totalorder %s104, 1
        %s1446 = scalar_select %p1445, %s104, 1
        %s1447 = smul.addr %s1446, 4
        %s1448 = smul.addr %s1447, 4
        %s1449 = scalar_lea.vmem %s39, %s1448
      $region96: #{hierarchical_forward.1} parent=15 // pred_fallthru
        _
      // Predicated region
      $region97: #{hierarchical_forward.1} parent=15 // pred_check
        %p1450 = pneg %p648
      $region98: #{hierarchical_forward.1} parent=15 // pred_check_branch
        %1452 = sbr.rel (%p1450) target = $region100
      $region99: #{hierarchical_forward.1} parent=15 // pred_region
        %p1453 = scmp.lt.s32.totalorder %s104, 1
        %s1454 = scalar_select %p1453, %s104, 1
        %s1455 = smul.addr %s1454, 4
        %s1456 = smul.addr %s1455, 8
        %s1457 = scalar_lea.vmem %s41, %s1456
      $region100: #{hierarchical_forward.1} parent=15 // pred_fallthru
        _
      // Predicated region
      $region101: #{hierarchical_forward.1} parent=15 // pred_check
        %p1458 = pneg %p674
      $region102: #{hierarchical_forward.1} parent=15 // pred_check_branch
        %1460 = sbr.rel (%p1458) target = $region104
      $region103: #{hierarchical_forward.1} parent=15 // pred_region
        %p1461 = scmp.lt.s32.totalorder %s104, 1
        %s1462 = scalar_select %p1461, %s104, 1
        %s1463 = smul.addr %s1462, 4
        %s1464 = smul.addr %s1463, 4
        %s1465 = scalar_lea.vmem %s43, %s1464
      $region104: #{hierarchical_forward.1} parent=15 // pred_fallthru
        _
      // Predicated region
      $region105: #{hierarchical_forward.1} parent=15 // pred_check
        %p1466 = pneg %p700
      $region106: #{hierarchical_forward.1} parent=15 // pred_check_branch
        %1468 = sbr.rel (%p1466) target = $region108
      $region107: #{hierarchical_forward.1} parent=15 // pred_region
        %p1469 = scmp.lt.s32.totalorder %s104, 1
        %s1470 = scalar_select %p1469, %s104, 1
        %s1471 = smul.addr %s1470, 4
        %s1472 = smul.addr %s1471, 8
        %s1473 = scalar_lea.vmem %s45, %s1472
      $region108: #{hierarchical_forward.1} parent=15 // pred_fallthru
        _
      // Predicated region
      $region109: #{hierarchical_forward.1} parent=15 // pred_check
        %p1474 = pneg %p726
      $region110: #{hierarchical_forward.1} parent=15 // pred_check_branch
        %1476 = sbr.rel (%p1474) target = $region112
      $region111: #{hierarchical_forward.1} parent=15 // pred_region
        %p1477 = scmp.lt.s32.totalorder %s104, 1
        %s1478 = scalar_select %p1477, %s104, 1
        %s1479 = smul.addr %s1478, 2
        %s1480 = smul.addr %s1479, 4
        %s1481 = scalar_lea.vmem %s47, %s1480
      $region112: #{hierarchical_forward.1} parent=15 // pred_fallthru
        _
      // Predicated region
      $region113: #{hierarchical_forward.1} parent=15 // pred_check
        %p1482 = pneg %p752
      $region114: #{hierarchical_forward.1} parent=15 // pred_check_branch
        %1484 = sbr.rel (%p1482) target = $region116
      $region115: #{hierarchical_forward.1} parent=15 // pred_region
        %p1485 = scmp.lt.s32.totalorder %s104, 1
        %s1486 = scalar_select %p1485, %s104, 1
        %s1487 = smul.addr %s1486, 2
        %s1488 = smul.addr %s1487, 8
        %s1489 = scalar_lea.vmem %s49, %s1488
      $region116: #{hierarchical_forward.1} parent=15 // pred_fallthru
        _
      // Predicated region
      $region117: #{hierarchical_forward.1} parent=15 // pred_check
        %p1490 = pneg %p778
      $region118: #{hierarchical_forward.1} parent=15 // pred_check_branch
        %1492 = sbr.rel (%p1490) target = $region120
      $region119: #{hierarchical_forward.1} parent=15 // pred_region
        %p1493 = scmp.lt.s32.totalorder %s104, 1
        %s1494 = scalar_select %p1493, %s104, 1
        %s1495 = smul.addr %s1494, 4
        %s1496 = smul.addr %s1495, 4
        %s1497 = scalar_lea.vmem %s51, %s1496
      $region120: #{hierarchical_forward.1} parent=15 // pred_fallthru
        _
      // Predicated region
      $region121: #{hierarchical_forward.1} parent=15 // pred_check
        %p1498 = pneg %p804
      $region122: #{hierarchical_forward.1} parent=15 // pred_check_branch
        %1500 = sbr.rel (%p1498) target = $region124
      $region123: #{hierarchical_forward.1} parent=15 // pred_region
        %p1501 = scmp.lt.s32.totalorder %s104, 1
        %s1502 = scalar_select %p1501, %s104, 1
        %s1503 = smul.addr %s1502, 4
        %s1504 = smul.addr %s1503, 8
        %s1505 = scalar_lea.vmem %s53, %s1504
      $region124: #{hierarchical_forward.1} parent=15 // pred_fallthru
        _
      // Predicated region
      $region125: #{hierarchical_forward.1} parent=15 // pred_check
        %p1506 = pneg %p830
      $region126: #{hierarchical_forward.1} parent=15 // pred_check_branch
        %1508 = sbr.rel (%p1506) target = $region128
      $region127: #{hierarchical_forward.1} parent=15 // pred_region
        %p1509 = scmp.lt.s32.totalorder %s104, 1
        %s1510 = scalar_select %p1509, %s104, 1
        %s1511 = smul.addr %s1510, 2
        %s1512 = smul.addr %s1511, 4
        %s1513 = scalar_lea.vmem %s55, %s1512
      $region128: #{hierarchical_forward.1} parent=15 // pred_fallthru
        _
      // Predicated region
      $region129: #{hierarchical_forward.1} parent=15 // pred_check
        %p1514 = pneg %p856
      $region130: #{hierarchical_forward.1} parent=15 // pred_check_branch
        %1516 = sbr.rel (%p1514) target = $region132
      $region131: #{hierarchical_forward.1} parent=15 // pred_region
        %p1517 = scmp.lt.s32.totalorder %s104, 1
        %s1518 = scalar_select %p1517, %s104, 1
        %s1519 = smul.addr %s1518, 2
        %s1520 = smul.addr %s1519, 8
        %s1521 = scalar_lea.vmem %s57, %s1520
      $region132: #{hierarchical_forward.1} parent=15 // pred_fallthru
        _
      // Predicated region
      $region133: #{hierarchical_forward.1} parent=15 // pred_check
        %p1522 = pneg %p882
      $region134: #{hierarchical_forward.1} parent=15 // pred_check_branch
        %1524 = sbr.rel (%p1522) target = $region136
      $region135: #{hierarchical_forward.1} parent=15 // pred_region
        %p1525 = scmp.lt.s32.totalorder %s104, 1
        %s1526 = scalar_select %p1525, %s104, 1
        %s1527 = smul.addr %s1526, 4
        %s1528 = smul.addr %s1527, 4
        %s1529 = scalar_lea.vmem %s59, %s1528
      $region136: #{hierarchical_forward.1} parent=15 // pred_fallthru
        _
      // Predicated region
      $region137: #{hierarchical_forward.1} parent=15 // pred_check
        %p1530 = pneg %p908
      $region138: #{hierarchical_forward.1} parent=15 // pred_check_branch
        %1532 = sbr.rel (%p1530) target = $region140
      $region139: #{hierarchical_forward.1} parent=15 // pred_region
        %p1533 = scmp.lt.s32.totalorder %s104, 1
        %s1534 = scalar_select %p1533, %s104, 1
        %s1535 = smul.addr %s1534, 4
        %s1536 = smul.addr %s1535, 8
        %s1537 = scalar_lea.vmem %s61, %s1536
      $region140: #{hierarchical_forward.1} parent=15 // pred_fallthru
        _
      // Predicated region
      $region141: #{hierarchical_forward.1} parent=15 // pred_check
        %p1538 = pneg %p934
      $region142: #{hierarchical_forward.1} parent=15 // pred_check_branch
        %1540 = sbr.rel (%p1538) target = $region144
      $region143: #{hierarchical_forward.1} parent=15 // pred_region
        %p1541 = scmp.lt.s32.totalorder %s104, 1
        %s1542 = scalar_select %p1541, %s104, 1
        %s1543 = smul.addr %s1542, 4
        %s1544 = smul.addr %s1543, 4
        %s1545 = scalar_lea.vmem %s63, %s1544
      $region144: #{hierarchical_forward.1} parent=15 // pred_fallthru
        _
      // Predicated region
      $region145: #{hierarchical_forward.1} parent=15 // pred_check
        %p1546 = pneg %p960
      $region146: #{hierarchical_forward.1} parent=15 // pred_check_branch
        %1548 = sbr.rel (%p1546) target = $region148
      $region147: #{hierarchical_forward.1} parent=15 // pred_region
        %p1549 = scmp.lt.s32.totalorder %s104, 1
        %s1550 = scalar_select %p1549, %s104, 1
        %s1551 = smul.addr %s1550, 4
        %s1552 = smul.addr %s1551, 8
        %s1553 = scalar_lea.vmem %s65, %s1552
      $region148: #{hierarchical_forward.1} parent=15 // pred_fallthru
        _
      // Predicated region
      $region149: #{hierarchical_forward.1} parent=15 // pred_check
        %p1554 = pneg %p986
      $region150: #{hierarchical_forward.1} parent=15 // pred_check_branch
        %1556 = sbr.rel (%p1554) target = $region152
      $region151: #{hierarchical_forward.1} parent=15 // pred_region
        %p1557 = scmp.lt.s32.totalorder %s104, 1
        %s1558 = scalar_select %p1557, %s104, 1
        %s1559 = smul.addr %s1558, 4
        %s1560 = smul.addr %s1559, 4
        %s1561 = scalar_lea.vmem %s67, %s1560
      $region152: #{hierarchical_forward.1} parent=15 // pred_fallthru
        _
      // Predicated region
      $region153: #{hierarchical_forward.1} parent=15 // pred_check
        %p1562 = pneg %p1012
      $region154: #{hierarchical_forward.1} parent=15 // pred_check_branch
        %1564 = sbr.rel (%p1562) target = $region156
      $region155: #{hierarchical_forward.1} parent=15 // pred_region
        %p1565 = scmp.lt.s32.totalorder %s104, 1
        %s1566 = scalar_select %p1565, %s104, 1
        %s1567 = smul.addr %s1566, 4
        %s1568 = scalar_lea.vmem %s69, %s1567
      $region156: #{hierarchical_forward.1} parent=15 // pred_fallthru
        _
      // Predicated region
      $region157: #{hierarchical_forward.1} parent=15 // pred_check
        %p1569 = pneg %p1038
      $region158: #{hierarchical_forward.1} parent=15 // pred_check_branch
        %1571 = sbr.rel (%p1569) target = $region160
      $region159: #{hierarchical_forward.1} parent=15 // pred_region
        %p1572 = scmp.lt.s32.totalorder %s104, 1
        %s1573 = scalar_select %p1572, %s104, 1
        %s1574 = smul.addr %s1573, 8
        %s1575 = scalar_lea.vmem %s71, %s1574
      $region160: #{hierarchical_forward.1} parent=15 // pred_fallthru
        _
      // Predicated region
      $region161: #{hierarchical_forward.1} parent=15 // pred_check
        %p1576 = pneg %p1064
      $region162: #{hierarchical_forward.1} parent=15 // pred_check_branch
        %1578 = sbr.rel (%p1576) target = $region164
      $region163: #{hierarchical_forward.1} parent=15 // pred_region
        %p1579 = scmp.lt.s32.totalorder %s104, 1
        %s1580 = scalar_select %p1579, %s104, 1
        %s1581 = smul.addr %s1580, 4
        %s1582 = scalar_lea.vmem %s73, %s1581
      $region164: #{hierarchical_forward.1} parent=15 // pred_fallthru
        _
      // Predicated region
      $region165: #{hierarchical_forward.1} parent=15 // pred_check
        %p1583 = pneg %p1090
      $region166: #{hierarchical_forward.1} parent=15 // pred_check_branch
        %1585 = sbr.rel (%p1583) target = $region168
      $region167: #{hierarchical_forward.1} parent=15 // pred_region
        %p1586 = scmp.lt.s32.totalorder %s104, 1
        %s1587 = scalar_select %p1586, %s104, 1
        %s1588 = smul.addr %s1587, 8
        %s1589 = scalar_lea.vmem %s75, %s1588
      $region168: #{hierarchical_forward.1} parent=15 // pred_fallthru
        _
      // Predicated region
      $region169: #{hierarchical_forward.1} parent=15 // pred_check
        %p1590 = pneg %p1116
      $region170: #{hierarchical_forward.1} parent=15 // pred_check_branch
        %1592 = sbr.rel (%p1590) target = $region172
      $region171: #{hierarchical_forward.1} parent=15 // pred_region
        %p1593 = scmp.lt.s32.totalorder %s104, 1
        %s1594 = scalar_select %p1593, %s104, 1
        %s1595 = smul.addr %s1594, 4
        %s1596 = smul.addr %s1595, 4
        %s1597 = scalar_lea.vmem %s77, %s1596
      $region172: #{hierarchical_forward.1} parent=15 // pred_fallthru
        _
      // Predicated region
      $region173: #{hierarchical_forward.1} parent=15 // pred_check
        %p1598 = pneg %p1142
      $region174: #{hierarchical_forward.1} parent=15 // pred_check_branch
        %1600 = sbr.rel (%p1598) target = $region176
      $region175: #{hierarchical_forward.1} parent=15 // pred_region
        %p1601 = scmp.lt.s32.totalorder %s104, 1
        %s1602 = scalar_select %p1601, %s104, 1
        %s1603 = smul.addr %s1602, 4
        %s1604 = smul.addr %s1603, 8
        %s1605 = scalar_lea.vmem %s79, %s1604
      $region176: #{hierarchical_forward.1} parent=15 // pred_fallthru
        _
      // Predicated region
      $region177: #{hierarchical_forward.1} parent=15 // pred_check
        %p1606 = pneg %p1168
      $region178: #{hierarchical_forward.1} parent=15 // pred_check_branch
        %1608 = sbr.rel (%p1606) target = $region180
      $region179: #{hierarchical_forward.1} parent=15 // pred_region
        %p1609 = scmp.lt.s32.totalorder %s104, 1
        %s1610 = scalar_select %p1609, %s104, 1
        %s1611 = smul.addr %s1610, 4
        %s1612 = smul.addr %s1611, 4
        %s1613 = scalar_lea.vmem %s81, %s1612
      $region180: #{hierarchical_forward.1} parent=15 // pred_fallthru
        _
      // Predicated region
      $region181: #{hierarchical_forward.1} parent=15 // pred_check
        %p1614 = pneg %p1194
      $region182: #{hierarchical_forward.1} parent=15 // pred_check_branch
        %1616 = sbr.rel (%p1614) target = $region184
      $region183: #{hierarchical_forward.1} parent=15 // pred_region
        %p1617 = scmp.lt.s32.totalorder %s104, 1
        %s1618 = scalar_select %p1617, %s104, 1
        %s1619 = smul.addr %s1618, 4
        %s1620 = smul.addr %s1619, 8
        %s1621 = scalar_lea.vmem %s83, %s1620
      $region184: #{hierarchical_forward.1} parent=15 // pred_fallthru
        _
      // Predicated region
      $region185: #{hierarchical_forward.1} parent=15 // pred_check
        %p1622 = pneg %p1220
      $region186: #{hierarchical_forward.1} parent=15 // pred_check_branch
        %1624 = sbr.rel (%p1622) target = $region188
      $region187: #{hierarchical_forward.1} parent=15 // pred_region
        %p1625 = scmp.lt.s32.totalorder %s104, 1
        %s1626 = scalar_select %p1625, %s104, 1
        %s1627 = smul.addr %s1626, 4
        %s1628 = scalar_lea.vmem %s85, %s1627
      $region188: #{hierarchical_forward.1} parent=15 // pred_fallthru
        _
    $region16: #{hierarchical_forward.1} parent=5 // pred_fallthru
      _
    %p1629 = scmp.le.s32.totalorder 1, %s96
    %p1630 = scmp.lt.s32.totalorder %s96, 5
    %p1631 = pnand %p1629, %p1630
    %p1632 = pneg %p1631
    // Predicated region
    $region189: #{hierarchical_forward.1} parent=5 // pred_check
      _
    $region190: #{hierarchical_forward.1} parent=5 // pred_check_branch
      %1634 = sbr.rel (%p1631) target = $region192
    $region191: #{hierarchical_forward.1} parent=5 // pred_region
      %s1635 = ssub.s32 %s96, 1
      %p1636 = scmp.lt.s32.totalorder %s105, 1
      %s1637 = scalar_select %p1636, %s105, 1
      %s1638 = smul.addr %s1637, 8
      %s1639 = scalar_lea.vmem %s1, %s1638
      %p1640 = pneg %p134
      %p1641 = pneg %p131
      %p1642 = scmp.lt.s32.totalorder %s105, 1
      %s1643 = scalar_select %p1642, %s105, 1
      %s1644 = smul.addr %s1643, 8
      %s1645 = scalar_lea.vmem %s3, %s1644
      %p1646 = pneg %p160
      %p1647 = pneg %p157
      %p1648 = scmp.lt.s32.totalorder %s105, 1
      %s1649 = scalar_select %p1648, %s105, 1
      %s1650 = smul.addr %s1649, 4
      %s1651 = scalar_lea.vmem %s5, %s1650
      %p1652 = pneg %p186
      %p1653 = pneg %p183
      %p1654 = scmp.lt.s32.totalorder %s105, 1
      %s1655 = scalar_select %p1654, %s105, 1
      %s1656 = smul.addr %s1655, 4
      %s1657 = scalar_lea.vmem %s7, %s1656
      %p1658 = pneg %p212
      %p1659 = pneg %p209
      %p1660 = scmp.lt.s32.totalorder %s105, 1
      %s1661 = scalar_select %p1660, %s105, 1
      %s1662 = smul.addr %s1661, 8
      %s1663 = scalar_lea.vmem %s9, %s1662
      %p1664 = pneg %p238
      %p1665 = pneg %p235
      %p1666 = scmp.lt.s32.totalorder %s106, 1
      %s1667 = scalar_select %p1666, %s106, 1
      %s1668 = smul.addr %s1667, 8
      %s1669 = smul.addr %s1668, 4
      %s1670 = scalar_lea.vmem %s11, %s1669
      %p1671 = pneg %p264
      %p1672 = pneg %p261
      %p1673 = scmp.lt.s32.totalorder %s106, 1
      %s1674 = scalar_select %p1673, %s106, 1
      %s1675 = smul.addr %s1674, 4
      %s1676 = smul.addr %s1675, 8
      %s1677 = scalar_lea.vmem %s13, %s1676
      %p1678 = pneg %p290
      %p1679 = pneg %p287
      %p1680 = scmp.lt.s32.totalorder %s106, 1
      %s1681 = scalar_select %p1680, %s106, 1
      %s1682 = smul.addr %s1681, 4
      %s1683 = smul.addr %s1682, 8
      %s1684 = scalar_lea.vmem %s15, %s1683
      %p1685 = pneg %p316
      %p1686 = pneg %p313
      %p1687 = scmp.lt.s32.totalorder %s106, 1
      %s1688 = scalar_select %p1687, %s106, 1
      %s1689 = smul.addr %s1688, 4
      %s1690 = smul.addr %s1689, 4
      %s1691 = scalar_lea.vmem %s17, %s1690
      %p1692 = pneg %p342
      %p1693 = pneg %p339
      %p1694 = scmp.lt.s32.totalorder %s106, 1
      %s1695 = scalar_select %p1694, %s106, 1
      %s1696 = smul.addr %s1695, 4
      %s1697 = smul.addr %s1696, 8
      %s1698 = scalar_lea.vmem %s19, %s1697
      %p1699 = pneg %p368
      %p1700 = pneg %p365
      %p1701 = scmp.lt.s32.totalorder %s106, 1
      %s1702 = scalar_select %p1701, %s106, 1
      %s1703 = smul.addr %s1702, 2
      %s1704 = scalar_lea.vmem %s21, %s1703
      %p1705 = pneg %p394
      %p1706 = pneg %p391
      %p1707 = scmp.lt.s32.totalorder %s106, 1
      %s1708 = scalar_select %p1707, %s106, 1
      %s1709 = smul.addr %s1708, 4
      %s1710 = scalar_lea.vmem %s23, %s1709
      %p1711 = pneg %p420
      %p1712 = pneg %p417
      %p1713 = scmp.lt.s32.totalorder %s106, 1
      %s1714 = scalar_select %p1713, %s106, 1
      %s1715 = smul.addr %s1714, 4
      %s1716 = smul.addr %s1715, 4
      %s1717 = scalar_lea.vmem %s25, %s1716
      %p1718 = pneg %p446
      %p1719 = pneg %p443
      %p1720 = scmp.lt.s32.totalorder %s106, 1
      %s1721 = scalar_select %p1720, %s106, 1
      %s1722 = smul.addr %s1721, 4
      %s1723 = smul.addr %s1722, 8
      %s1724 = scalar_lea.vmem %s27, %s1723
      %p1725 = pneg %p472
      %p1726 = pneg %p469
      %p1727 = scmp.lt.s32.totalorder %s106, 1
      %s1728 = scalar_select %p1727, %s106, 1
      %s1729 = smul.addr %s1728, 4
      %s1730 = smul.addr %s1729, 4
      %s1731 = scalar_lea.vmem %s29, %s1730
      %p1732 = pneg %p498
      %p1733 = pneg %p495
      %p1734 = scmp.lt.s32.totalorder %s106, 1
      %s1735 = scalar_select %p1734, %s106, 1
      %s1736 = smul.addr %s1735, 4
      %s1737 = smul.addr %s1736, 8
      %s1738 = scalar_lea.vmem %s31, %s1737
      %p1739 = pneg %p524
      %p1740 = pneg %p521
      %p1741 = scmp.lt.s32.totalorder %s106, 1
      %s1742 = scalar_select %p1741, %s106, 1
      %s1743 = smul.addr %s1742, 4
      %s1744 = smul.addr %s1743, 4
      %s1745 = scalar_lea.vmem %s33, %s1744
      %p1746 = pneg %p550
      %p1747 = pneg %p547
      %p1748 = scmp.lt.s32.totalorder %s106, 1
      %s1749 = scalar_select %p1748, %s106, 1
      %s1750 = smul.addr %s1749, 4
      %s1751 = smul.addr %s1750, 4
      %s1752 = scalar_lea.vmem %s35, %s1751
      %p1753 = pneg %p576
      %p1754 = pneg %p573
      %p1755 = scmp.lt.s32.totalorder %s106, 1
      %s1756 = scalar_select %p1755, %s106, 1
      %s1757 = smul.addr %s1756, 4
      %s1758 = smul.addr %s1757, 8
      %s1759 = scalar_lea.vmem %s37, %s1758
      %p1760 = pneg %p602
      %p1761 = pneg %p599
      %p1762 = scmp.lt.s32.totalorder %s106, 1
      %s1763 = scalar_select %p1762, %s106, 1
      %s1764 = smul.addr %s1763, 4
      %s1765 = smul.addr %s1764, 4
      %s1766 = scalar_lea.vmem %s39, %s1765
      %p1767 = pneg %p628
      %p1768 = pneg %p625
      %p1769 = scmp.lt.s32.totalorder %s106, 1
      %s1770 = scalar_select %p1769, %s106, 1
      %s1771 = smul.addr %s1770, 4
      %s1772 = smul.addr %s1771, 8
      %s1773 = scalar_lea.vmem %s41, %s1772
      %p1774 = pneg %p654
      %p1775 = pneg %p651
      %p1776 = scmp.lt.s32.totalorder %s106, 1
      %s1777 = scalar_select %p1776, %s106, 1
      %s1778 = smul.addr %s1777, 4
      %s1779 = smul.addr %s1778, 4
      %s1780 = scalar_lea.vmem %s43, %s1779
      %p1781 = pneg %p680
      %p1782 = pneg %p677
      %p1783 = scmp.lt.s32.totalorder %s106, 1
      %s1784 = scalar_select %p1783, %s106, 1
      %s1785 = smul.addr %s1784, 4
      %s1786 = smul.addr %s1785, 8
      %s1787 = scalar_lea.vmem %s45, %s1786
      %p1788 = pneg %p706
      %p1789 = pneg %p703
      %p1790 = scmp.lt.s32.totalorder %s106, 1
      %s1791 = scalar_select %p1790, %s106, 1
      %s1792 = smul.addr %s1791, 2
      %s1793 = smul.addr %s1792, 4
      %s1794 = scalar_lea.vmem %s47, %s1793
      %p1795 = pneg %p732
      %p1796 = pneg %p729
      %p1797 = scmp.lt.s32.totalorder %s106, 1
      %s1798 = scalar_select %p1797, %s106, 1
      %s1799 = smul.addr %s1798, 2
      %s1800 = smul.addr %s1799, 8
      %s1801 = scalar_lea.vmem %s49, %s1800
      %p1802 = pneg %p758
      %p1803 = pneg %p755
      %p1804 = scmp.lt.s32.totalorder %s106, 1
      %s1805 = scalar_select %p1804, %s106, 1
      %s1806 = smul.addr %s1805, 4
      %s1807 = smul.addr %s1806, 4
      %s1808 = scalar_lea.vmem %s51, %s1807
      %p1809 = pneg %p784
      %p1810 = pneg %p781
      %p1811 = scmp.lt.s32.totalorder %s106, 1
      %s1812 = scalar_select %p1811, %s106, 1
      %s1813 = smul.addr %s1812, 4
      %s1814 = smul.addr %s1813, 8
      %s1815 = scalar_lea.vmem %s53, %s1814
      %p1816 = pneg %p810
      %p1817 = pneg %p807
      %p1818 = scmp.lt.s32.totalorder %s106, 1
      %s1819 = scalar_select %p1818, %s106, 1
      %s1820 = smul.addr %s1819, 2
      %s1821 = smul.addr %s1820, 4
      %s1822 = scalar_lea.vmem %s55, %s1821
      %p1823 = pneg %p836
      %p1824 = pneg %p833
      %p1825 = scmp.lt.s32.totalorder %s106, 1
      %s1826 = scalar_select %p1825, %s106, 1
      %s1827 = smul.addr %s1826, 2
      %s1828 = smul.addr %s1827, 8
      %s1829 = scalar_lea.vmem %s57, %s1828
      %p1830 = pneg %p862
      %p1831 = pneg %p859
      %p1832 = scmp.lt.s32.totalorder %s106, 1
      %s1833 = scalar_select %p1832, %s106, 1
      %s1834 = smul.addr %s1833, 4
      %s1835 = smul.addr %s1834, 4
      %s1836 = scalar_lea.vmem %s59, %s1835
      %p1837 = pneg %p888
      %p1838 = pneg %p885
      %p1839 = scmp.lt.s32.totalorder %s106, 1
      %s1840 = scalar_select %p1839, %s106, 1
      %s1841 = smul.addr %s1840, 4
      %s1842 = smul.addr %s1841, 8
      %s1843 = scalar_lea.vmem %s61, %s1842
      %p1844 = pneg %p914
      %p1845 = pneg %p911
      %p1846 = scmp.lt.s32.totalorder %s106, 1
      %s1847 = scalar_select %p1846, %s106, 1
      %s1848 = smul.addr %s1847, 4
      %s1849 = smul.addr %s1848, 4
      %s1850 = scalar_lea.vmem %s63, %s1849
      %p1851 = pneg %p940
      %p1852 = pneg %p937
      %p1853 = scmp.lt.s32.totalorder %s106, 1
      %s1854 = scalar_select %p1853, %s106, 1
      %s1855 = smul.addr %s1854, 4
      %s1856 = smul.addr %s1855, 8
      %s1857 = scalar_lea.vmem %s65, %s1856
      %p1858 = pneg %p966
      %p1859 = pneg %p963
      %p1860 = scmp.lt.s32.totalorder %s106, 1
      %s1861 = scalar_select %p1860, %s106, 1
      %s1862 = smul.addr %s1861, 4
      %s1863 = smul.addr %s1862, 4
      %s1864 = scalar_lea.vmem %s67, %s1863
      %p1865 = pneg %p992
      %p1866 = pneg %p989
      %p1867 = scmp.lt.s32.totalorder %s106, 1
      %s1868 = scalar_select %p1867, %s106, 1
      %s1869 = smul.addr %s1868, 4
      %s1870 = scalar_lea.vmem %s69, %s1869
      %p1871 = pneg %p1018
      %p1872 = pneg %p1015
      %p1873 = scmp.lt.s32.totalorder %s106, 1
      %s1874 = scalar_select %p1873, %s106, 1
      %s1875 = smul.addr %s1874, 8
      %s1876 = scalar_lea.vmem %s71, %s1875
      %p1877 = pneg %p1044
      %p1878 = pneg %p1041
      %p1879 = scmp.lt.s32.totalorder %s106, 1
      %s1880 = scalar_select %p1879, %s106, 1
      %s1881 = smul.addr %s1880, 4
      %s1882 = scalar_lea.vmem %s73, %s1881
      %p1883 = pneg %p1070
      %p1884 = pneg %p1067
      %p1885 = scmp.lt.s32.totalorder %s106, 1
      %s1886 = scalar_select %p1885, %s106, 1
      %s1887 = smul.addr %s1886, 8
      %s1888 = scalar_lea.vmem %s75, %s1887
      %p1889 = pneg %p1096
      %p1890 = pneg %p1093
      %p1891 = scmp.lt.s32.totalorder %s106, 1
      %s1892 = scalar_select %p1891, %s106, 1
      %s1893 = smul.addr %s1892, 4
      %s1894 = smul.addr %s1893, 4
      %s1895 = scalar_lea.vmem %s77, %s1894
      %p1896 = pneg %p1122
      %p1897 = pneg %p1119
      %p1898 = scmp.lt.s32.totalorder %s106, 1
      %s1899 = scalar_select %p1898, %s106, 1
      %s1900 = smul.addr %s1899, 4
      %s1901 = smul.addr %s1900, 8
      %s1902 = scalar_lea.vmem %s79, %s1901
      %p1903 = pneg %p1148
      %p1904 = pneg %p1145
      %p1905 = scmp.lt.s32.totalorder %s106, 1
      %s1906 = scalar_select %p1905, %s106, 1
      %s1907 = smul.addr %s1906, 4
      %s1908 = smul.addr %s1907, 4
      %s1909 = scalar_lea.vmem %s81, %s1908
      %p1910 = pneg %p1174
      %p1911 = pneg %p1171
      %p1912 = scmp.lt.s32.totalorder %s106, 1
      %s1913 = scalar_select %p1912, %s106, 1
      %s1914 = smul.addr %s1913, 4
      %s1915 = smul.addr %s1914, 8
      %s1916 = scalar_lea.vmem %s83, %s1915
      %p1917 = pneg %p1200
      %p1918 = pneg %p1197
      %p1919 = scmp.lt.s32.totalorder %s106, 1
      %s1920 = scalar_select %p1919, %s106, 1
      %s1921 = smul.addr %s1920, 4
      %s1922 = scalar_lea.vmem %s85, %s1921
      %p1923 = pneg %p1226
      %p1924 = pneg %p1223
      %p1925 = pneg %p1252
      %p1926 = pneg %p1249
      %p1927 = scmp.lt.s32.totalorder %s105, 1
      %s1928 = scalar_select %p1927, %s105, 1
      %s1929 = smul.addr %s1928, 8
      %s1930 = scalar_lea.vmem %s87, %s1929
      %p1931 = pneg %p1278
      %p1932 = pneg %p1275
      %p1933 = scmp.lt.s32.totalorder %s105, 1
      %s1934 = scalar_select %p1933, %s105, 1
      %s1935 = scalar_lea.vmem %s89, %s1934
      %p1936 = scmp.lt.s32.totalorder %s105, 1
      %s1937 = scalar_select %p1936, %s105, 1
      %s1938 = smul.addr %s1937, 8
      %s1939 = scalar_lea.vmem %s1, %s1938
      %p1940 = scmp.lt.s32.totalorder %s105, 1
      %s1941 = scalar_select %p1940, %s105, 1
      %s1942 = smul.addr %s1941, 8
      %s1943 = scalar_lea.vmem %s3, %s1942
      %p1944 = scmp.lt.s32.totalorder %s105, 1
      %s1945 = scalar_select %p1944, %s105, 1
      %s1946 = smul.addr %s1945, 4
      %s1947 = scalar_lea.vmem %s5, %s1946
      %p1948 = scmp.lt.s32.totalorder %s105, 1
      %s1949 = scalar_select %p1948, %s105, 1
      %s1950 = smul.addr %s1949, 4
      %s1951 = scalar_lea.vmem %s7, %s1950
      %p1952 = scmp.lt.s32.totalorder %s105, 1
      %s1953 = scalar_select %p1952, %s105, 1
      %s1954 = smul.addr %s1953, 8
      %s1955 = scalar_lea.vmem %s9, %s1954
      %p1956 = scmp.lt.s32.totalorder %s106, 1
      %s1957 = scalar_select %p1956, %s106, 1
      %s1958 = smul.addr %s1957, 8
      %s1959 = smul.addr %s1958, 4
      %s1960 = scalar_lea.vmem %s11, %s1959
      %p1961 = scmp.lt.s32.totalorder %s106, 1
      %s1962 = scalar_select %p1961, %s106, 1
      %s1963 = smul.addr %s1962, 4
      %s1964 = smul.addr %s1963, 8
      %s1965 = scalar_lea.vmem %s13, %s1964
      %p1966 = scmp.lt.s32.totalorder %s106, 1
      %s1967 = scalar_select %p1966, %s106, 1
      %s1968 = smul.addr %s1967, 4
      %s1969 = smul.addr %s1968, 8
      %s1970 = scalar_lea.vmem %s15, %s1969
      %p1971 = scmp.lt.s32.totalorder %s106, 1
      %s1972 = scalar_select %p1971, %s106, 1
      %s1973 = smul.addr %s1972, 4
      %s1974 = smul.addr %s1973, 4
      %s1975 = scalar_lea.vmem %s17, %s1974
      %p1976 = scmp.lt.s32.totalorder %s106, 1
      %s1977 = scalar_select %p1976, %s106, 1
      %s1978 = smul.addr %s1977, 4
      %s1979 = smul.addr %s1978, 8
      %s1980 = scalar_lea.vmem %s19, %s1979
      %p1981 = scmp.lt.s32.totalorder %s106, 1
      %s1982 = scalar_select %p1981, %s106, 1
      %s1983 = smul.addr %s1982, 2
      %s1984 = scalar_lea.vmem %s21, %s1983
      %p1985 = scmp.lt.s32.totalorder %s106, 1
      %s1986 = scalar_select %p1985, %s106, 1
      %s1987 = smul.addr %s1986, 4
      %s1988 = scalar_lea.vmem %s23, %s1987
      %p1989 = scmp.lt.s32.totalorder %s106, 1
      %s1990 = scalar_select %p1989, %s106, 1
      %s1991 = smul.addr %s1990, 4
      %s1992 = smul.addr %s1991, 4
      %s1993 = scalar_lea.vmem %s25, %s1992
      %p1994 = scmp.lt.s32.totalorder %s106, 1
      %s1995 = scalar_select %p1994, %s106, 1
      %s1996 = smul.addr %s1995, 4
      %s1997 = smul.addr %s1996, 8
      %s1998 = scalar_lea.vmem %s27, %s1997
      %p1999 = scmp.lt.s32.totalorder %s106, 1
      %s2000 = scalar_select %p1999, %s106, 1
      %s2001 = smul.addr %s2000, 4
      %s2002 = smul.addr %s2001, 4
      %s2003 = scalar_lea.vmem %s29, %s2002
      %p2004 = scmp.lt.s32.totalorder %s106, 1
      %s2005 = scalar_select %p2004, %s106, 1
      %s2006 = smul.addr %s2005, 4
      %s2007 = smul.addr %s2006, 8
      %s2008 = scalar_lea.vmem %s31, %s2007
      %p2009 = scmp.lt.s32.totalorder %s106, 1
      %s2010 = scalar_select %p2009, %s106, 1
      %s2011 = smul.addr %s2010, 4
      %s2012 = smul.addr %s2011, 4
      %s2013 = scalar_lea.vmem %s33, %s2012
      %p2014 = scmp.lt.s32.totalorder %s106, 1
      %s2015 = scalar_select %p2014, %s106, 1
      %s2016 = smul.addr %s2015, 4
      %s2017 = smul.addr %s2016, 4
      %s2018 = scalar_lea.vmem %s35, %s2017
      %p2019 = scmp.lt.s32.totalorder %s106, 1
      %s2020 = scalar_select %p2019, %s106, 1
      %s2021 = smul.addr %s2020, 4
      %s2022 = smul.addr %s2021, 8
      %s2023 = scalar_lea.vmem %s37, %s2022
      %p2024 = scmp.lt.s32.totalorder %s106, 1
      %s2025 = scalar_select %p2024, %s106, 1
      %s2026 = smul.addr %s2025, 4
      %s2027 = smul.addr %s2026, 4
      %s2028 = scalar_lea.vmem %s39, %s2027
      %p2029 = scmp.lt.s32.totalorder %s106, 1
      %s2030 = scalar_select %p2029, %s106, 1
      %s2031 = smul.addr %s2030, 4
      %s2032 = smul.addr %s2031, 8
      %s2033 = scalar_lea.vmem %s41, %s2032
      %p2034 = scmp.lt.s32.totalorder %s106, 1
      %s2035 = scalar_select %p2034, %s106, 1
      %s2036 = smul.addr %s2035, 4
      %s2037 = smul.addr %s2036, 4
      %s2038 = scalar_lea.vmem %s43, %s2037
      %p2039 = scmp.lt.s32.totalorder %s106, 1
      %s2040 = scalar_select %p2039, %s106, 1
      %s2041 = smul.addr %s2040, 4
      %s2042 = smul.addr %s2041, 8
      %s2043 = scalar_lea.vmem %s45, %s2042
      %p2044 = scmp.lt.s32.totalorder %s106, 1
      %s2045 = scalar_select %p2044, %s106, 1
      %s2046 = smul.addr %s2045, 2
      %s2047 = smul.addr %s2046, 4
      %s2048 = scalar_lea.vmem %s47, %s2047
      %p2049 = scmp.lt.s32.totalorder %s106, 1
      %s2050 = scalar_select %p2049, %s106, 1
      %s2051 = smul.addr %s2050, 2
      %s2052 = smul.addr %s2051, 8
      %s2053 = scalar_lea.vmem %s49, %s2052
      %p2054 = scmp.lt.s32.totalorder %s106, 1
      %s2055 = scalar_select %p2054, %s106, 1
      %s2056 = smul.addr %s2055, 4
      %s2057 = smul.addr %s2056, 4
      %s2058 = scalar_lea.vmem %s51, %s2057
      %p2059 = scmp.lt.s32.totalorder %s106, 1
      %s2060 = scalar_select %p2059, %s106, 1
      %s2061 = smul.addr %s2060, 4
      %s2062 = smul.addr %s2061, 8
      %s2063 = scalar_lea.vmem %s53, %s2062
      %p2064 = scmp.lt.s32.totalorder %s106, 1
      %s2065 = scalar_select %p2064, %s106, 1
      %s2066 = smul.addr %s2065, 2
      %s2067 = smul.addr %s2066, 4
      %s2068 = scalar_lea.vmem %s55, %s2067
      %p2069 = scmp.lt.s32.totalorder %s106, 1
      %s2070 = scalar_select %p2069, %s106, 1
      %s2071 = smul.addr %s2070, 2
      %s2072 = smul.addr %s2071, 8
      %s2073 = scalar_lea.vmem %s57, %s2072
      %p2074 = scmp.lt.s32.totalorder %s106, 1
      %s2075 = scalar_select %p2074, %s106, 1
      %s2076 = smul.addr %s2075, 4
      %s2077 = smul.addr %s2076, 4
      %s2078 = scalar_lea.vmem %s59, %s2077
      %p2079 = scmp.lt.s32.totalorder %s106, 1
      %s2080 = scalar_select %p2079, %s106, 1
      %s2081 = smul.addr %s2080, 4
      %s2082 = smul.addr %s2081, 8
      %s2083 = scalar_lea.vmem %s61, %s2082
      %p2084 = scmp.lt.s32.totalorder %s106, 1
      %s2085 = scalar_select %p2084, %s106, 1
      %s2086 = smul.addr %s2085, 4
      %s2087 = smul.addr %s2086, 4
      %s2088 = scalar_lea.vmem %s63, %s2087
      %p2089 = scmp.lt.s32.totalorder %s106, 1
      %s2090 = scalar_select %p2089, %s106, 1
      %s2091 = smul.addr %s2090, 4
      %s2092 = smul.addr %s2091, 8
      %s2093 = scalar_lea.vmem %s65, %s2092
      %p2094 = scmp.lt.s32.totalorder %s106, 1
      %s2095 = scalar_select %p2094, %s106, 1
      %s2096 = smul.addr %s2095, 4
      %s2097 = smul.addr %s2096, 4
      %s2098 = scalar_lea.vmem %s67, %s2097
      %p2099 = scmp.lt.s32.totalorder %s106, 1
      %s2100 = scalar_select %p2099, %s106, 1
      %s2101 = smul.addr %s2100, 4
      %s2102 = scalar_lea.vmem %s69, %s2101
      %p2103 = scmp.lt.s32.totalorder %s106, 1
      %s2104 = scalar_select %p2103, %s106, 1
      %s2105 = smul.addr %s2104, 8
      %s2106 = scalar_lea.vmem %s71, %s2105
      %p2107 = scmp.lt.s32.totalorder %s106, 1
      %s2108 = scalar_select %p2107, %s106, 1
      %s2109 = smul.addr %s2108, 4
      %s2110 = scalar_lea.vmem %s73, %s2109
      %p2111 = scmp.lt.s32.totalorder %s106, 1
      %s2112 = scalar_select %p2111, %s106, 1
      %s2113 = smul.addr %s2112, 8
      %s2114 = scalar_lea.vmem %s75, %s2113
      %p2115 = scmp.lt.s32.totalorder %s106, 1
      %s2116 = scalar_select %p2115, %s106, 1
      %s2117 = smul.addr %s2116, 4
      %s2118 = smul.addr %s2117, 4
      %s2119 = scalar_lea.vmem %s77, %s2118
      %p2120 = scmp.lt.s32.totalorder %s106, 1
      %s2121 = scalar_select %p2120, %s106, 1
      %s2122 = smul.addr %s2121, 4
      %s2123 = smul.addr %s2122, 8
      %s2124 = scalar_lea.vmem %s79, %s2123
      %p2125 = scmp.lt.s32.totalorder %s106, 1
      %s2126 = scalar_select %p2125, %s106, 1
      %s2127 = smul.addr %s2126, 4
      %s2128 = smul.addr %s2127, 4
      %s2129 = scalar_lea.vmem %s81, %s2128
      %p2130 = scmp.lt.s32.totalorder %s106, 1
      %s2131 = scalar_select %p2130, %s106, 1
      %s2132 = smul.addr %s2131, 4
      %s2133 = smul.addr %s2132, 8
      %s2134 = scalar_lea.vmem %s83, %s2133
      %p2135 = scmp.lt.s32.totalorder %s106, 1
      %s2136 = scalar_select %p2135, %s106, 1
      %s2137 = smul.addr %s2136, 4
      %s2138 = scalar_lea.vmem %s85, %s2137
      %p2139 = scmp.lt.s32.totalorder %s105, 1
      %s2140 = scalar_select %p2139, %s105, 1
      %s2141 = smul.addr %s2140, 8
      %s2142 = scalar_lea.vmem %s87, %s2141
      %p2143 = scmp.lt.s32.totalorder %s105, 1
      %s2144 = scalar_select %p2143, %s105, 1
      %s2145 = scalar_lea.vmem %s89, %s2144
      %p2147 = scmp.eq.s32.totalorder %s106, 0
      // Predicated region
      $region193: #{hierarchical_forward.1} parent=191 // pred_check
        %p2148 = pneg %p2147
      $region194: #{hierarchical_forward.1} parent=191 // pred_check_branch
        %2150 = sbr.rel (%p2148) target = $region196
      $region195: #{hierarchical_forward.1} parent=191 // pred_region
        %v2151 = vld [vmem:[%s1939] sm:$0xff]
        %vm2152 = vcmask 261120
        %2153 = vst.msk [vmem:[#allocation2] sm:$0xff] %vm2152, %v2151
        %vm2154 = vcmask 0
        %2155 = vst.msk [vmem:[#allocation3] sm:$0x1] %vm2154, 0.0
      $region196: #{hierarchical_forward.1} parent=191 // pred_fallthru
        _
      %v2156 = vld [vmem:[#allocation2] sm:$0xff]
      %v2157 = vld [vmem:[%s1943] sm:$0xff]
      %v2158 = vld [vmem:[%s1960] sm:$0xf]
      %v2159 = vld [vmem:[%s1960 + $0x4] sm:$0xf]
      %v2160 = vld [vmem:[%s1960 + $0x8] sm:$0xf]
      %v2161 = vld [vmem:[%s1960 + $0xc] sm:$0xf]
      %v2162 = vld [vmem:[%s1960 + $0x10] sm:$0xf]
      %v2163 = vld [vmem:[%s1960 + $0x14] sm:$0xf]
      %v2164 = vld [vmem:[%s1960 + $0x18] sm:$0xf]
      %v2165 = vld [vmem:[%s1960 + $0x1c] sm:$0xf]
      %v2166 = vpack.c.bf16 %v2156, %v2156
      %v2175 = vunpack.c.l.b16 %v2158
      %v2176 = vunpack.c.l.b16 %v2159
      %v2177 = vunpack.c.l.b16 %v2160
      %v2178 = vunpack.c.l.b16 %v2161
      %v2179 = vunpack.c.l.b16 %v2162
      %v2180 = vunpack.c.l.b16 %v2163
      %v2181 = vunpack.c.l.b16 %v2164
      %v2182 = vunpack.c.l.b16 %v2165
      %v2183 = vpack.c.b16 %v2176, %v2175
      %v2184 = vpack.c.b16 %v2178, %v2177
      %v2185 = vpack.c.b16 %v2180, %v2179
      %v2186 = vpack.c.b16 %v2182, %v2181
      %vm2187 = vcmask 64512
      %v2189 = vsel %vm2187, %v2183, 0
      %v2192 = vsel %vm2187, %v2184, 0
      %v2195 = vsel %vm2187, %v2185, 0
      %v2198 = vsel %vm2187, %v2186, 0
      %vm2200 = vcmask 1043456
      %v2202 = vsel %vm2200, %v2166, 0
      %2204 = vmatprep.subr.bf16.mxu0 0
      %2205 = vmatpush1.bf16.msra.mxu0 %v2202
      %2206 = vmatprep.subr.bf16.mxu0 0
      %2207 = vmatpush1.bf16.msra.mxu0 0
      %2208 = vmatprep.subr.bf16.mxu0 0
      %2209 = vmatpush1.bf16.msra.mxu0 0
      %2210 = vmatprep.subr.bf16.mxu0 0
      %2211 = vmatpush1.bf16.msra.mxu0 0
      %2212 = vmatprep.subr.bf16.mxu0 0
      %2213 = vmatpush1.bf16.msra.mxu0 0
      %2214 = vmatprep.subr.bf16.mxu0 0
      %2215 = vmatpush1.bf16.msra.mxu0 0
      %2216 = vmatprep.subr.bf16.mxu0 0
      %2217 = vmatpush1.bf16.msra.mxu0 0
      %2218 = vmatprep.subr.bf16.mxu0 0
      %2219 = vmatpush1.bf16.msra.mxu0 0
      %2220 = vmatprep.subr.bf16.mxu0 0
      %2221 = vmatpush1.bf16.msra.mxu0 0
      %2222 = vmatprep.subr.bf16.mxu0 0
      %2223 = vmatpush1.bf16.msra.mxu0 0
      %2224 = vmatprep.subr.bf16.mxu0 0
      %2225 = vmatpush1.bf16.msra.mxu0 0
      %2226 = vmatprep.subr.bf16.mxu0 0
      %2227 = vmatpush1.bf16.msra.mxu0 0
      %2228 = vmatprep.subr.bf16.mxu0 0
      %2229 = vmatpush1.bf16.msra.mxu0 0
      %2230 = vmatprep.subr.bf16.mxu0 0
      %2231 = vmatpush1.bf16.msra.mxu0 0
      %2232 = vmatprep.subr.bf16.mxu0 0
      %2233 = vmatpush1.bf16.msra.mxu0 0
      %2234 = vmatprep.subr.bf16.mxu0 0
      %2235 = vmatpush1.bf16.msra.mxu0 0
      %2236 = vmatprep.mubr.bf16.mxu0 0
      %2237 = vmatmul.mubr.bf16.gmra.mrb[0].mxu0 %v2189
      %v2238 = vpop.f32.mrb[0].mxu0
      %v2239 = vadd.f32 0.0, %v2238
      %v2240 = vpop.f32.mrb[0].mxu0
      %v2241 = vpop.f32.mrb[0].mxu0
      %v2242 = vadd.f32 0.0, %v2241
      %v2243 = vpop.f32.mrb[0].mxu0
      %2244 = vmatprep.mubr.bf16.mxu0 0
      %2245 = vmatmul.mubr.bf16.gmra.mrb[0].mxu0 %v2192
      %v2246 = vpop.f32.mrb[0].mxu0
      %v2247 = vadd.f32 0.0, %v2246
      %v2248 = vpop.f32.mrb[0].mxu0
      %v2249 = vpop.f32.mrb[0].mxu0
      %v2250 = vadd.f32 0.0, %v2249
      %v2251 = vpop.f32.mrb[0].mxu0
      %2252 = vmatprep.mubr.bf16.mxu0 0
      %2253 = vmatmul.mubr.bf16.gmra.mrb[0].mxu0 %v2195
      %v2254 = vpop.f32.mrb[0].mxu0
      %v2255 = vadd.f32 0.0, %v2254
      %v2256 = vpop.f32.mrb[0].mxu0
      %v2257 = vpop.f32.mrb[0].mxu0
      %v2258 = vadd.f32 0.0, %v2257
      %v2259 = vpop.f32.mrb[0].mxu0
      %2260 = vmatprep.mubr.bf16.mxu0 0
      %2261 = vmatmul.mubr.bf16.gmra.mrb[0].mxu0 %v2198
      %v2262 = vpop.f32.mrb[0].mxu0
      %v2263 = vadd.f32 0.0, %v2262
      %v2264 = vpop.f32.mrb[0].mxu0
      %v2265 = vpop.f32.mrb[0].mxu0
      %v2266 = vadd.f32 0.0, %v2265
      %v2267 = vpop.f32.mrb[0].mxu0
      %2268 = vdwg.mxu0
      %v2269 = vld [vmem:[%s1965] sm:$0xff]
      %v2270 = vld [vmem:[%s1965 + $0x8] sm:$0xff]
      %v2271 = vld [vmem:[%s1965 + $0x10] sm:$0xff]
      %v2272 = vld [vmem:[%s1965 + $0x18] sm:$0xff]
      %2274 = vset.pattern.permute.xlu0 0
      %2275 = vperm.xlu0 %2274, %v2269
      %v2276 = vpop.permute.xlu0 %2275
      %2279 = vset.pattern.permute.xlu0 0
      %2280 = vperm.xlu0 %2279, %v2270
      %v2281 = vpop.permute.xlu0 %2280
      %2284 = vset.pattern.permute.xlu0 0
      %2285 = vperm.xlu0 %2284, %v2271
      %v2286 = vpop.permute.xlu0 %2285
      %2289 = vset.pattern.permute.xlu0 0
      %2290 = vperm.xlu0 %2289, %v2272
      %v2291 = vpop.permute.xlu0 %2290
      %v2293 = vadd.f32 %v2239, %v2276
      %v2294 = vadd.f32 %v2242, %v2281
      %v2295 = vadd.f32 %v2247, %v2286
      %v2296 = vadd.f32 %v2250, %v2291
      %v2297 = vmax.f32 %v2293, 0.0
      %v2298 = vmax.f32 %v2294, 0.0
      %v2299 = vmax.f32 %v2295, 0.0
      %v2300 = vmax.f32 %v2296, 0.0
      %v2301 = vld [vmem:[%s1975] sm:$0xf]
      %v2302 = vld [vmem:[%s1975 + $0x4] sm:$0xf]
      %v2303 = vld [vmem:[%s1975 + $0x8] sm:$0xf]
      %v2304 = vld [vmem:[%s1975 + $0xc] sm:$0xf]
      %v2305 = vpack.c.bf16 %v2298, %v2297
      %v2306 = vpack.c.bf16 %v2300, %v2299
      %v2307 = vld [vmem:[%s1980] sm:$0xff]
      %v2308 = vld [vmem:[%s1980 + $0x8] sm:$0xff]
      %v2309 = vld [vmem:[%s1980 + $0x10] sm:$0xff]
      %v2310 = vld [vmem:[%s1980 + $0x18] sm:$0xff]
      %2312 = vset.pattern.permute.xlu0 0
      %2313 = vperm.xlu0 %2312, %v2307
      %v2314 = vpop.permute.xlu0 %2313
      %2317 = vset.pattern.permute.xlu0 0
      %2318 = vperm.xlu0 %2317, %v2308
      %v2319 = vpop.permute.xlu0 %2318
      %2322 = vset.pattern.permute.xlu0 0
      %2323 = vperm.xlu0 %2322, %v2309
      %v2324 = vpop.permute.xlu0 %2323
      %2327 = vset.pattern.permute.xlu0 0
      %2328 = vperm.xlu0 %2327, %v2310
      %v2329 = vpop.permute.xlu0 %2328
      %v2335 = vunpack.c.l.b16 %v2301
      %v2336 = vunpack.c.l.b16 %v2302
      %v2337 = vunpack.c.l.b16 %v2303
      %v2338 = vunpack.c.l.b16 %v2304
      %v2339 = vpack.c.b16 %v2336, %v2335
      %v2340 = vpack.c.b16 %v2338, %v2337
      %vm2341 = vcmask 261120
      %v2343 = vsel %vm2341, %v2339, 0
      %v2346 = vsel %vm2341, %v2340, 0
      %2348 = vmatprep.subr.bf16.mxu0 0
      %2349 = vmatpush1.bf16.msra.mxu0 %v2305
      %2350 = vmatprep.subr.bf16.mxu0 0
      %2351 = vmatpush1.bf16.msra.mxu0 %v2306
      %2352 = vmatprep.subr.bf16.mxu0 0
      %2353 = vmatpush1.bf16.msra.mxu0 0
      %2354 = vmatprep.subr.bf16.mxu0 0
      %2355 = vmatpush1.bf16.msra.mxu0 0
      %2356 = vmatprep.subr.bf16.mxu0 0
      %2357 = vmatpush1.bf16.msra.mxu0 0
      %2358 = vmatprep.subr.bf16.mxu0 0
      %2359 = vmatpush1.bf16.msra.mxu0 0
      %2360 = vmatprep.subr.bf16.mxu0 0
      %2361 = vmatpush1.bf16.msra.mxu0 0
      %2362 = vmatprep.subr.bf16.mxu0 0
      %2363 = vmatpush1.bf16.msra.mxu0 0
      %2364 = vmatprep.subr.bf16.mxu0 0
      %2365 = vmatpush1.bf16.msra.mxu0 0
      %2366 = vmatprep.subr.bf16.mxu0 0
      %2367 = vmatpush1.bf16.msra.mxu0 0
      %2368 = vmatprep.subr.bf16.mxu0 0
      %2369 = vmatpush1.bf16.msra.mxu0 0
      %2370 = vmatprep.subr.bf16.mxu0 0
      %2371 = vmatpush1.bf16.msra.mxu0 0
      %2372 = vmatprep.subr.bf16.mxu0 0
      %2373 = vmatpush1.bf16.msra.mxu0 0
      %2374 = vmatprep.subr.bf16.mxu0 0
      %2375 = vmatpush1.bf16.msra.mxu0 0
      %2376 = vmatprep.subr.bf16.mxu0 0
      %2377 = vmatpush1.bf16.msra.mxu0 0
      %2378 = vmatprep.subr.bf16.mxu0 0
      %2379 = vmatpush1.bf16.msra.mxu0 0
      %2380 = vmatprep.mubr.bf16.mxu0 0
      %2381 = vmatmul.mubr.bf16.gmra.mrb[0].mxu0 %v2343
      %v2382 = vpop.f32.mrb[0].mxu0
      %v2383 = vadd.f32 %v2314, %v2382
      %v2384 = vpop.f32.mrb[0].mxu0
      %v2385 = vpop.f32.mrb[0].mxu0
      %v2386 = vadd.f32 %v2319, %v2385
      %v2387 = vpop.f32.mrb[0].mxu0
      %2388 = vmatprep.mubr.bf16.mxu0 0
      %2389 = vmatmul.mubr.bf16.gmra.mrb[0].mxu0 %v2346
      %v2390 = vpop.f32.mrb[0].mxu0
      %v2391 = vadd.f32 %v2324, %v2390
      %v2392 = vpop.f32.mrb[0].mxu0
      %v2393 = vpop.f32.mrb[0].mxu0
      %v2394 = vadd.f32 %v2329, %v2393
      %v2395 = vpop.f32.mrb[0].mxu0
      %2396 = vdwg.mxu0
      %v2397 = vmax.f32 %v2383, 0.0
      %v2398 = vmax.f32 %v2386, 0.0
      %v2399 = vmax.f32 %v2391, 0.0
      %v2400 = vmax.f32 %v2394, 0.0
      %v2401 = vld [vmem:[%s1984] sm:$0x3]
      %v2402 = vpack.c.bf16 %v2398, %v2397
      %v2403 = vpack.c.bf16 %v2400, %v2399
      %v2404 = vld [vmem:[%s1988] sm:$0xf]
      %2406 = vset.pattern.permute.xlu0 0
      %2407 = vperm.xlu0 %2406, %v2404
      %v2408 = vpop.permute.xlu0 %2407
      %v2411 = vsel %vm2341, %v2401, 0
      %2413 = vmatprep.subr.bf16.mxu0 0
      %2414 = vmatpush1.bf16.msra.mxu0 %v2402
      %2415 = vmatprep.subr.bf16.mxu0 0
      %2416 = vmatpush1.bf16.msra.mxu0 %v2403
      %2417 = vmatprep.subr.bf16.mxu0 0
      %2418 = vmatpush1.bf16.msra.mxu0 0
      %2419 = vmatprep.subr.bf16.mxu0 0
      %2420 = vmatpush1.bf16.msra.mxu0 0
      %2421 = vmatprep.subr.bf16.mxu0 0
      %2422 = vmatpush1.bf16.msra.mxu0 0
      %2423 = vmatprep.subr.bf16.mxu0 0
      %2424 = vmatpush1.bf16.msra.mxu0 0
      %2425 = vmatprep.subr.bf16.mxu0 0
      %2426 = vmatpush1.bf16.msra.mxu0 0
      %2427 = vmatprep.subr.bf16.mxu0 0
      %2428 = vmatpush1.bf16.msra.mxu0 0
      %2429 = vmatprep.subr.bf16.mxu0 0
      %2430 = vmatpush1.bf16.msra.mxu0 0
      %2431 = vmatprep.subr.bf16.mxu0 0
      %2432 = vmatpush1.bf16.msra.mxu0 0
      %2433 = vmatprep.subr.bf16.mxu0 0
      %2434 = vmatpush1.bf16.msra.mxu0 0
      %2435 = vmatprep.subr.bf16.mxu0 0
      %2436 = vmatpush1.bf16.msra.mxu0 0
      %2437 = vmatprep.subr.bf16.mxu0 0
      %2438 = vmatpush1.bf16.msra.mxu0 0
      %2439 = vmatprep.subr.bf16.mxu0 0
      %2440 = vmatpush1.bf16.msra.mxu0 0
      %2441 = vmatprep.subr.bf16.mxu0 0
      %2442 = vmatpush1.bf16.msra.mxu0 0
      %2443 = vmatprep.subr.bf16.mxu0 0
      %2444 = vmatpush1.bf16.msra.mxu0 0
      %2445 = vmatprep.mubr.bf16.mxu0 0
      %2446 = vmatmul.mubr.bf16.gmra.mrb[0].mxu0 %v2411
      %v2447 = vpop.f32.mrb[0].mxu0
      %v2448 = vadd.f32 %v2408, %v2447
      %v2449 = vpop.f32.mrb[0].mxu0
      %v2450 = vpop.f32.mrb[0].mxu0
      %v2451 = vpop.f32.mrb[0].mxu0
      %2452 = vdwg.mxu0
      %v2453 = vxor.u32 %v2448, 2147483648
      %v2454 = vmul.f32 %v2453, 1.442695
      %v2455 = vpow.pop %v2454
      %v2456 = vadd.f32 %v2455, 1.0
      %v2457 = vrcp.pop %v2456
      %v2458 = vmul.f32 1.0, %v2457
      %v2459 = vmax.f32 %v2448, 0.0
      %v2460 = vld [vmem:[%s1951] sm:$0xf]
      %v2462 = vrot.slane %v2460, 5
      %v2464 = vmul.f32 %v2459, %v2462
      %v2465 = vsub.f32 0.0, %v2464
      %v2466 = vmul.f32 %v2465, 1.442695
      %v2467 = vpow.pop %v2466
      %v2468 = vsub.f32 1.0, %v2467
      %v2469 = vlaneseq
      %v2470 = vshrl.u32 %v2469, 7
      %v2471 = vsub.s32 3, %v2470
      %v2472 = vrot.slane %v2468, %v2471
      %v2473 = vmul.f32 %v2458, %v2472
      %v2474 = vadd.f32 %v2473, 0.0
      %v2475 = vadd.f32 %v2464, 0.0
      %v2476 = vrot.slane %v2460, 6
      %2477 = vrot.lane.b32.xlu0 %v2476, 8
      %v2478 = vpop.permute.xlu0 %2477
      %v2480 = vmul.f32 %v2459, %v2478
      %v2481 = vsub.f32 0.0, %v2475
      %v2482 = vmul.f32 %v2481, 1.442695
      %v2483 = vpow.pop %v2482
      %v2484 = vsub.f32 0.0, %v2480
      %v2485 = vmul.f32 %v2484, 1.442695
      %v2486 = vpow.pop %v2485
      %v2487 = vsub.f32 1.0, %v2486
      %2489 = vrot.lane.b32.xlu0 %v2487, 120
      %v2490 = vpop.permute.xlu0 %2489
      %v2492 = vmul.f32 %v2483, %v2490
      %v2493 = vlaneseq
      %v2494 = vshrl.u32 %v2493, 7
      %v2495 = vsub.s32 3, %v2494
      %v2496 = vrot.slane %v2492, %v2495
      %2498 = vrot.lane.b32.xlu0 %v2496, 8
      %v2499 = vpop.permute.xlu0 %2498
      %v2501 = vmul.f32 %v2458, %v2499
      %2503 = vrot.lane.b32.xlu0 %v2501, 120
      %v2504 = vpop.permute.xlu0 %2503
      %v2506 = vadd.f32 %v2474, %v2504
      %2508 = vrot.lane.b32.xlu0 %v2480, 120
      %v2509 = vpop.permute.xlu0 %2508
      %v2511 = vadd.f32 %v2475, %v2509
      %v2512 = vrot.slane %v2460, 7
      %2513 = vrot.lane.b32.xlu0 %v2512, 16
      %v2514 = vpop.permute.xlu0 %2513
      %v2516 = vmul.f32 %v2459, %v2514
      %v2517 = vsub.f32 0.0, %v2511
      %v2518 = vmul.f32 %v2517, 1.442695
      %v2519 = vpow.pop %v2518
      %v2520 = vsub.f32 0.0, %v2516
      %v2521 = vmul.f32 %v2520, 1.442695
      %v2522 = vpow.pop %v2521
      %v2523 = vsub.f32 1.0, %v2522
      %2525 = vrot.lane.b32.xlu0 %v2523, 112
      %v2526 = vpop.permute.xlu0 %2525
      %v2528 = vmul.f32 %v2519, %v2526
      %v2529 = vlaneseq
      %v2530 = vshrl.u32 %v2529, 7
      %v2531 = vsub.s32 3, %v2530
      %v2532 = vrot.slane %v2528, %v2531
      %2534 = vrot.lane.b32.xlu0 %v2532, 16
      %v2535 = vpop.permute.xlu0 %2534
      %v2537 = vmul.f32 %v2458, %v2535
      %2539 = vrot.lane.b32.xlu0 %v2537, 112
      %v2540 = vpop.permute.xlu0 %2539
      %v2542 = vadd.f32 %v2506, %v2540
      %2544 = vrot.lane.b32.xlu0 %v2516, 112
      %v2545 = vpop.permute.xlu0 %2544
      %v2547 = vadd.f32 %v2511, %v2545
      %2548 = vrot.lane.b32.xlu0 %v2460, 24
      %v2549 = vpop.permute.xlu0 %2548
      %v2551 = vmul.f32 %v2459, %v2549
      %v2552 = vsub.f32 0.0, %v2547
      %v2553 = vmul.f32 %v2552, 1.442695
      %v2554 = vpow.pop %v2553
      %v2555 = vsub.f32 0.0, %v2551
      %v2556 = vmul.f32 %v2555, 1.442695
      %v2557 = vpow.pop %v2556
      %v2558 = vsub.f32 1.0, %v2557
      %2560 = vrot.lane.b32.xlu0 %v2558, 104
      %v2561 = vpop.permute.xlu0 %2560
      %v2563 = vmul.f32 %v2554, %v2561
      %v2564 = vlaneseq
      %v2565 = vshrl.u32 %v2564, 7
      %v2566 = vsub.s32 3, %v2565
      %v2567 = vrot.slane %v2563, %v2566
      %2569 = vrot.lane.b32.xlu0 %v2567, 24
      %v2570 = vpop.permute.xlu0 %2569
      %v2572 = vmul.f32 %v2458, %v2570
      %2574 = vrot.lane.b32.xlu0 %v2572, 104
      %v2575 = vpop.permute.xlu0 %2574
      %v2577 = vadd.f32 %v2542, %v2575
      %v2578 = vld [vmem:[%s1993] sm:$0xf]
      %v2579 = vld [vmem:[%s1993 + $0x4] sm:$0xf]
      %v2580 = vld [vmem:[%s1993 + $0x8] sm:$0xf]
      %v2581 = vld [vmem:[%s1993 + $0xc] sm:$0xf]
      %v2582 = vpack.c.bf16 %v2577, %v2577
      %v2583 = vld [vmem:[%s1998] sm:$0xff]
      %v2584 = vld [vmem:[%s1998 + $0x8] sm:$0xff]
      %v2585 = vld [vmem:[%s1998 + $0x10] sm:$0xff]
      %v2586 = vld [vmem:[%s1998 + $0x18] sm:$0xff]
      %2588 = vset.pattern.permute.xlu0 0
      %2589 = vperm.xlu0 %2588, %v2583
      %v2590 = vpop.permute.xlu0 %2589
      %2593 = vset.pattern.permute.xlu0 0
      %2594 = vperm.xlu0 %2593, %v2584
      %v2595 = vpop.permute.xlu0 %2594
      %2598 = vset.pattern.permute.xlu0 0
      %2599 = vperm.xlu0 %2598, %v2585
      %v2600 = vpop.permute.xlu0 %2599
      %2603 = vset.pattern.permute.xlu0 0
      %2604 = vperm.xlu0 %2603, %v2586
      %v2605 = vpop.permute.xlu0 %2604
      %v2611 = vunpack.c.l.b16 %v2578
      %v2612 = vunpack.c.l.b16 %v2579
      %v2613 = vunpack.c.l.b16 %v2580
      %v2614 = vunpack.c.l.b16 %v2581
      %v2615 = vpack.c.b16 %v2612, %v2611
      %v2616 = vpack.c.b16 %v2614, %v2613
      %vm2617 = vcmask 23552
      %v2619 = vsel %vm2617, %v2615, 0
      %v2622 = vsel %vm2617, %v2616, 0
      %vm2624 = vcmask 1040384
      %vm2625 = vcmask 1041408
      %v2626 = vsel %vm2624, 4294967295, 65535
      %v2627 = vsel %vm2625, %v2626, 0
      %v2629 = vand.u32 %v2582, %v2627
      %2631 = vmatprep.subr.bf16.mxu0 0
      %2632 = vmatpush1.bf16.msra.mxu0 %v2629
      %2633 = vmatprep.subr.bf16.mxu0 0
      %2634 = vmatpush1.bf16.msra.mxu0 0
      %2635 = vmatprep.subr.bf16.mxu0 0
      %2636 = vmatpush1.bf16.msra.mxu0 0
      %2637 = vmatprep.subr.bf16.mxu0 0
      %2638 = vmatpush1.bf16.msra.mxu0 0
      %2639 = vmatprep.subr.bf16.mxu0 0
      %2640 = vmatpush1.bf16.msra.mxu0 0
      %2641 = vmatprep.subr.bf16.mxu0 0
      %2642 = vmatpush1.bf16.msra.mxu0 0
      %2643 = vmatprep.subr.bf16.mxu0 0
      %2644 = vmatpush1.bf16.msra.mxu0 0
      %2645 = vmatprep.subr.bf16.mxu0 0
      %2646 = vmatpush1.bf16.msra.mxu0 0
      %2647 = vmatprep.subr.bf16.mxu0 0
      %2648 = vmatpush1.bf16.msra.mxu0 0
      %2649 = vmatprep.subr.bf16.mxu0 0
      %2650 = vmatpush1.bf16.msra.mxu0 0
      %2651 = vmatprep.subr.bf16.mxu0 0
      %2652 = vmatpush1.bf16.msra.mxu0 0
      %2653 = vmatprep.subr.bf16.mxu0 0
      %2654 = vmatpush1.bf16.msra.mxu0 0
      %2655 = vmatprep.subr.bf16.mxu0 0
      %2656 = vmatpush1.bf16.msra.mxu0 0
      %2657 = vmatprep.subr.bf16.mxu0 0
      %2658 = vmatpush1.bf16.msra.mxu0 0
      %2659 = vmatprep.subr.bf16.mxu0 0
      %2660 = vmatpush1.bf16.msra.mxu0 0
      %2661 = vmatprep.subr.bf16.mxu0 0
      %2662 = vmatpush1.bf16.msra.mxu0 0
      %2663 = vmatprep.mubr.bf16.mxu0 0
      %2664 = vmatmul.mubr.bf16.gmra.mrb[0].mxu0 %v2619
      %v2665 = vpop.f32.mrb[0].mxu0
      %v2666 = vadd.f32 %v2590, %v2665
      %v2667 = vpop.f32.mrb[0].mxu0
      %v2668 = vpop.f32.mrb[0].mxu0
      %v2669 = vadd.f32 %v2595, %v2668
      %v2670 = vpop.f32.mrb[0].mxu0
      %2671 = vmatprep.mubr.bf16.mxu0 0
      %2672 = vmatmul.mubr.bf16.gmra.mrb[0].mxu0 %v2622
      %v2673 = vpop.f32.mrb[0].mxu0
      %v2674 = vadd.f32 %v2600, %v2673
      %v2675 = vpop.f32.mrb[0].mxu0
      %v2676 = vpop.f32.mrb[0].mxu0
      %v2677 = vadd.f32 %v2605, %v2676
      %v2678 = vpop.f32.mrb[0].mxu0
      %2679 = vdwg.mxu0
      %v2680 = vmax.f32 %v2666, 0.0
      %v2681 = vmax.f32 %v2669, 0.0
      %v2682 = vmax.f32 %v2674, 0.0
      %v2683 = vmax.f32 %v2677, 0.0
      %v2684 = vld [vmem:[%s2003] sm:$0xf]
      %v2685 = vld [vmem:[%s2003 + $0x4] sm:$0xf]
      %v2686 = vld [vmem:[%s2003 + $0x8] sm:$0xf]
      %v2687 = vld [vmem:[%s2003 + $0xc] sm:$0xf]
      %v2688 = vsel %vm2187, %v2680, 0.0
      %2689 = vadd.xlane.f32.xlu0 %v2688
      %v2690 = vpop.xlane.xlu0 %2689
      %v2691 = vsel %vm2187, %v2681, 0.0
      %2692 = vadd.xlane.f32.xlu0 %v2691
      %v2693 = vpop.xlane.xlu0 %2692
      %v2694 = vsel %vm2187, %v2682, 0.0
      %2695 = vadd.xlane.f32.xlu0 %v2694
      %v2696 = vpop.xlane.xlu0 %2695
      %v2697 = vsel %vm2187, %v2683, 0.0
      %2698 = vadd.xlane.f32.xlu0 %v2697
      %v2699 = vpop.xlane.xlu0 %2698
      %v2700 = vrcp.pop 8.0
      %v2701 = vmul.f32 %v2690, %v2700
      %v2702 = vmul.f32 %v2693, %v2700
      %v2703 = vmul.f32 %v2696, %v2700
      %v2704 = vmul.f32 %v2699, %v2700
      %v2705 = vpack.c.bf16 %v2702, %v2701
      %v2706 = vpack.c.bf16 %v2704, %v2703
      %v2707 = vld [vmem:[%s2008] sm:$0xff]
      %v2708 = vld [vmem:[%s2008 + $0x8] sm:$0xff]
      %v2709 = vld [vmem:[%s2008 + $0x10] sm:$0xff]
      %v2710 = vld [vmem:[%s2008 + $0x18] sm:$0xff]
      %v2715 = vunpack.c.l.b16 %v2684
      %v2716 = vunpack.c.l.b16 %v2685
      %v2717 = vunpack.c.l.b16 %v2686
      %v2718 = vunpack.c.l.b16 %v2687
      %v2719 = vpack.c.b16 %v2716, %v2715
      %v2720 = vpack.c.b16 %v2718, %v2717
      %v2722 = vsel %vm2341, %v2719, 0
      %v2725 = vsel %vm2341, %v2720, 0
      %2727 = vmatprep.subr.bf16.mxu0 0
      %2728 = vmatpush1.bf16.msra.mxu0 %v2705
      %2729 = vmatprep.subr.bf16.mxu0 0
      %2730 = vmatpush1.bf16.msra.mxu0 %v2706
      %2731 = vmatprep.subr.bf16.mxu0 0
      %2732 = vmatpush1.bf16.msra.mxu0 0
      %2733 = vmatprep.subr.bf16.mxu0 0
      %2734 = vmatpush1.bf16.msra.mxu0 0
      %2735 = vmatprep.subr.bf16.mxu0 0
      %2736 = vmatpush1.bf16.msra.mxu0 0
      %2737 = vmatprep.subr.bf16.mxu0 0
      %2738 = vmatpush1.bf16.msra.mxu0 0
      %2739 = vmatprep.subr.bf16.mxu0 0
      %2740 = vmatpush1.bf16.msra.mxu0 0
      %2741 = vmatprep.subr.bf16.mxu0 0
      %2742 = vmatpush1.bf16.msra.mxu0 0
      %2743 = vmatprep.subr.bf16.mxu0 0
      %2744 = vmatpush1.bf16.msra.mxu0 0
      %2745 = vmatprep.subr.bf16.mxu0 0
      %2746 = vmatpush1.bf16.msra.mxu0 0
      %2747 = vmatprep.subr.bf16.mxu0 0
      %2748 = vmatpush1.bf16.msra.mxu0 0
      %2749 = vmatprep.subr.bf16.mxu0 0
      %2750 = vmatpush1.bf16.msra.mxu0 0
      %2751 = vmatprep.subr.bf16.mxu0 0
      %2752 = vmatpush1.bf16.msra.mxu0 0
      %2753 = vmatprep.subr.bf16.mxu0 0
      %2754 = vmatpush1.bf16.msra.mxu0 0
      %2755 = vmatprep.subr.bf16.mxu0 0
      %2756 = vmatpush1.bf16.msra.mxu0 0
      %2757 = vmatprep.subr.bf16.mxu0 0
      %2758 = vmatpush1.bf16.msra.mxu0 0
      %2759 = vmatprep.mubr.bf16.mxu0 0
      %2760 = vmatmul.mubr.bf16.gmra.mrb[0].mxu0 %v2722
      %v2761 = vpop.f32.mrb[0].mxu0
      %v2762 = vadd.f32 %v2707, %v2761
      %v2763 = vpop.f32.mrb[0].mxu0
      %v2764 = vpop.f32.mrb[0].mxu0
      %v2765 = vadd.f32 %v2708, %v2764
      %v2766 = vpop.f32.mrb[0].mxu0
      %2767 = vmatprep.mubr.bf16.mxu0 0
      %2768 = vmatmul.mubr.bf16.gmra.mrb[0].mxu0 %v2725
      %v2769 = vpop.f32.mrb[0].mxu0
      %v2770 = vadd.f32 %v2709, %v2769
      %v2771 = vpop.f32.mrb[0].mxu0
      %v2772 = vpop.f32.mrb[0].mxu0
      %v2773 = vadd.f32 %v2710, %v2772
      %v2774 = vpop.f32.mrb[0].mxu0
      %2775 = vdwg.mxu0
      %v2776 = vld [vmem:[%s2038] sm:$0xf]
      %v2777 = vld [vmem:[%s2038 + $0x4] sm:$0xf]
      %v2778 = vld [vmem:[%s2038 + $0x8] sm:$0xf]
      %v2779 = vld [vmem:[%s2038 + $0xc] sm:$0xf]
      %v2780 = vpack.c.bf16 %v2765, %v2762
      %v2781 = vpack.c.bf16 %v2773, %v2770
      %v2782 = vld [vmem:[%s2043] sm:$0xff]
      %v2783 = vld [vmem:[%s2043 + $0x8] sm:$0xff]
      %v2784 = vld [vmem:[%s2043 + $0x10] sm:$0xff]
      %v2785 = vld [vmem:[%s2043 + $0x18] sm:$0xff]
      %v2790 = vunpack.c.l.b16 %v2776
      %v2791 = vunpack.c.l.b16 %v2777
      %v2792 = vunpack.c.l.b16 %v2778
      %v2793 = vunpack.c.l.b16 %v2779
      %v2794 = vpack.c.b16 %v2791, %v2790
      %v2795 = vpack.c.b16 %v2793, %v2792
      %v2797 = vsel %vm2341, %v2794, 0
      %v2800 = vsel %vm2341, %v2795, 0
      %2802 = vmatprep.subr.bf16.mxu0 0
      %2803 = vmatpush1.bf16.msra.mxu0 %v2780
      %2804 = vmatprep.subr.bf16.mxu0 0
      %2805 = vmatpush1.bf16.msra.mxu0 %v2781
      %2806 = vmatprep.subr.bf16.mxu0 0
      %2807 = vmatpush1.bf16.msra.mxu0 0
      %2808 = vmatprep.subr.bf16.mxu0 0
      %2809 = vmatpush1.bf16.msra.mxu0 0
      %2810 = vmatprep.subr.bf16.mxu0 0
      %2811 = vmatpush1.bf16.msra.mxu0 0
      %2812 = vmatprep.subr.bf16.mxu0 0
      %2813 = vmatpush1.bf16.msra.mxu0 0
      %2814 = vmatprep.subr.bf16.mxu0 0
      %2815 = vmatpush1.bf16.msra.mxu0 0
      %2816 = vmatprep.subr.bf16.mxu0 0
      %2817 = vmatpush1.bf16.msra.mxu0 0
      %2818 = vmatprep.subr.bf16.mxu0 0
      %2819 = vmatpush1.bf16.msra.mxu0 0
      %2820 = vmatprep.subr.bf16.mxu0 0
      %2821 = vmatpush1.bf16.msra.mxu0 0
      %2822 = vmatprep.subr.bf16.mxu0 0
      %2823 = vmatpush1.bf16.msra.mxu0 0
      %2824 = vmatprep.subr.bf16.mxu0 0
      %2825 = vmatpush1.bf16.msra.mxu0 0
      %2826 = vmatprep.subr.bf16.mxu0 0
      %2827 = vmatpush1.bf16.msra.mxu0 0
      %2828 = vmatprep.subr.bf16.mxu0 0
      %2829 = vmatpush1.bf16.msra.mxu0 0
      %2830 = vmatprep.subr.bf16.mxu0 0
      %2831 = vmatpush1.bf16.msra.mxu0 0
      %2832 = vmatprep.subr.bf16.mxu0 0
      %2833 = vmatpush1.bf16.msra.mxu0 0
      %2834 = vmatprep.mubr.bf16.mxu0 0
      %2835 = vmatmul.mubr.bf16.gmra.mrb[0].mxu0 %v2797
      %v2836 = vpop.f32.mrb[0].mxu0
      %v2837 = vadd.f32 %v2782, %v2836
      %v2838 = vpop.f32.mrb[0].mxu0
      %v2839 = vpop.f32.mrb[0].mxu0
      %v2840 = vadd.f32 %v2783, %v2839
      %v2841 = vpop.f32.mrb[0].mxu0
      %2842 = vmatprep.mubr.bf16.mxu0 0
      %2843 = vmatmul.mubr.bf16.gmra.mrb[0].mxu0 %v2800
      %v2844 = vpop.f32.mrb[0].mxu0
      %v2845 = vadd.f32 %v2784, %v2844
      %v2846 = vpop.f32.mrb[0].mxu0
      %v2847 = vpop.f32.mrb[0].mxu0
      %v2848 = vadd.f32 %v2785, %v2847
      %v2849 = vpop.f32.mrb[0].mxu0
      %2850 = vdwg.mxu0
      %v2851 = vmax.f32 %v2837, 0.0
      %v2852 = vmax.f32 %v2840, 0.0
      %v2853 = vmax.f32 %v2845, 0.0
      %v2854 = vmax.f32 %v2848, 0.0
      %v2855 = vld [vmem:[%s2048] sm:$0xf]
      %v2856 = vld [vmem:[%s2048 + $0x4] sm:$0xf]
      %v2857 = vpack.c.bf16 %v2852, %v2851
      %v2858 = vpack.c.bf16 %v2854, %v2853
      %v2859 = vld [vmem:[%s2053] sm:$0xff]
      %v2860 = vld [vmem:[%s2053 + $0x8] sm:$0xff]
      %v2863 = vunpack.c.l.b16 %v2855
      %v2864 = vunpack.c.l.b16 %v2856
      %v2865 = vpack.c.b16 %v2864, %v2863
      %v2867 = vsel %vm2341, %v2865, 0
      %2869 = vmatprep.subr.bf16.mxu0 0
      %2870 = vmatpush1.bf16.msra.mxu0 %v2857
      %2871 = vmatprep.subr.bf16.mxu0 0
      %2872 = vmatpush1.bf16.msra.mxu0 %v2858
      %2873 = vmatprep.subr.bf16.mxu0 0
      %2874 = vmatpush1.bf16.msra.mxu0 0
      %2875 = vmatprep.subr.bf16.mxu0 0
      %2876 = vmatpush1.bf16.msra.mxu0 0
      %2877 = vmatprep.subr.bf16.mxu0 0
      %2878 = vmatpush1.bf16.msra.mxu0 0
      %2879 = vmatprep.subr.bf16.mxu0 0
      %2880 = vmatpush1.bf16.msra.mxu0 0
      %2881 = vmatprep.subr.bf16.mxu0 0
      %2882 = vmatpush1.bf16.msra.mxu0 0
      %2883 = vmatprep.subr.bf16.mxu0 0
      %2884 = vmatpush1.bf16.msra.mxu0 0
      %2885 = vmatprep.subr.bf16.mxu0 0
      %2886 = vmatpush1.bf16.msra.mxu0 0
      %2887 = vmatprep.subr.bf16.mxu0 0
      %2888 = vmatpush1.bf16.msra.mxu0 0
      %2889 = vmatprep.subr.bf16.mxu0 0
      %2890 = vmatpush1.bf16.msra.mxu0 0
      %2891 = vmatprep.subr.bf16.mxu0 0
      %2892 = vmatpush1.bf16.msra.mxu0 0
      %2893 = vmatprep.subr.bf16.mxu0 0
      %2894 = vmatpush1.bf16.msra.mxu0 0
      %2895 = vmatprep.subr.bf16.mxu0 0
      %2896 = vmatpush1.bf16.msra.mxu0 0
      %2897 = vmatprep.subr.bf16.mxu0 0
      %2898 = vmatpush1.bf16.msra.mxu0 0
      %2899 = vmatprep.subr.bf16.mxu0 0
      %2900 = vmatpush1.bf16.msra.mxu0 0
      %2901 = vmatprep.mubr.bf16.mxu0 0
      %2902 = vmatmul.mubr.bf16.gmra.mrb[0].mxu0 %v2867
      %v2903 = vpop.f32.mrb[0].mxu0
      %v2904 = vadd.f32 %v2859, %v2903
      %v2905 = vpop.f32.mrb[0].mxu0
      %v2906 = vpop.f32.mrb[0].mxu0
      %v2907 = vadd.f32 %v2860, %v2906
      %v2908 = vpop.f32.mrb[0].mxu0
      %2909 = vdwg.mxu0
      %v2910 = vxor.u32 %v2907, 2147483648
      %v2911 = vmul.f32 %v2910, 1.442695
      %v2912 = vpow.pop %v2911
      %v2913 = vadd.f32 %v2912, 1.0
      %v2914 = vrcp.pop %v2913
      %v2915 = vmul.f32 1.0, %v2914
      %v2916 = vmul.f32 %v2915, 0.9
      %v2917 = vadd.f32 %v2916, 0.1
      %v2918 = vlaneseq
      %v2919 = vand.u32 %v2918, 127
      %v2920 = vstv %s106
      %vm2921 = vcmp.eq.s32.totalorder %v2919, %v2920
      %v2922 = vsel %vm2921, 1, 0
      %v2923 = vcvt.s32.f32 %v2922
      %v2924 = vld [vmem:[%s1955] sm:$0xff]
      %v2925 = vmul.f32 %v2924, %v2923
      %vm2926 = vcmask 15360
      %v2927 = vsel %vm2926, %v2925, 0.0
      %2928 = vadd.xlane.f32.xlu0 %v2927
      %v2929 = vpop.xlane.xlu0 %2928
      %v2930 = vld [vmem:[%s2013] sm:$0xf]
      %v2931 = vld [vmem:[%s2013 + $0x4] sm:$0xf]
      %v2932 = vld [vmem:[%s2013 + $0x8] sm:$0xf]
      %v2933 = vld [vmem:[%s2013 + $0xc] sm:$0xf]
      %v2934 = vld [vmem:[%s2018] sm:$0xf]
      %v2935 = vld [vmem:[%s2018 + $0x4] sm:$0xf]
      %v2936 = vld [vmem:[%s2018 + $0x8] sm:$0xf]
      %v2937 = vld [vmem:[%s2018 + $0xc] sm:$0xf]
      %v2938 = vld [vmem:[%s1947] sm:$0x7]
      %v2939 = vpack.c.bf16 %v2938, %v2938
      %v2944 = vunpack.c.l.b16 %v2934
      %v2945 = vunpack.c.l.b16 %v2935
      %v2946 = vunpack.c.l.b16 %v2936
      %v2947 = vunpack.c.l.b16 %v2937
      %v2948 = vpack.c.b16 %v2945, %v2944
      %v2949 = vpack.c.b16 %v2947, %v2946
      %v2951 = vsel %vm2617, %v2948, 0
      %v2954 = vsel %vm2617, %v2949, 0
      %v2957 = vand.u32 %v2939, %v2627
      %2959 = vmatprep.subr.bf16.mxu0 0
      %2960 = vmatpush1.bf16.msra.mxu0 %v2957
      %2961 = vmatprep.subr.bf16.mxu0 0
      %2962 = vmatpush1.bf16.msra.mxu0 0
      %2963 = vmatprep.subr.bf16.mxu0 0
      %2964 = vmatpush1.bf16.msra.mxu0 0
      %2965 = vmatprep.subr.bf16.mxu0 0
      %2966 = vmatpush1.bf16.msra.mxu0 0
      %2967 = vmatprep.subr.bf16.mxu0 0
      %2968 = vmatpush1.bf16.msra.mxu0 0
      %2969 = vmatprep.subr.bf16.mxu0 0
      %2970 = vmatpush1.bf16.msra.mxu0 0
      %2971 = vmatprep.subr.bf16.mxu0 0
      %2972 = vmatpush1.bf16.msra.mxu0 0
      %2973 = vmatprep.subr.bf16.mxu0 0
      %2974 = vmatpush1.bf16.msra.mxu0 0
      %2975 = vmatprep.subr.bf16.mxu0 0
      %2976 = vmatpush1.bf16.msra.mxu0 0
      %2977 = vmatprep.subr.bf16.mxu0 0
      %2978 = vmatpush1.bf16.msra.mxu0 0
      %2979 = vmatprep.subr.bf16.mxu0 0
      %2980 = vmatpush1.bf16.msra.mxu0 0
      %2981 = vmatprep.subr.bf16.mxu0 0
      %2982 = vmatpush1.bf16.msra.mxu0 0
      %2983 = vmatprep.subr.bf16.mxu0 0
      %2984 = vmatpush1.bf16.msra.mxu0 0
      %2985 = vmatprep.subr.bf16.mxu0 0
      %2986 = vmatpush1.bf16.msra.mxu0 0
      %2987 = vmatprep.subr.bf16.mxu0 0
      %2988 = vmatpush1.bf16.msra.mxu0 0
      %2989 = vmatprep.subr.bf16.mxu0 0
      %2990 = vmatpush1.bf16.msra.mxu0 0
      %2991 = vmatprep.mubr.bf16.mxu0 0
      %2992 = vmatmul.mubr.bf16.gmra.mrb[0].mxu0 %v2951
      %v2993 = vpop.f32.mrb[0].mxu0
      %v2994 = vadd.f32 0.0, %v2993
      %v2995 = vpop.f32.mrb[0].mxu0
      %v2996 = vpop.f32.mrb[0].mxu0
      %v2997 = vadd.f32 0.0, %v2996
      %v2998 = vpop.f32.mrb[0].mxu0
      %2999 = vmatprep.mubr.bf16.mxu0 0
      %3000 = vmatmul.mubr.bf16.gmra.mrb[0].mxu0 %v2954
      %v3001 = vpop.f32.mrb[0].mxu0
      %v3002 = vadd.f32 0.0, %v3001
      %v3003 = vpop.f32.mrb[0].mxu0
      %v3004 = vpop.f32.mrb[0].mxu0
      %v3005 = vadd.f32 0.0, %v3004
      %v3006 = vpop.f32.mrb[0].mxu0
      %3007 = vdwg.mxu0
      %v3012 = vunpack.c.l.b16 %v2930
      %v3013 = vunpack.c.l.b16 %v2931
      %v3014 = vunpack.c.l.b16 %v2932
      %v3015 = vunpack.c.l.b16 %v2933
      %v3016 = vpack.c.b16 %v3013, %v3012
      %v3017 = vpack.c.b16 %v3015, %v3014
      %v3019 = vsel %vm2617, %v3016, 0
      %v3022 = vsel %vm2617, %v3017, 0
      %3024 = vmatprep.subr.bf16.mxu0 0
      %3025 = vmatpush1.bf16.msra.mxu0 %v2629
      %3026 = vmatprep.subr.bf16.mxu0 0
      %3027 = vmatpush1.bf16.msra.mxu0 0
      %3028 = vmatprep.subr.bf16.mxu0 0
      %3029 = vmatpush1.bf16.msra.mxu0 0
      %3030 = vmatprep.subr.bf16.mxu0 0
      %3031 = vmatpush1.bf16.msra.mxu0 0
      %3032 = vmatprep.subr.bf16.mxu0 0
      %3033 = vmatpush1.bf16.msra.mxu0 0
      %3034 = vmatprep.subr.bf16.mxu0 0
      %3035 = vmatpush1.bf16.msra.mxu0 0
      %3036 = vmatprep.subr.bf16.mxu0 0
      %3037 = vmatpush1.bf16.msra.mxu0 0
      %3038 = vmatprep.subr.bf16.mxu0 0
      %3039 = vmatpush1.bf16.msra.mxu0 0
      %3040 = vmatprep.subr.bf16.mxu0 0
      %3041 = vmatpush1.bf16.msra.mxu0 0
      %3042 = vmatprep.subr.bf16.mxu0 0
      %3043 = vmatpush1.bf16.msra.mxu0 0
      %3044 = vmatprep.subr.bf16.mxu0 0
      %3045 = vmatpush1.bf16.msra.mxu0 0
      %3046 = vmatprep.subr.bf16.mxu0 0
      %3047 = vmatpush1.bf16.msra.mxu0 0
      %3048 = vmatprep.subr.bf16.mxu0 0
      %3049 = vmatpush1.bf16.msra.mxu0 0
      %3050 = vmatprep.subr.bf16.mxu0 0
      %3051 = vmatpush1.bf16.msra.mxu0 0
      %3052 = vmatprep.subr.bf16.mxu0 0
      %3053 = vmatpush1.bf16.msra.mxu0 0
      %3054 = vmatprep.subr.bf16.mxu0 0
      %3055 = vmatpush1.bf16.msra.mxu0 0
      %3056 = vmatprep.mubr.bf16.mxu0 0
      %3057 = vmatmul.mubr.bf16.gmra.mrb[0].mxu0 %v3019
      %v3058 = vpop.f32.mrb[0].mxu0
      %v3059 = vadd.f32 %v2994, %v3058
      %v3060 = vpop.f32.mrb[0].mxu0
      %v3061 = vpop.f32.mrb[0].mxu0
      %v3062 = vadd.f32 %v2997, %v3061
      %v3063 = vpop.f32.mrb[0].mxu0
      %3064 = vmatprep.mubr.bf16.mxu0 0
      %3065 = vmatmul.mubr.bf16.gmra.mrb[0].mxu0 %v3022
      %v3066 = vpop.f32.mrb[0].mxu0
      %v3067 = vadd.f32 %v3002, %v3066
      %v3068 = vpop.f32.mrb[0].mxu0
      %v3069 = vpop.f32.mrb[0].mxu0
      %v3070 = vadd.f32 %v3005, %v3069
      %v3071 = vpop.f32.mrb[0].mxu0
      %3072 = vdwg.mxu0
      %v3073 = vld [vmem:[%s2023] sm:$0xff]
      %v3074 = vld [vmem:[%s2023 + $0x8] sm:$0xff]
      %v3075 = vld [vmem:[%s2023 + $0x10] sm:$0xff]
      %v3076 = vld [vmem:[%s2023 + $0x18] sm:$0xff]
      %3078 = vset.pattern.permute.xlu0 0
      %3079 = vperm.xlu0 %3078, %v3073
      %v3080 = vpop.permute.xlu0 %3079
      %3083 = vset.pattern.permute.xlu0 0
      %3084 = vperm.xlu0 %3083, %v3074
      %v3085 = vpop.permute.xlu0 %3084
      %3088 = vset.pattern.permute.xlu0 0
      %3089 = vperm.xlu0 %3088, %v3075
      %v3090 = vpop.permute.xlu0 %3089
      %3093 = vset.pattern.permute.xlu0 0
      %3094 = vperm.xlu0 %3093, %v3076
      %v3095 = vpop.permute.xlu0 %3094
      %v3097 = vadd.f32 %v3059, %v3080
      %v3098 = vadd.f32 %v3062, %v3085
      %v3099 = vadd.f32 %v3067, %v3090
      %v3100 = vadd.f32 %v3070, %v3095
      %v3101 = vmax.f32 %v3097, 0.0
      %v3102 = vmax.f32 %v3098, 0.0
      %v3103 = vmax.f32 %v3099, 0.0
      %v3104 = vmax.f32 %v3100, 0.0
      %v3105 = vld [vmem:[%s2028] sm:$0xf]
      %v3106 = vld [vmem:[%s2028 + $0x4] sm:$0xf]
      %v3107 = vld [vmem:[%s2028 + $0x8] sm:$0xf]
      %v3108 = vld [vmem:[%s2028 + $0xc] sm:$0xf]
      %v3109 = vsel %vm2187, %v3101, 0.0
      %3110 = vadd.xlane.f32.xlu0 %v3109
      %v3111 = vpop.xlane.xlu0 %3110
      %v3112 = vsel %vm2187, %v3102, 0.0
      %3113 = vadd.xlane.f32.xlu0 %v3112
      %v3114 = vpop.xlane.xlu0 %3113
      %v3115 = vsel %vm2187, %v3103, 0.0
      %3116 = vadd.xlane.f32.xlu0 %v3115
      %v3117 = vpop.xlane.xlu0 %3116
      %v3118 = vsel %vm2187, %v3104, 0.0
      %3119 = vadd.xlane.f32.xlu0 %v3118
      %v3120 = vpop.xlane.xlu0 %3119
      %v3121 = vmul.f32 %v3111, %v2700
      %v3122 = vmul.f32 %v3114, %v2700
      %v3123 = vmul.f32 %v3117, %v2700
      %v3124 = vmul.f32 %v3120, %v2700
      %v3125 = vpack.c.bf16 %v3122, %v3121
      %v3126 = vpack.c.bf16 %v3124, %v3123
      %v3127 = vld [vmem:[%s2033] sm:$0xff]
      %v3128 = vld [vmem:[%s2033 + $0x8] sm:$0xff]
      %v3129 = vld [vmem:[%s2033 + $0x10] sm:$0xff]
      %v3130 = vld [vmem:[%s2033 + $0x18] sm:$0xff]
      %v3135 = vunpack.c.l.b16 %v3105
      %v3136 = vunpack.c.l.b16 %v3106
      %v3137 = vunpack.c.l.b16 %v3107
      %v3138 = vunpack.c.l.b16 %v3108
      %v3139 = vpack.c.b16 %v3136, %v3135
      %v3140 = vpack.c.b16 %v3138, %v3137
      %v3142 = vsel %vm2341, %v3139, 0
      %v3145 = vsel %vm2341, %v3140, 0
      %3147 = vmatprep.subr.bf16.mxu0 0
      %3148 = vmatpush1.bf16.msra.mxu0 %v3125
      %3149 = vmatprep.subr.bf16.mxu0 0
      %3150 = vmatpush1.bf16.msra.mxu0 %v3126
      %3151 = vmatprep.subr.bf16.mxu0 0
      %3152 = vmatpush1.bf16.msra.mxu0 0
      %3153 = vmatprep.subr.bf16.mxu0 0
      %3154 = vmatpush1.bf16.msra.mxu0 0
      %3155 = vmatprep.subr.bf16.mxu0 0
      %3156 = vmatpush1.bf16.msra.mxu0 0
      %3157 = vmatprep.subr.bf16.mxu0 0
      %3158 = vmatpush1.bf16.msra.mxu0 0
      %3159 = vmatprep.subr.bf16.mxu0 0
      %3160 = vmatpush1.bf16.msra.mxu0 0
      %3161 = vmatprep.subr.bf16.mxu0 0
      %3162 = vmatpush1.bf16.msra.mxu0 0
      %3163 = vmatprep.subr.bf16.mxu0 0
      %3164 = vmatpush1.bf16.msra.mxu0 0
      %3165 = vmatprep.subr.bf16.mxu0 0
      %3166 = vmatpush1.bf16.msra.mxu0 0
      %3167 = vmatprep.subr.bf16.mxu0 0
      %3168 = vmatpush1.bf16.msra.mxu0 0
      %3169 = vmatprep.subr.bf16.mxu0 0
      %3170 = vmatpush1.bf16.msra.mxu0 0
      %3171 = vmatprep.subr.bf16.mxu0 0
      %3172 = vmatpush1.bf16.msra.mxu0 0
      %3173 = vmatprep.subr.bf16.mxu0 0
      %3174 = vmatpush1.bf16.msra.mxu0 0
      %3175 = vmatprep.subr.bf16.mxu0 0
      %3176 = vmatpush1.bf16.msra.mxu0 0
      %3177 = vmatprep.subr.bf16.mxu0 0
      %3178 = vmatpush1.bf16.msra.mxu0 0
      %3179 = vmatprep.mubr.bf16.mxu0 0
      %3180 = vmatmul.mubr.bf16.gmra.mrb[0].mxu0 %v3142
      %v3181 = vpop.f32.mrb[0].mxu0
      %v3182 = vadd.f32 %v3127, %v3181
      %v3183 = vpop.f32.mrb[0].mxu0
      %v3184 = vpop.f32.mrb[0].mxu0
      %v3185 = vadd.f32 %v3128, %v3184
      %v3186 = vpop.f32.mrb[0].mxu0
      %3187 = vmatprep.mubr.bf16.mxu0 0
      %3188 = vmatmul.mubr.bf16.gmra.mrb[0].mxu0 %v3145
      %v3189 = vpop.f32.mrb[0].mxu0
      %v3190 = vadd.f32 %v3129, %v3189
      %v3191 = vpop.f32.mrb[0].mxu0
      %v3192 = vpop.f32.mrb[0].mxu0
      %v3193 = vadd.f32 %v3130, %v3192
      %v3194 = vpop.f32.mrb[0].mxu0
      %3195 = vdwg.mxu0
      %v3196 = vld [vmem:[%s2058] sm:$0xf]
      %v3197 = vld [vmem:[%s2058 + $0x4] sm:$0xf]
      %v3198 = vld [vmem:[%s2058 + $0x8] sm:$0xf]
      %v3199 = vld [vmem:[%s2058 + $0xc] sm:$0xf]
      %v3200 = vpack.c.bf16 %v3185, %v3182
      %v3201 = vpack.c.bf16 %v3193, %v3190
      %v3202 = vld [vmem:[%s2063] sm:$0xff]
      %v3203 = vld [vmem:[%s2063 + $0x8] sm:$0xff]
      %v3204 = vld [vmem:[%s2063 + $0x10] sm:$0xff]
      %v3205 = vld [vmem:[%s2063 + $0x18] sm:$0xff]
      %v3210 = vunpack.c.l.b16 %v3196
      %v3211 = vunpack.c.l.b16 %v3197
      %v3212 = vunpack.c.l.b16 %v3198
      %v3213 = vunpack.c.l.b16 %v3199
      %v3214 = vpack.c.b16 %v3211, %v3210
      %v3215 = vpack.c.b16 %v3213, %v3212
      %v3217 = vsel %vm2341, %v3214, 0
      %v3220 = vsel %vm2341, %v3215, 0
      %3222 = vmatprep.subr.bf16.mxu0 0
      %3223 = vmatpush1.bf16.msra.mxu0 %v3200
      %3224 = vmatprep.subr.bf16.mxu0 0
      %3225 = vmatpush1.bf16.msra.mxu0 %v3201
      %3226 = vmatprep.subr.bf16.mxu0 0
      %3227 = vmatpush1.bf16.msra.mxu0 0
      %3228 = vmatprep.subr.bf16.mxu0 0
      %3229 = vmatpush1.bf16.msra.mxu0 0
      %3230 = vmatprep.subr.bf16.mxu0 0
      %3231 = vmatpush1.bf16.msra.mxu0 0
      %3232 = vmatprep.subr.bf16.mxu0 0
      %3233 = vmatpush1.bf16.msra.mxu0 0
      %3234 = vmatprep.subr.bf16.mxu0 0
      %3235 = vmatpush1.bf16.msra.mxu0 0
      %3236 = vmatprep.subr.bf16.mxu0 0
      %3237 = vmatpush1.bf16.msra.mxu0 0
      %3238 = vmatprep.subr.bf16.mxu0 0
      %3239 = vmatpush1.bf16.msra.mxu0 0
      %3240 = vmatprep.subr.bf16.mxu0 0
      %3241 = vmatpush1.bf16.msra.mxu0 0
      %3242 = vmatprep.subr.bf16.mxu0 0
      %3243 = vmatpush1.bf16.msra.mxu0 0
      %3244 = vmatprep.subr.bf16.mxu0 0
      %3245 = vmatpush1.bf16.msra.mxu0 0
      %3246 = vmatprep.subr.bf16.mxu0 0
      %3247 = vmatpush1.bf16.msra.mxu0 0
      %3248 = vmatprep.subr.bf16.mxu0 0
      %3249 = vmatpush1.bf16.msra.mxu0 0
      %3250 = vmatprep.subr.bf16.mxu0 0
      %3251 = vmatpush1.bf16.msra.mxu0 0
      %3252 = vmatprep.subr.bf16.mxu0 0
      %3253 = vmatpush1.bf16.msra.mxu0 0
      %3254 = vmatprep.mubr.bf16.mxu0 0
      %3255 = vmatmul.mubr.bf16.gmra.mrb[0].mxu0 %v3217
      %v3256 = vpop.f32.mrb[0].mxu0
      %v3257 = vadd.f32 %v3202, %v3256
      %v3258 = vpop.f32.mrb[0].mxu0
      %v3259 = vpop.f32.mrb[0].mxu0
      %v3260 = vadd.f32 %v3203, %v3259
      %v3261 = vpop.f32.mrb[0].mxu0
      %3262 = vmatprep.mubr.bf16.mxu0 0
      %3263 = vmatmul.mubr.bf16.gmra.mrb[0].mxu0 %v3220
      %v3264 = vpop.f32.mrb[0].mxu0
      %v3265 = vadd.f32 %v3204, %v3264
      %v3266 = vpop.f32.mrb[0].mxu0
      %v3267 = vpop.f32.mrb[0].mxu0
      %v3268 = vadd.f32 %v3205, %v3267
      %v3269 = vpop.f32.mrb[0].mxu0
      %3270 = vdwg.mxu0
      %v3271 = vmax.f32 %v3257, 0.0
      %v3272 = vmax.f32 %v3260, 0.0
      %v3273 = vmax.f32 %v3265, 0.0
      %v3274 = vmax.f32 %v3268, 0.0
      %v3275 = vld [vmem:[%s2068] sm:$0xf]
      %v3276 = vld [vmem:[%s2068 + $0x4] sm:$0xf]
      %v3277 = vpack.c.bf16 %v3272, %v3271
      %v3278 = vpack.c.bf16 %v3274, %v3273
      %v3279 = vld [vmem:[%s2073] sm:$0xff]
      %v3280 = vld [vmem:[%s2073 + $0x8] sm:$0xff]
      %v3283 = vunpack.c.l.b16 %v3275
      %v3284 = vunpack.c.l.b16 %v3276
      %v3285 = vpack.c.b16 %v3284, %v3283
      %v3287 = vsel %vm2341, %v3285, 0
      %3289 = vmatprep.subr.bf16.mxu0 0
      %3290 = vmatpush1.bf16.msra.mxu0 %v3277
      %3291 = vmatprep.subr.bf16.mxu0 0
      %3292 = vmatpush1.bf16.msra.mxu0 %v3278
      %3293 = vmatprep.subr.bf16.mxu0 0
      %3294 = vmatpush1.bf16.msra.mxu0 0
      %3295 = vmatprep.subr.bf16.mxu0 0
      %3296 = vmatpush1.bf16.msra.mxu0 0
      %3297 = vmatprep.subr.bf16.mxu0 0
      %3298 = vmatpush1.bf16.msra.mxu0 0
      %3299 = vmatprep.subr.bf16.mxu0 0
      %3300 = vmatpush1.bf16.msra.mxu0 0
      %3301 = vmatprep.subr.bf16.mxu0 0
      %3302 = vmatpush1.bf16.msra.mxu0 0
      %3303 = vmatprep.subr.bf16.mxu0 0
      %3304 = vmatpush1.bf16.msra.mxu0 0
      %3305 = vmatprep.subr.bf16.mxu0 0
      %3306 = vmatpush1.bf16.msra.mxu0 0
      %3307 = vmatprep.subr.bf16.mxu0 0
      %3308 = vmatpush1.bf16.msra.mxu0 0
      %3309 = vmatprep.subr.bf16.mxu0 0
      %3310 = vmatpush1.bf16.msra.mxu0 0
      %3311 = vmatprep.subr.bf16.mxu0 0
      %3312 = vmatpush1.bf16.msra.mxu0 0
      %3313 = vmatprep.subr.bf16.mxu0 0
      %3314 = vmatpush1.bf16.msra.mxu0 0
      %3315 = vmatprep.subr.bf16.mxu0 0
      %3316 = vmatpush1.bf16.msra.mxu0 0
      %3317 = vmatprep.subr.bf16.mxu0 0
      %3318 = vmatpush1.bf16.msra.mxu0 0
      %3319 = vmatprep.subr.bf16.mxu0 0
      %3320 = vmatpush1.bf16.msra.mxu0 0
      %3321 = vmatprep.mubr.bf16.mxu0 0
      %3322 = vmatmul.mubr.bf16.gmra.mrb[0].mxu0 %v3287
      %v3323 = vpop.f32.mrb[0].mxu0
      %v3324 = vadd.f32 %v3279, %v3323
      %v3325 = vpop.f32.mrb[0].mxu0
      %v3326 = vpop.f32.mrb[0].mxu0
      %v3327 = vadd.f32 %v3280, %v3326
      %v3328 = vpop.f32.mrb[0].mxu0
      %3329 = vdwg.mxu0
      %v3330 = vxor.u32 %v3327, 2147483648
      %v3331 = vmul.f32 %v3330, 1.442695
      %v3332 = vpow.pop %v3331
      %v3333 = vadd.f32 %v3332, 1.0
      %v3334 = vrcp.pop %v3333
      %v3335 = vmul.f32 1.0, %v3334
      %v3336 = vmul.f32 %v3335, 0.9
      %v3337 = vadd.f32 %v3336, 0.1
      %v3338 = vmul.f32 %v3337, %v2929
      %v3339 = vadd.f32 %v3324, %v3338
      %v3340 = vrcp.pop %v2917
      %v3341 = vmul.f32 %v3337, %v3340
      %v3342 = vmul.f32 %v3341, %v3341
      %v3343 = vsub.f32 %v3324, %v2904
      %v3344 = vmul.f32 %v3343, %v3340
      %v3345 = vmul.f32 %v3344, %v3344
      %v3346 = vadd.f32 %v3342, %v3345
      %v3347 = vsub.f32 %v3346, 1.0
      %v3348 = vlog2.pop %v3342
      %v3349 = vmul.f32 %v3348, 0.6931472
      %v3350 = vsub.f32 %v3347, %v3349
      %vm3351 = vcmask 7168
      %v3352 = vsel %vm3351, %v3350, 0.0
      %v3353 = vrot.slane %v3352, 4
      %v3354 = vadd.f32 %v3352, %v3353
      %v3355 = vrot.slane %v3354, 2
      %v3356 = vadd.f32 %v3354, %v3355
      %v3357 = vrot.slane %v3356, 1
      %v3358 = vadd.f32 %v3356, %v3357
      %v3359 = vmul.f32 %v3358, 0.5
      %v3360 = vld [vmem:[#allocation3] sm:$0x1]
      %v3361 = vadd.f32 %v3360, %v3359
      %vm3362 = vcmask 0
      %3363 = vst.msk [vmem:[#allocation3] sm:$0x1] %vm3362, %v3361
      %v3364 = vld [vmem:[%s2078] sm:$0xf]
      %v3365 = vld [vmem:[%s2078 + $0x4] sm:$0xf]
      %v3366 = vld [vmem:[%s2078 + $0x8] sm:$0xf]
      %v3367 = vld [vmem:[%s2078 + $0xc] sm:$0xf]
      %v3368 = vpack.c.bf16 %v3339, %v3339
      %v3369 = vld [vmem:[%s2083] sm:$0xff]
      %v3370 = vld [vmem:[%s2083 + $0x8] sm:$0xff]
      %v3371 = vld [vmem:[%s2083 + $0x10] sm:$0xff]
      %v3372 = vld [vmem:[%s2083 + $0x18] sm:$0xff]
      %v3377 = vunpack.c.l.b16 %v3364
      %v3378 = vunpack.c.l.b16 %v3365
      %v3379 = vunpack.c.l.b16 %v3366
      %v3380 = vunpack.c.l.b16 %v3367
      %v3381 = vpack.c.b16 %v3378, %v3377
      %v3382 = vpack.c.b16 %v3380, %v3379
      %v3384 = vsel %vm2187, %v3381, 0
      %v3387 = vsel %vm2187, %v3382, 0
      %v3390 = vsel %vm2200, %v3368, 0
      %3392 = vmatprep.subr.bf16.mxu0 0
      %3393 = vmatpush1.bf16.msra.mxu0 %v3390
      %3394 = vmatprep.subr.bf16.mxu0 0
      %3395 = vmatpush1.bf16.msra.mxu0 0
      %3396 = vmatprep.subr.bf16.mxu0 0
      %3397 = vmatpush1.bf16.msra.mxu0 0
      %3398 = vmatprep.subr.bf16.mxu0 0
      %3399 = vmatpush1.bf16.msra.mxu0 0
      %3400 = vmatprep.subr.bf16.mxu0 0
      %3401 = vmatpush1.bf16.msra.mxu0 0
      %3402 = vmatprep.subr.bf16.mxu0 0
      %3403 = vmatpush1.bf16.msra.mxu0 0
      %3404 = vmatprep.subr.bf16.mxu0 0
      %3405 = vmatpush1.bf16.msra.mxu0 0
      %3406 = vmatprep.subr.bf16.mxu0 0
      %3407 = vmatpush1.bf16.msra.mxu0 0
      %3408 = vmatprep.subr.bf16.mxu0 0
      %3409 = vmatpush1.bf16.msra.mxu0 0
      %3410 = vmatprep.subr.bf16.mxu0 0
      %3411 = vmatpush1.bf16.msra.mxu0 0
      %3412 = vmatprep.subr.bf16.mxu0 0
      %3413 = vmatpush1.bf16.msra.mxu0 0
      %3414 = vmatprep.subr.bf16.mxu0 0
      %3415 = vmatpush1.bf16.msra.mxu0 0
      %3416 = vmatprep.subr.bf16.mxu0 0
      %3417 = vmatpush1.bf16.msra.mxu0 0
      %3418 = vmatprep.subr.bf16.mxu0 0
      %3419 = vmatpush1.bf16.msra.mxu0 0
      %3420 = vmatprep.subr.bf16.mxu0 0
      %3421 = vmatpush1.bf16.msra.mxu0 0
      %3422 = vmatprep.subr.bf16.mxu0 0
      %3423 = vmatpush1.bf16.msra.mxu0 0
      %3424 = vmatprep.mubr.bf16.mxu0 0
      %3425 = vmatmul.mubr.bf16.gmra.mrb[0].mxu0 %v3384
      %v3426 = vpop.f32.mrb[0].mxu0
      %v3427 = vadd.f32 %v3369, %v3426
      %v3428 = vpop.f32.mrb[0].mxu0
      %v3429 = vpop.f32.mrb[0].mxu0
      %v3430 = vadd.f32 %v3370, %v3429
      %v3431 = vpop.f32.mrb[0].mxu0
      %3432 = vmatprep.mubr.bf16.mxu0 0
      %3433 = vmatmul.mubr.bf16.gmra.mrb[0].mxu0 %v3387
      %v3434 = vpop.f32.mrb[0].mxu0
      %v3435 = vadd.f32 %v3371, %v3434
      %v3436 = vpop.f32.mrb[0].mxu0
      %v3437 = vpop.f32.mrb[0].mxu0
      %v3438 = vadd.f32 %v3372, %v3437
      %v3439 = vpop.f32.mrb[0].mxu0
      %3440 = vdwg.mxu0
      %v3441 = vmax.f32 %v3427, 0.0
      %v3442 = vmax.f32 %v3430, 0.0
      %v3443 = vmax.f32 %v3435, 0.0
      %v3444 = vmax.f32 %v3438, 0.0
      %v3445 = vld [vmem:[%s2088] sm:$0xf]
      %v3446 = vld [vmem:[%s2088 + $0x4] sm:$0xf]
      %v3447 = vld [vmem:[%s2088 + $0x8] sm:$0xf]
      %v3448 = vld [vmem:[%s2088 + $0xc] sm:$0xf]
      %v3449 = vpack.c.bf16 %v3442, %v3441
      %v3450 = vpack.c.bf16 %v3444, %v3443
      %v3451 = vld [vmem:[%s2093] sm:$0xff]
      %v3452 = vld [vmem:[%s2093 + $0x8] sm:$0xff]
      %v3453 = vld [vmem:[%s2093 + $0x10] sm:$0xff]
      %v3454 = vld [vmem:[%s2093 + $0x18] sm:$0xff]
      %v3459 = vunpack.c.l.b16 %v3445
      %v3460 = vunpack.c.l.b16 %v3446
      %v3461 = vunpack.c.l.b16 %v3447
      %v3462 = vunpack.c.l.b16 %v3448
      %v3463 = vpack.c.b16 %v3460, %v3459
      %v3464 = vpack.c.b16 %v3462, %v3461
      %v3466 = vsel %vm2341, %v3463, 0
      %v3469 = vsel %vm2341, %v3464, 0
      %3471 = vmatprep.subr.bf16.mxu0 0
      %3472 = vmatpush1.bf16.msra.mxu0 %v3449
      %3473 = vmatprep.subr.bf16.mxu0 0
      %3474 = vmatpush1.bf16.msra.mxu0 %v3450
      %3475 = vmatprep.subr.bf16.mxu0 0
      %3476 = vmatpush1.bf16.msra.mxu0 0
      %3477 = vmatprep.subr.bf16.mxu0 0
      %3478 = vmatpush1.bf16.msra.mxu0 0
      %3479 = vmatprep.subr.bf16.mxu0 0
      %3480 = vmatpush1.bf16.msra.mxu0 0
      %3481 = vmatprep.subr.bf16.mxu0 0
      %3482 = vmatpush1.bf16.msra.mxu0 0
      %3483 = vmatprep.subr.bf16.mxu0 0
      %3484 = vmatpush1.bf16.msra.mxu0 0
      %3485 = vmatprep.subr.bf16.mxu0 0
      %3486 = vmatpush1.bf16.msra.mxu0 0
      %3487 = vmatprep.subr.bf16.mxu0 0
      %3488 = vmatpush1.bf16.msra.mxu0 0
      %3489 = vmatprep.subr.bf16.mxu0 0
      %3490 = vmatpush1.bf16.msra.mxu0 0
      %3491 = vmatprep.subr.bf16.mxu0 0
      %3492 = vmatpush1.bf16.msra.mxu0 0
      %3493 = vmatprep.subr.bf16.mxu0 0
      %3494 = vmatpush1.bf16.msra.mxu0 0
      %3495 = vmatprep.subr.bf16.mxu0 0
      %3496 = vmatpush1.bf16.msra.mxu0 0
      %3497 = vmatprep.subr.bf16.mxu0 0
      %3498 = vmatpush1.bf16.msra.mxu0 0
      %3499 = vmatprep.subr.bf16.mxu0 0
      %3500 = vmatpush1.bf16.msra.mxu0 0
      %3501 = vmatprep.subr.bf16.mxu0 0
      %3502 = vmatpush1.bf16.msra.mxu0 0
      %3503 = vmatprep.mubr.bf16.mxu0 0
      %3504 = vmatmul.mubr.bf16.gmra.mrb[0].mxu0 %v3466
      %v3505 = vpop.f32.mrb[0].mxu0
      %v3506 = vadd.f32 %v3451, %v3505
      %v3507 = vpop.f32.mrb[0].mxu0
      %v3508 = vpop.f32.mrb[0].mxu0
      %v3509 = vadd.f32 %v3452, %v3508
      %v3510 = vpop.f32.mrb[0].mxu0
      %3511 = vmatprep.mubr.bf16.mxu0 0
      %3512 = vmatmul.mubr.bf16.gmra.mrb[0].mxu0 %v3469
      %v3513 = vpop.f32.mrb[0].mxu0
      %v3514 = vadd.f32 %v3453, %v3513
      %v3515 = vpop.f32.mrb[0].mxu0
      %v3516 = vpop.f32.mrb[0].mxu0
      %v3517 = vadd.f32 %v3454, %v3516
      %v3518 = vpop.f32.mrb[0].mxu0
      %3519 = vdwg.mxu0
      %v3520 = vld [vmem:[%s2098] sm:$0xf]
      %v3521 = vld [vmem:[%s2098 + $0x4] sm:$0xf]
      %v3522 = vld [vmem:[%s2098 + $0x8] sm:$0xf]
      %v3523 = vld [vmem:[%s2098 + $0xc] sm:$0xf]
      %v3524 = vpack.c.bf16 %v2157, %v2157
      %v3529 = vunpack.c.l.b16 %v3520
      %v3530 = vunpack.c.l.b16 %v3521
      %v3531 = vunpack.c.l.b16 %v3522
      %v3532 = vunpack.c.l.b16 %v3523
      %v3533 = vpack.c.b16 %v3530, %v3529
      %v3534 = vpack.c.b16 %v3532, %v3531
      %v3536 = vsel %vm2187, %v3533, 0
      %v3539 = vsel %vm2187, %v3534, 0
      %v3542 = vsel %vm2200, %v3524, 0
      %3544 = vmatprep.subr.bf16.mxu0 0
      %3545 = vmatpush1.bf16.msra.mxu0 %v3542
      %3546 = vmatprep.subr.bf16.mxu0 0
      %3547 = vmatpush1.bf16.msra.mxu0 0
      %3548 = vmatprep.subr.bf16.mxu0 0
      %3549 = vmatpush1.bf16.msra.mxu0 0
      %3550 = vmatprep.subr.bf16.mxu0 0
      %3551 = vmatpush1.bf16.msra.mxu0 0
      %3552 = vmatprep.subr.bf16.mxu0 0
      %3553 = vmatpush1.bf16.msra.mxu0 0
      %3554 = vmatprep.subr.bf16.mxu0 0
      %3555 = vmatpush1.bf16.msra.mxu0 0
      %3556 = vmatprep.subr.bf16.mxu0 0
      %3557 = vmatpush1.bf16.msra.mxu0 0
      %3558 = vmatprep.subr.bf16.mxu0 0
      %3559 = vmatpush1.bf16.msra.mxu0 0
      %3560 = vmatprep.subr.bf16.mxu0 0
      %3561 = vmatpush1.bf16.msra.mxu0 0
      %3562 = vmatprep.subr.bf16.mxu0 0
      %3563 = vmatpush1.bf16.msra.mxu0 0
      %3564 = vmatprep.subr.bf16.mxu0 0
      %3565 = vmatpush1.bf16.msra.mxu0 0
      %3566 = vmatprep.subr.bf16.mxu0 0
      %3567 = vmatpush1.bf16.msra.mxu0 0
      %3568 = vmatprep.subr.bf16.mxu0 0
      %3569 = vmatpush1.bf16.msra.mxu0 0
      %3570 = vmatprep.subr.bf16.mxu0 0
      %3571 = vmatpush1.bf16.msra.mxu0 0
      %3572 = vmatprep.subr.bf16.mxu0 0
      %3573 = vmatpush1.bf16.msra.mxu0 0
      %3574 = vmatprep.subr.bf16.mxu0 0
      %3575 = vmatpush1.bf16.msra.mxu0 0
      %3576 = vmatprep.mubr.bf16.mxu0 0
      %3577 = vmatmul.mubr.bf16.gmra.mrb[0].mxu0 %v3536
      %v3578 = vpop.f32.mrb[0].mxu0
      %v3579 = vadd.f32 %v2255, %v3578
      %v3580 = vpop.f32.mrb[0].mxu0
      %v3581 = vpop.f32.mrb[0].mxu0
      %v3582 = vadd.f32 %v2258, %v3581
      %v3583 = vpop.f32.mrb[0].mxu0
      %3584 = vmatprep.mubr.bf16.mxu0 0
      %3585 = vmatmul.mubr.bf16.gmra.mrb[0].mxu0 %v3539
      %v3586 = vpop.f32.mrb[0].mxu0
      %v3587 = vadd.f32 %v2263, %v3586
      %v3588 = vpop.f32.mrb[0].mxu0
      %v3589 = vpop.f32.mrb[0].mxu0
      %v3590 = vadd.f32 %v2266, %v3589
      %v3591 = vpop.f32.mrb[0].mxu0
      %3592 = vdwg.mxu0
      %v3593 = vld [vmem:[%s1970] sm:$0xff]
      %v3594 = vld [vmem:[%s1970 + $0x8] sm:$0xff]
      %v3595 = vld [vmem:[%s1970 + $0x10] sm:$0xff]
      %v3596 = vld [vmem:[%s1970 + $0x18] sm:$0xff]
      %3598 = vset.pattern.permute.xlu0 0
      %3599 = vperm.xlu0 %3598, %v3593
      %v3600 = vpop.permute.xlu0 %3599
      %3603 = vset.pattern.permute.xlu0 0
      %3604 = vperm.xlu0 %3603, %v3594
      %v3605 = vpop.permute.xlu0 %3604
      %3608 = vset.pattern.permute.xlu0 0
      %3609 = vperm.xlu0 %3608, %v3595
      %v3610 = vpop.permute.xlu0 %3609
      %3613 = vset.pattern.permute.xlu0 0
      %3614 = vperm.xlu0 %3613, %v3596
      %v3615 = vpop.permute.xlu0 %3614
      %v3617 = vadd.f32 %v3579, %v3600
      %v3618 = vadd.f32 %v3582, %v3605
      %v3619 = vadd.f32 %v3587, %v3610
      %v3620 = vadd.f32 %v3590, %v3615
      %v3621 = vmax.f32 %v3617, 0.0
      %v3622 = vmax.f32 %v3618, 0.0
      %v3623 = vmax.f32 %v3619, 0.0
      %v3624 = vmax.f32 %v3620, 0.0
      %v3625 = vld [vmem:[%s2102] sm:$0xf]
      %v3626 = vpack.c.bf16 %v3622, %v3621
      %v3627 = vpack.c.bf16 %v3624, %v3623
      %v3629 = vsel %vm2341, %v3625, 0
      %3631 = vmatprep.subr.bf16.mxu0 0
      %3632 = vmatpush1.bf16.msra.mxu0 %v3626
      %3633 = vmatprep.subr.bf16.mxu0 0
      %3634 = vmatpush1.bf16.msra.mxu0 %v3627
      %3635 = vmatprep.subr.bf16.mxu0 0
      %3636 = vmatpush1.bf16.msra.mxu0 0
      %3637 = vmatprep.subr.bf16.mxu0 0
      %3638 = vmatpush1.bf16.msra.mxu0 0
      %3639 = vmatprep.subr.bf16.mxu0 0
      %3640 = vmatpush1.bf16.msra.mxu0 0
      %3641 = vmatprep.subr.bf16.mxu0 0
      %3642 = vmatpush1.bf16.msra.mxu0 0
      %3643 = vmatprep.subr.bf16.mxu0 0
      %3644 = vmatpush1.bf16.msra.mxu0 0
      %3645 = vmatprep.subr.bf16.mxu0 0
      %3646 = vmatpush1.bf16.msra.mxu0 0
      %3647 = vmatprep.subr.bf16.mxu0 0
      %3648 = vmatpush1.bf16.msra.mxu0 0
      %3649 = vmatprep.subr.bf16.mxu0 0
      %3650 = vmatpush1.bf16.msra.mxu0 0
      %3651 = vmatprep.subr.bf16.mxu0 0
      %3652 = vmatpush1.bf16.msra.mxu0 0
      %3653 = vmatprep.subr.bf16.mxu0 0
      %3654 = vmatpush1.bf16.msra.mxu0 0
      %3655 = vmatprep.subr.bf16.mxu0 0
      %3656 = vmatpush1.bf16.msra.mxu0 0
      %3657 = vmatprep.subr.bf16.mxu0 0
      %3658 = vmatpush1.bf16.msra.mxu0 0
      %3659 = vmatprep.subr.bf16.mxu0 0
      %3660 = vmatpush1.bf16.msra.mxu0 0
      %3661 = vmatprep.subr.bf16.mxu0 0
      %3662 = vmatpush1.bf16.msra.mxu0 0
      %3663 = vmatprep.mubr.bf16.mxu0 0
      %3664 = vmatmul.mubr.bf16.gmra.mrb[0].mxu0 %v3629
      %v3665 = vpop.f32.mrb[0].mxu0
      %v3666 = vadd.f32 0.0, %v3665
      %v3667 = vpop.f32.mrb[0].mxu0
      %v3668 = vpop.f32.mrb[0].mxu0
      %v3669 = vpop.f32.mrb[0].mxu0
      %3670 = vdwg.mxu0
      %v3671 = vadd.f32 %v2156, %v3666
      %v3672 = vld [vmem:[%s2106] sm:$0xff]
      %3674 = vset.pattern.permute.xlu0 0
      %3675 = vperm.xlu0 %3674, %v3672
      %v3676 = vpop.permute.xlu0 %3675
      %v3678 = vadd.f32 %v3671, %v3676
      %v3679 = vld [vmem:[%s2119] sm:$0xf]
      %v3680 = vld [vmem:[%s2119 + $0x4] sm:$0xf]
      %v3681 = vld [vmem:[%s2119 + $0x8] sm:$0xf]
      %v3682 = vld [vmem:[%s2119 + $0xc] sm:$0xf]
      %v3683 = vld [vmem:[%s2110] sm:$0xf]
      %v3684 = vpack.c.bf16 %v3509, %v3506
      %v3685 = vpack.c.bf16 %v3517, %v3514
      %v3687 = vsel %vm2341, %v3683, 0
      %3689 = vmatprep.subr.bf16.mxu0 0
      %3690 = vmatpush1.bf16.msra.mxu0 %v3684
      %3691 = vmatprep.subr.bf16.mxu0 0
      %3692 = vmatpush1.bf16.msra.mxu0 %v3685
      %3693 = vmatprep.subr.bf16.mxu0 0
      %3694 = vmatpush1.bf16.msra.mxu0 0
      %3695 = vmatprep.subr.bf16.mxu0 0
      %3696 = vmatpush1.bf16.msra.mxu0 0
      %3697 = vmatprep.subr.bf16.mxu0 0
      %3698 = vmatpush1.bf16.msra.mxu0 0
      %3699 = vmatprep.subr.bf16.mxu0 0
      %3700 = vmatpush1.bf16.msra.mxu0 0
      %3701 = vmatprep.subr.bf16.mxu0 0
      %3702 = vmatpush1.bf16.msra.mxu0 0
      %3703 = vmatprep.subr.bf16.mxu0 0
      %3704 = vmatpush1.bf16.msra.mxu0 0
      %3705 = vmatprep.subr.bf16.mxu0 0
      %3706 = vmatpush1.bf16.msra.mxu0 0
      %3707 = vmatprep.subr.bf16.mxu0 0
      %3708 = vmatpush1.bf16.msra.mxu0 0
      %3709 = vmatprep.subr.bf16.mxu0 0
      %3710 = vmatpush1.bf16.msra.mxu0 0
      %3711 = vmatprep.subr.bf16.mxu0 0
      %3712 = vmatpush1.bf16.msra.mxu0 0
      %3713 = vmatprep.subr.bf16.mxu0 0
      %3714 = vmatpush1.bf16.msra.mxu0 0
      %3715 = vmatprep.subr.bf16.mxu0 0
      %3716 = vmatpush1.bf16.msra.mxu0 0
      %3717 = vmatprep.subr.bf16.mxu0 0
      %3718 = vmatpush1.bf16.msra.mxu0 0
      %3719 = vmatprep.subr.bf16.mxu0 0
      %3720 = vmatpush1.bf16.msra.mxu0 0
      %3721 = vmatprep.mubr.bf16.mxu0 0
      %3722 = vmatmul.mubr.bf16.gmra.mrb[0].mxu0 %v3687
      %v3723 = vpop.f32.mrb[0].mxu0
      %v3724 = vadd.f32 0.0, %v3723
      %v3725 = vpop.f32.mrb[0].mxu0
      %v3726 = vpop.f32.mrb[0].mxu0
      %v3727 = vpop.f32.mrb[0].mxu0
      %3728 = vdwg.mxu0
      %v3729 = vmul.f32 %v3724, 0.17677669
      %v3730 = vld [vmem:[%s2114] sm:$0xff]
      %v3731 = vadd.f32 %v3729, %v3730
      %v3732 = vunpack.c.l.bf16 %v3679
      %v3733 = vunpack.c.l.bf16 %v3680
      %v3734 = vunpack.c.l.bf16 %v3681
      %v3735 = vunpack.c.l.bf16 %v3682
      %v3736 = vmul.f32 %v3732, %v3732
      %v3737 = vmul.f32 %v3733, %v3733
      %v3738 = vmul.f32 %v3734, %v3734
      %v3739 = vmul.f32 %v3735, %v3735
      %v3740 = vmul.f32 %v3731, %v3731
      %v3742 = vsel %vm2187, %v3736, 0
      %v3745 = vsel %vm2187, %v3737, 0
      %v3748 = vsel %vm2187, %v3738, 0
      %v3751 = vsel %vm2187, %v3739, 0
      %3753 = vmatprep.subr.mxu0 0.0
      %3754 = vmatpush1.msra.mxu0 %v3740
      %3755 = vmatprep.subr.mxu0 0.0
      %3756 = vmatpush1.msra.mxu0 0.0
      %3757 = vmatprep.subr.mxu0 0.0
      %3758 = vmatpush1.msra.mxu0 0.0
      %3759 = vmatprep.subr.mxu0 0.0
      %3760 = vmatpush1.msra.mxu0 0.0
      %3761 = vmatprep.subr.mxu0 0.0
      %3762 = vmatpush1.msra.mxu0 0.0
      %3763 = vmatprep.subr.mxu0 0.0
      %3764 = vmatpush1.msra.mxu0 0.0
      %3765 = vmatprep.subr.mxu0 0.0
      %3766 = vmatpush1.msra.mxu0 0.0
      %3767 = vmatprep.subr.mxu0 0.0
      %3768 = vmatpush1.msra.mxu0 0.0
      %3769 = vmatprep.subr.mxu0 0.0
      %3770 = vmatpush1.msra.mxu0 0.0
      %3771 = vmatprep.subr.mxu0 0.0
      %3772 = vmatpush1.msra.mxu0 0.0
      %3773 = vmatprep.subr.mxu0 0.0
      %3774 = vmatpush1.msra.mxu0 0.0
      %3775 = vmatprep.subr.mxu0 0.0
      %3776 = vmatpush1.msra.mxu0 0.0
      %3777 = vmatprep.subr.mxu0 0.0
      %3778 = vmatpush1.msra.mxu0 0.0
      %3779 = vmatprep.subr.mxu0 0.0
      %3780 = vmatpush1.msra.mxu0 0.0
      %3781 = vmatprep.subr.mxu0 0.0
      %3782 = vmatpush1.msra.mxu0 0.0
      %3783 = vmatprep.subr.mxu0 0.0
      %3784 = vmatpush1.msra.mxu0 0.0
      %3785 = vmatprep.subr.mxu0 0.0
      %3786 = vmatpush1.msra.mxu0 0.0
      %3787 = vmatprep.subr.mxu0 0.0
      %3788 = vmatpush1.msra.mxu0 0.0
      %3789 = vmatprep.subr.mxu0 0.0
      %3790 = vmatpush1.msra.mxu0 0.0
      %3791 = vmatprep.subr.mxu0 0.0
      %3792 = vmatpush1.msra.mxu0 0.0
      %3793 = vmatprep.subr.mxu0 0.0
      %3794 = vmatpush1.msra.mxu0 0.0
      %3795 = vmatprep.subr.mxu0 0.0
      %3796 = vmatpush1.msra.mxu0 0.0
      %3797 = vmatprep.subr.mxu0 0.0
      %3798 = vmatpush1.msra.mxu0 0.0
      %3799 = vmatprep.subr.mxu0 0.0
      %3800 = vmatpush1.msra.mxu0 0.0
      %3801 = vmatprep.subr.mxu0 0.0
      %3802 = vmatpush1.msra.mxu0 0.0
      %3803 = vmatprep.subr.mxu0 0.0
      %3804 = vmatpush1.msra.mxu0 0.0
      %3805 = vmatprep.subr.mxu0 0.0
      %3806 = vmatpush1.msra.mxu0 0.0
      %3807 = vmatprep.subr.mxu0 0.0
      %3808 = vmatpush1.msra.mxu0 0.0
      %3809 = vmatprep.subr.mxu0 0.0
      %3810 = vmatpush1.msra.mxu0 0.0
      %3811 = vmatprep.subr.mxu0 0.0
      %3812 = vmatpush1.msra.mxu0 0.0
      %3813 = vmatprep.subr.mxu0 0.0
      %3814 = vmatpush1.msra.mxu0 0.0
      %3815 = vmatprep.subr.mxu0 0.0
      %3816 = vmatpush1.msra.mxu0 0.0
      %3817 = vmatprep.mubr.f32.mxu0 0.0
      %3818 = vmatmul.mubr.f32.gmra.mrb[0].mxu0 %v3742
      %v3819 = vpop.f32.mrb[0].mxu0
      %v3820 = vadd.f32 0.0, %v3819
      %v3821 = vpop.f32.mrb[0].mxu0
      %3822 = vmatprep.mubr.f32.mxu0 0.0
      %3823 = vmatmul.mubr.f32.gmra.mrb[0].mxu0 %v3745
      %v3824 = vpop.f32.mrb[0].mxu0
      %v3825 = vadd.f32 0.0, %v3824
      %v3826 = vpop.f32.mrb[0].mxu0
      %3827 = vmatprep.mubr.f32.mxu0 0.0
      %3828 = vmatmul.mubr.f32.gmra.mrb[0].mxu0 %v3748
      %v3829 = vpop.f32.mrb[0].mxu0
      %v3830 = vadd.f32 0.0, %v3829
      %v3831 = vpop.f32.mrb[0].mxu0
      %3832 = vmatprep.mubr.f32.mxu0 0.0
      %3833 = vmatmul.mubr.f32.gmra.mrb[0].mxu0 %v3751
      %v3834 = vpop.f32.mrb[0].mxu0
      %v3835 = vadd.f32 0.0, %v3834
      %v3836 = vpop.f32.mrb[0].mxu0
      %3837 = vdwg.mxu0
      %v3838 = vmul.f32 %v3820, 0.125
      %v3839 = vmul.f32 %v3825, 0.125
      %v3840 = vmul.f32 %v3830, 0.125
      %v3841 = vmul.f32 %v3835, 0.125
      %v3842 = vadd.f32 %v3838, 1e-08
      %v3843 = vadd.f32 %v3839, 1e-08
      %v3844 = vadd.f32 %v3840, 1e-08
      %v3845 = vadd.f32 %v3841, 1e-08
      %v3846 = vrsqrt.pop %v3842
      %v3847 = vrsqrt.pop %v3843
      %v3848 = vrsqrt.pop %v3844
      %v3849 = vrsqrt.pop %v3845
      %3851 = vset.pattern.permute.xlu0 0
      %3852 = vperm.xlu0 %3851, %v3731
      %v3853 = vpop.permute.xlu0 %3852
      %v3855 = vmul.f32 %v3853, %v3678
      %v3856 = vpack.c.bf16 %v3855, %v3855
      %v3861 = vunpack.c.l.b16 %v3679
      %v3862 = vunpack.c.l.b16 %v3680
      %v3863 = vunpack.c.l.b16 %v3681
      %v3864 = vunpack.c.l.b16 %v3682
      %v3865 = vpack.c.b16 %v3862, %v3861
      %v3866 = vpack.c.b16 %v3864, %v3863
      %v3868 = vsel %vm2187, %v3865, 0
      %v3871 = vsel %vm2187, %v3866, 0
      %v3874 = vsel %vm2200, %v3856, 0
      %3876 = vmatprep.subr.bf16.mxu0 0
      %3877 = vmatpush1.bf16.msra.mxu0 %v3874
      %3878 = vmatprep.subr.bf16.mxu0 0
      %3879 = vmatpush1.bf16.msra.mxu0 0
      %3880 = vmatprep.subr.bf16.mxu0 0
      %3881 = vmatpush1.bf16.msra.mxu0 0
      %3882 = vmatprep.subr.bf16.mxu0 0
      %3883 = vmatpush1.bf16.msra.mxu0 0
      %3884 = vmatprep.subr.bf16.mxu0 0
      %3885 = vmatpush1.bf16.msra.mxu0 0
      %3886 = vmatprep.subr.bf16.mxu0 0
      %3887 = vmatpush1.bf16.msra.mxu0 0
      %3888 = vmatprep.subr.bf16.mxu0 0
      %3889 = vmatpush1.bf16.msra.mxu0 0
      %3890 = vmatprep.subr.bf16.mxu0 0
      %3891 = vmatpush1.bf16.msra.mxu0 0
      %3892 = vmatprep.subr.bf16.mxu0 0
      %3893 = vmatpush1.bf16.msra.mxu0 0
      %3894 = vmatprep.subr.bf16.mxu0 0
      %3895 = vmatpush1.bf16.msra.mxu0 0
      %3896 = vmatprep.subr.bf16.mxu0 0
      %3897 = vmatpush1.bf16.msra.mxu0 0
      %3898 = vmatprep.subr.bf16.mxu0 0
      %3899 = vmatpush1.bf16.msra.mxu0 0
      %3900 = vmatprep.subr.bf16.mxu0 0
      %3901 = vmatpush1.bf16.msra.mxu0 0
      %3902 = vmatprep.subr.bf16.mxu0 0
      %3903 = vmatpush1.bf16.msra.mxu0 0
      %3904 = vmatprep.subr.bf16.mxu0 0
      %3905 = vmatpush1.bf16.msra.mxu0 0
      %3906 = vmatprep.subr.bf16.mxu0 0
      %3907 = vmatpush1.bf16.msra.mxu0 0
      %3908 = vmatprep.mubr.bf16.mxu0 0
      %3909 = vmatmul.mubr.bf16.gmra.mrb[0].mxu0 %v3868
      %v3910 = vpop.f32.mrb[0].mxu0
      %v3911 = vadd.f32 0.0, %v3910
      %v3912 = vpop.f32.mrb[0].mxu0
      %v3913 = vpop.f32.mrb[0].mxu0
      %v3914 = vadd.f32 0.0, %v3913
      %v3915 = vpop.f32.mrb[0].mxu0
      %3916 = vmatprep.mubr.bf16.mxu0 0
      %3917 = vmatmul.mubr.bf16.gmra.mrb[0].mxu0 %v3871
      %v3918 = vpop.f32.mrb[0].mxu0
      %v3919 = vadd.f32 0.0, %v3918
      %v3920 = vpop.f32.mrb[0].mxu0
      %v3921 = vpop.f32.mrb[0].mxu0
      %v3922 = vadd.f32 0.0, %v3921
      %v3923 = vpop.f32.mrb[0].mxu0
      %3924 = vdwg.mxu0
      %v3925 = vmul.f32 %v3846, 0.35355338
      %v3926 = vmul.f32 %v3847, 0.35355338
      %v3927 = vmul.f32 %v3848, 0.35355338
      %v3928 = vmul.f32 %v3849, 0.35355338
      %3930 = vset.pattern.permute.xlu0 0
      %3931 = vperm.xlu0 %3930, %v3925
      %v3932 = vpop.permute.xlu0 %3931
      %3935 = vset.pattern.permute.xlu0 0
      %3936 = vperm.xlu0 %3935, %v3926
      %v3937 = vpop.permute.xlu0 %3936
      %3940 = vset.pattern.permute.xlu0 0
      %3941 = vperm.xlu0 %3940, %v3927
      %v3942 = vpop.permute.xlu0 %3941
      %3945 = vset.pattern.permute.xlu0 0
      %3946 = vperm.xlu0 %3945, %v3928
      %v3947 = vpop.permute.xlu0 %3946
      %v3949 = vmul.f32 %v3911, %v3932
      %v3950 = vmul.f32 %v3914, %v3937
      %v3951 = vmul.f32 %v3919, %v3942
      %v3952 = vmul.f32 %v3922, %v3947
      %v3953 = vld [vmem:[%s2124] sm:$0xff]
      %v3954 = vld [vmem:[%s2124 + $0x8] sm:$0xff]
      %v3955 = vld [vmem:[%s2124 + $0x10] sm:$0xff]
      %v3956 = vld [vmem:[%s2124 + $0x18] sm:$0xff]
      %3958 = vset.pattern.permute.xlu0 0
      %3959 = vperm.xlu0 %3958, %v3953
      %v3960 = vpop.permute.xlu0 %3959
      %3963 = vset.pattern.permute.xlu0 0
      %3964 = vperm.xlu0 %3963, %v3954
      %v3965 = vpop.permute.xlu0 %3964
      %3968 = vset.pattern.permute.xlu0 0
      %3969 = vperm.xlu0 %3968, %v3955
      %v3970 = vpop.permute.xlu0 %3969
      %3973 = vset.pattern.permute.xlu0 0
      %3974 = vperm.xlu0 %3973, %v3956
      %v3975 = vpop.permute.xlu0 %3974
      %v3977 = vadd.f32 %v3949, %v3960
      %v3978 = vadd.f32 %v3950, %v3965
      %v3979 = vadd.f32 %v3951, %v3970
      %v3980 = vadd.f32 %v3952, %v3975
      %vm3981 = vcmp.ge.f32.partialorder %v3977, 0.0
      %vm3982 = vcmp.ge.f32.partialorder %v3978, 0.0
      %vm3983 = vcmp.ge.f32.partialorder %v3979, 0.0
      %vm3984 = vcmp.ge.f32.partialorder %v3980, 0.0
      %v3985 = vmul.f32 %v3977, 0.2
      %v3986 = vmul.f32 %v3978, 0.2
      %v3987 = vmul.f32 %v3979, 0.2
      %v3988 = vmul.f32 %v3980, 0.2
      %v3989 = vsel %vm3981, %v3977, %v3985
      %v3990 = vsel %vm3982, %v3978, %v3986
      %v3991 = vsel %vm3983, %v3979, %v3987
      %v3992 = vsel %vm3984, %v3980, %v3988
      %v3993 = vmul.f32 %v3989, 1.4142135
      %v3994 = vmul.f32 %v3990, 1.4142135
      %v3995 = vmul.f32 %v3991, 1.4142135
      %v3996 = vmul.f32 %v3992, 1.4142135
      %v3997 = vld [vmem:[%s2138] sm:$0xf]
      %v3998 = vld [vmem:[%s2129] sm:$0xf]
      %v3999 = vld [vmem:[%s2129 + $0x4] sm:$0xf]
      %v4000 = vld [vmem:[%s2129 + $0x8] sm:$0xf]
      %v4001 = vld [vmem:[%s2129 + $0xc] sm:$0xf]
      %v4006 = vunpack.c.l.b16 %v3998
      %v4007 = vunpack.c.l.b16 %v3999
      %v4008 = vunpack.c.l.b16 %v4000
      %v4009 = vunpack.c.l.b16 %v4001
      %v4010 = vpack.c.b16 %v4007, %v4006
      %v4011 = vpack.c.b16 %v4009, %v4008
      %v4013 = vsel %vm2341, %v4010, 0
      %v4016 = vsel %vm2341, %v4011, 0
      %4018 = vmatprep.subr.bf16.mxu0 0
      %4019 = vmatpush1.bf16.msra.mxu0 %v3684
      %4020 = vmatprep.subr.bf16.mxu0 0
      %4021 = vmatpush1.bf16.msra.mxu0 %v3685
      %4022 = vmatprep.subr.bf16.mxu0 0
      %4023 = vmatpush1.bf16.msra.mxu0 0
      %4024 = vmatprep.subr.bf16.mxu0 0
      %4025 = vmatpush1.bf16.msra.mxu0 0
      %4026 = vmatprep.subr.bf16.mxu0 0
      %4027 = vmatpush1.bf16.msra.mxu0 0
      %4028 = vmatprep.subr.bf16.mxu0 0
      %4029 = vmatpush1.bf16.msra.mxu0 0
      %4030 = vmatprep.subr.bf16.mxu0 0
      %4031 = vmatpush1.bf16.msra.mxu0 0
      %4032 = vmatprep.subr.bf16.mxu0 0
      %4033 = vmatpush1.bf16.msra.mxu0 0
      %4034 = vmatprep.subr.bf16.mxu0 0
      %4035 = vmatpush1.bf16.msra.mxu0 0
      %4036 = vmatprep.subr.bf16.mxu0 0
      %4037 = vmatpush1.bf16.msra.mxu0 0
      %4038 = vmatprep.subr.bf16.mxu0 0
      %4039 = vmatpush1.bf16.msra.mxu0 0
      %4040 = vmatprep.subr.bf16.mxu0 0
      %4041 = vmatpush1.bf16.msra.mxu0 0
      %4042 = vmatprep.subr.bf16.mxu0 0
      %4043 = vmatpush1.bf16.msra.mxu0 0
      %4044 = vmatprep.subr.bf16.mxu0 0
      %4045 = vmatpush1.bf16.msra.mxu0 0
      %4046 = vmatprep.subr.bf16.mxu0 0
      %4047 = vmatpush1.bf16.msra.mxu0 0
      %4048 = vmatprep.subr.bf16.mxu0 0
      %4049 = vmatpush1.bf16.msra.mxu0 0
      %4050 = vmatprep.mubr.bf16.mxu0 0
      %4051 = vmatmul.mubr.bf16.gmra.mrb[0].mxu0 %v4013
      %v4052 = vpop.f32.mrb[0].mxu0
      %v4053 = vadd.f32 0.0, %v4052
      %v4054 = vpop.f32.mrb[0].mxu0
      %v4055 = vpop.f32.mrb[0].mxu0
      %v4056 = vadd.f32 0.0, %v4055
      %v4057 = vpop.f32.mrb[0].mxu0
      %4058 = vmatprep.mubr.bf16.mxu0 0
      %4059 = vmatmul.mubr.bf16.gmra.mrb[0].mxu0 %v4016
      %v4060 = vpop.f32.mrb[0].mxu0
      %v4061 = vadd.f32 0.0, %v4060
      %v4062 = vpop.f32.mrb[0].mxu0
      %v4063 = vpop.f32.mrb[0].mxu0
      %v4064 = vadd.f32 0.0, %v4063
      %v4065 = vpop.f32.mrb[0].mxu0
      %4066 = vdwg.mxu0
      %v4067 = vmul.f32 %v4053, 0.17677669
      %v4068 = vmul.f32 %v4056, 0.17677669
      %v4069 = vmul.f32 %v4061, 0.17677669
      %v4070 = vmul.f32 %v4064, 0.17677669
      %v4071 = vld [vmem:[%s2134] sm:$0xff]
      %v4072 = vld [vmem:[%s2134 + $0x8] sm:$0xff]
      %v4073 = vld [vmem:[%s2134 + $0x10] sm:$0xff]
      %v4074 = vld [vmem:[%s2134 + $0x18] sm:$0xff]
      %v4075 = vadd.f32 %v4067, %v4071
      %v4076 = vadd.f32 %v4068, %v4072
      %v4077 = vadd.f32 %v4069, %v4073
      %v4078 = vadd.f32 %v4070, %v4074
      %v4079 = vunpack.c.l.bf16 %v3997
      %v4080 = vmul.f32 %v4079, %v4079
      %v4081 = vmul.f32 %v4075, %v4075
      %v4082 = vmul.f32 %v4076, %v4076
      %v4083 = vmul.f32 %v4077, %v4077
      %v4084 = vmul.f32 %v4078, %v4078
      %v4086 = vsel %vm2341, %v4080, 0
      %4088 = vmatprep.subr.mxu0 0.0
      %4089 = vmatpush1.msra.mxu0 %v4081
      %4090 = vmatprep.subr.mxu0 0.0
      %4091 = vmatpush1.msra.mxu0 %v4082
      %4092 = vmatprep.subr.mxu0 0.0
      %4093 = vmatpush1.msra.mxu0 %v4083
      %4094 = vmatprep.subr.mxu0 0.0
      %4095 = vmatpush1.msra.mxu0 %v4084
      %4096 = vmatprep.subr.mxu0 0.0
      %4097 = vmatpush1.msra.mxu0 0.0
      %4098 = vmatprep.subr.mxu0 0.0
      %4099 = vmatpush1.msra.mxu0 0.0
      %4100 = vmatprep.subr.mxu0 0.0
      %4101 = vmatpush1.msra.mxu0 0.0
      %4102 = vmatprep.subr.mxu0 0.0
      %4103 = vmatpush1.msra.mxu0 0.0
      %4104 = vmatprep.subr.mxu0 0.0
      %4105 = vmatpush1.msra.mxu0 0.0
      %4106 = vmatprep.subr.mxu0 0.0
      %4107 = vmatpush1.msra.mxu0 0.0
      %4108 = vmatprep.subr.mxu0 0.0
      %4109 = vmatpush1.msra.mxu0 0.0
      %4110 = vmatprep.subr.mxu0 0.0
      %4111 = vmatpush1.msra.mxu0 0.0
      %4112 = vmatprep.subr.mxu0 0.0
      %4113 = vmatpush1.msra.mxu0 0.0
      %4114 = vmatprep.subr.mxu0 0.0
      %4115 = vmatpush1.msra.mxu0 0.0
      %4116 = vmatprep.subr.mxu0 0.0
      %4117 = vmatpush1.msra.mxu0 0.0
      %4118 = vmatprep.subr.mxu0 0.0
      %4119 = vmatpush1.msra.mxu0 0.0
      %4120 = vmatprep.subr.mxu0 0.0
      %4121 = vmatpush1.msra.mxu0 0.0
      %4122 = vmatprep.subr.mxu0 0.0
      %4123 = vmatpush1.msra.mxu0 0.0
      %4124 = vmatprep.subr.mxu0 0.0
      %4125 = vmatpush1.msra.mxu0 0.0
      %4126 = vmatprep.subr.mxu0 0.0
      %4127 = vmatpush1.msra.mxu0 0.0
      %4128 = vmatprep.subr.mxu0 0.0
      %4129 = vmatpush1.msra.mxu0 0.0
      %4130 = vmatprep.subr.mxu0 0.0
      %4131 = vmatpush1.msra.mxu0 0.0
      %4132 = vmatprep.subr.mxu0 0.0
      %4133 = vmatpush1.msra.mxu0 0.0
      %4134 = vmatprep.subr.mxu0 0.0
      %4135 = vmatpush1.msra.mxu0 0.0
      %4136 = vmatprep.subr.mxu0 0.0
      %4137 = vmatpush1.msra.mxu0 0.0
      %4138 = vmatprep.subr.mxu0 0.0
      %4139 = vmatpush1.msra.mxu0 0.0
      %4140 = vmatprep.subr.mxu0 0.0
      %4141 = vmatpush1.msra.mxu0 0.0
      %4142 = vmatprep.subr.mxu0 0.0
      %4143 = vmatpush1.msra.mxu0 0.0
      %4144 = vmatprep.subr.mxu0 0.0
      %4145 = vmatpush1.msra.mxu0 0.0
      %4146 = vmatprep.subr.mxu0 0.0
      %4147 = vmatpush1.msra.mxu0 0.0
      %4148 = vmatprep.subr.mxu0 0.0
      %4149 = vmatpush1.msra.mxu0 0.0
      %4150 = vmatprep.subr.mxu0 0.0
      %4151 = vmatpush1.msra.mxu0 0.0
      %4152 = vmatprep.mubr.f32.mxu0 0.0
      %4153 = vmatmul.mubr.f32.gmra.mrb[0].mxu0 %v4086
      %v4154 = vpop.f32.mrb[0].mxu0
      %v4155 = vadd.f32 0.0, %v4154
      %v4156 = vpop.f32.mrb[0].mxu0
      %4157 = vdwg.mxu0
      %v4158 = vmul.f32 %v4155, 0.03125
      %v4159 = vadd.f32 %v4158, 1e-08
      %v4160 = vrsqrt.pop %v4159
      %4162 = vset.pattern.permute.xlu0 0
      %4163 = vperm.xlu0 %4162, %v4075
      %v4164 = vpop.permute.xlu0 %4163
      %4167 = vset.pattern.permute.xlu0 0
      %4168 = vperm.xlu0 %4167, %v4076
      %v4169 = vpop.permute.xlu0 %4168
      %4172 = vset.pattern.permute.xlu0 0
      %4173 = vperm.xlu0 %4172, %v4077
      %v4174 = vpop.permute.xlu0 %4173
      %4177 = vset.pattern.permute.xlu0 0
      %4178 = vperm.xlu0 %4177, %v4078
      %v4179 = vpop.permute.xlu0 %4178
      %v4181 = vmul.f32 %v4164, %v3993
      %v4182 = vmul.f32 %v4169, %v3994
      %v4183 = vmul.f32 %v4174, %v3995
      %v4184 = vmul.f32 %v4179, %v3996
      %v4185 = vpack.c.bf16 %v4182, %v4181
      %v4186 = vpack.c.bf16 %v4184, %v4183
      %v4188 = vsel %vm2341, %v3997, 0
      %4190 = vmatprep.subr.bf16.mxu0 0
      %4191 = vmatpush1.bf16.msra.mxu0 %v4185
      %4192 = vmatprep.subr.bf16.mxu0 0
      %4193 = vmatpush1.bf16.msra.mxu0 %v4186
      %4194 = vmatprep.subr.bf16.mxu0 0
      %4195 = vmatpush1.bf16.msra.mxu0 0
      %4196 = vmatprep.subr.bf16.mxu0 0
      %4197 = vmatpush1.bf16.msra.mxu0 0
      %4198 = vmatprep.subr.bf16.mxu0 0
      %4199 = vmatpush1.bf16.msra.mxu0 0
      %4200 = vmatprep.subr.bf16.mxu0 0
      %4201 = vmatpush1.bf16.msra.mxu0 0
      %4202 = vmatprep.subr.bf16.mxu0 0
      %4203 = vmatpush1.bf16.msra.mxu0 0
      %4204 = vmatprep.subr.bf16.mxu0 0
      %4205 = vmatpush1.bf16.msra.mxu0 0
      %4206 = vmatprep.subr.bf16.mxu0 0
      %4207 = vmatpush1.bf16.msra.mxu0 0
      %4208 = vmatprep.subr.bf16.mxu0 0
      %4209 = vmatpush1.bf16.msra.mxu0 0
      %4210 = vmatprep.subr.bf16.mxu0 0
      %4211 = vmatpush1.bf16.msra.mxu0 0
      %4212 = vmatprep.subr.bf16.mxu0 0
      %4213 = vmatpush1.bf16.msra.mxu0 0
      %4214 = vmatprep.subr.bf16.mxu0 0
      %4215 = vmatpush1.bf16.msra.mxu0 0
      %4216 = vmatprep.subr.bf16.mxu0 0
      %4217 = vmatpush1.bf16.msra.mxu0 0
      %4218 = vmatprep.subr.bf16.mxu0 0
      %4219 = vmatpush1.bf16.msra.mxu0 0
      %4220 = vmatprep.subr.bf16.mxu0 0
      %4221 = vmatpush1.bf16.msra.mxu0 0
      %4222 = vmatprep.mubr.bf16.mxu0 0
      %4223 = vmatmul.mubr.bf16.gmra.mrb[0].mxu0 %v4188
      %v4224 = vpop.f32.mrb[0].mxu0
      %v4225 = vadd.f32 0.0, %v4224
      %v4226 = vpop.f32.mrb[0].mxu0
      %v4227 = vpop.f32.mrb[0].mxu0
      %v4228 = vpop.f32.mrb[0].mxu0
      %4229 = vdwg.mxu0
      %v4230 = vmul.f32 %v4160, 0.17677669
      %4232 = vset.pattern.permute.xlu0 0
      %4233 = vperm.xlu0 %4232, %v4230
      %v4234 = vpop.permute.xlu0 %4233
      %v4236 = vmul.f32 %v4225, %v4234
      %v4237 = vadd.f32 %v3678, %v4236
      %4238 = vst.msk [vmem:[#allocation2] sm:$0xff] %vm2341, %v4237
      %p4239 = scmp.eq.s32.totalorder %s106, 1
      // Predicated region
      $region197: #{hierarchical_forward.1} parent=191 // pred_check
        %p4240 = pneg %p4239
      $region198: #{hierarchical_forward.1} parent=191 // pred_check_branch
        %4242 = sbr.rel (%p4240) target = $region200
      $region199: #{hierarchical_forward.1} parent=191 // pred_region
        %4243 = vst.msk [vmem:[%s2142] sm:$0xff] %vm2341, %v4237
        %v4244 = vld [vmem:[#allocation3] sm:$0x1]
        %4245 = vst.msk [vmem:[%s2145] sm:$0x1] %vm3362, %v4244
      $region200: #{hierarchical_forward.1} parent=191 // pred_fallthru
        _
      %p4246 = scmp.lt.s32.totalorder %s105, 1
      %s4247 = scalar_select %p4246, %s105, 1
      %s4248 = smul.addr %s4247, 8
      %s4249 = scalar_lea.vmem %s87, %s4248
      %p4250 = scmp.lt.s32.totalorder %s105, 1
      %s4251 = scalar_select %p4250, %s105, 1
      %s4252 = scalar_lea.vmem %s89, %s4251
      // Predicated region
      $region201: #{hierarchical_forward.1} parent=191 // pred_check
        %p4253 = pneg %p1249
      $region202: #{hierarchical_forward.1} parent=191 // pred_check_branch
        %4255 = sbr.rel (%p4253) target = $region204
      $region203: #{hierarchical_forward.1} parent=191 // pred_region
        _
      $region204: #{hierarchical_forward.1} parent=191 // pred_fallthru
        _
      // Predicated region
      $region205: #{hierarchical_forward.1} parent=191 // pred_check
        %p4256 = pneg %p1275
      $region206: #{hierarchical_forward.1} parent=191 // pred_check_branch
        %4258 = sbr.rel (%p4256) target = $region208
      $region207: #{hierarchical_forward.1} parent=191 // pred_region
        _
      $region208: #{hierarchical_forward.1} parent=191 // pred_fallthru
        _
    $region192: #{hierarchical_forward.1} parent=5 // pred_fallthru
      _
    %p4259 = scmp.le.s32.totalorder 2, %s96
    // Predicated region
    $region209: #{hierarchical_forward.1} parent=5 // pred_check
      %p4260 = pneg %p4259
    $region210: #{hierarchical_forward.1} parent=5 // pred_check_branch
      %4262 = sbr.rel (%p4260) target = $region212
    $region211: #{hierarchical_forward.1} parent=5 // pred_region
      %s4263 = ssub.s32 %s96, 2
      // Predicated region
      $region213: #{hierarchical_forward.1} parent=211 // pred_check
        %p4264 = pneg %p1255
      $region214: #{hierarchical_forward.1} parent=211 // pred_check_branch
        %4266 = sbr.rel (%p4264) target = $region216
      $region215: #{hierarchical_forward.1} parent=211 // pred_region
        %p4267 = scmp.lt.s32.totalorder %s107, 1
        %s4268 = scalar_select %p4267, %s107, 1
        %s4269 = smul.addr %s4268, 8
        %s4270 = scalar_lea.vmem %s87, %s4269
      $region216: #{hierarchical_forward.1} parent=211 // pred_fallthru
        _
      // Predicated region
      $region217: #{hierarchical_forward.1} parent=211 // pred_check
        %p4271 = pneg %p1281
      $region218: #{hierarchical_forward.1} parent=211 // pred_check_branch
        %4273 = sbr.rel (%p4271) target = $region220
      $region219: #{hierarchical_forward.1} parent=211 // pred_region
        %p4274 = scmp.lt.s32.totalorder %s107, 1
        %s4275 = scalar_select %p4274, %s107, 1
        %s4276 = scalar_lea.vmem %s89, %s4275
      $region220: #{hierarchical_forward.1} parent=211 // pred_fallthru
        _
    $region212: #{hierarchical_forward.1} parent=5 // pred_fallthru
      _
  $region6: #{hierarchical_forward.1} parent=0 // loop_footer
    %s100 = sadd.s32 1, %s96
  $region7: #{hierarchical_forward.1} parent=0 // loop_footer_branch
    %95 = sbr.rel target = $region3
  $region8: #{hierarchical_forward.1} parent=0 // loop_exit
    _

</llo_original>
